<compile_context>
chip_gen: v5e
topology: v5e:2x2
jax: 0.10.0
libtpu: 0.0.40
codegen_flags: <defaults>
</compile_context>

<pallas_src>
import functools

import jax
import jax.numpy as jnp
from jax.experimental import pallas as pl
from jax.experimental.pallas import tpu as pltpu


def _gating_kernel(x_ref, w1_ref, b1_ref, w2_ref, b2_ref, wg_ref, bg_ref,
                   noise_ref, xg_ref, raw_ref, *,
                   a, sigma, f_groups, embed):
    # x_ref: (TN, F*E) lane-dense tile of samples (f32 compute internally).
    x = x_ref[...].astype(jnp.float32)

    # Group sum replicated across the F lane-groups via XLU lane rolls.
    # Power-of-two F uses a log2(F)-depth tree; otherwise fall back to a chain.
    x_sum = x
    if f_groups & (f_groups - 1) == 0:
        shift = embed
        for _ in range(f_groups.bit_length() - 1):
            x_sum = x_sum + pltpu.roll(x_sum, shift=shift, axis=1)
            shift *= 2
    else:
        for f in range(1, f_groups):
            x_sum = x_sum + pltpu.roll(x, shift=f * embed, axis=1)

    # Gating MLP.  w1_ref is zero-padded to (F*E, H1) AND pre-scaled by 1/F in
    # the wrapper, so x_sum @ w1_ref == mean(x over groups) @ w1.
    h1 = jnp.dot(x_sum, w1_ref[...], preferred_element_type=jnp.float32)
    h1 = jnp.maximum(h1 + b1_ref[...], 0.0)
    h2 = jnp.dot(h1, w2_ref[...], preferred_element_type=jnp.float32)
    h2 = jnp.maximum(h2 + b2_ref[...], 0.0)

    # gate_fc + stochastic noise (train_gates=True path).
    raw = jnp.dot(h2, wg_ref[...], preferred_element_type=jnp.float32) + bg_ref[...]
    raw = raw + sigma * noise_ref[...]
    raw_ref[...] = raw.astype(raw_ref.dtype)

    # hard sigmoid, folded 1/F so x_gated = (gate/F) * x_sum == gate * mean,
    # already expanded over the F lane-groups (x_sum carries the replication).
    gate = jnp.clip(a * raw + 0.5, 0.0, 1.0)
    xg_ref[...] = ((gate * (1.0 / f_groups)) * x_sum).astype(xg_ref.dtype)


def _round_up(v, m):
    return ((v + m - 1) // m) * m


def _pick_tn(n_rows, cap=2048):
    """Shape-adaptive sample tile.

    Large enough to amortize the ~0.35 us per-grid-step overhead, capped so the
    double-buffered working set stays well inside the scoped VMEM limit on all
    generations, and chosen so large N keeps >= 2 grid steps (both v7x TCs).
    """
    target = min(cap, _round_up(pl.cdiv(n_rows, 2), 512))
    target = min(target, _round_up(n_rows, 8))   # no point exceeding N
    return max(8, target)


def learned_sample_gating(x, params, noise, *, a=1.0, sigma=0.5, tn=None):
    """x: (B, S, F, E).  Returns (x_gated, gate, raw_gate) matching PyTorch."""
    B, S, F, E = x.shape
    N = B * S
    FE = F * E
    w1, b1, w2, b2, wg, bg = params
    H1 = w1.shape[1]
    H2 = w2.shape[1]

    if tn is None:
        tn = _pick_tn(N)
    num_blocks = pl.cdiv(N, tn)   # partial last block handled by Pallas

    # Lane-dense, sample-major layout.  No padding / slicing round-trips:
    # the last (partial) block's OOB reads only feed rows whose stores Pallas
    # masks out, and there is no cross-row reduction in the kernel.
    x2d = x.reshape(N, FE)
    noise2 = noise.reshape(N, 1).astype(jnp.float32)

    # Zero-pad w1 to (F*E, H1) so it consumes the lane-replicated group sum
    # directly, and fold the 1/F mean scale into it (one-time, tiny).
    w1p = jnp.concatenate(
        [w1.astype(jnp.float32) * (1.0 / F),
         jnp.zeros((FE - E, H1), jnp.float32)], axis=0)

    kernel = functools.partial(_gating_kernel, a=a, sigma=sigma,
                               f_groups=F, embed=E)

    xg, raw = pl.pallas_call(
        kernel,
        out_shape=(
            jax.ShapeDtypeStruct((N, FE), x.dtype),
            jax.ShapeDtypeStruct((N, 1), jnp.float32),
        ),
        grid_spec=pltpu.PrefetchScalarGridSpec(
            num_scalar_prefetch=0,
            grid=(num_blocks,),
            in_specs=[
                pl.BlockSpec((tn, FE), lambda i: (i, 0)),   # x (lane-dense)
                pl.BlockSpec((FE, H1), lambda i: (0, 0)),   # w1 (padded, /F)
                pl.BlockSpec((1, H1), lambda i: (0, 0)),    # b1
                pl.BlockSpec((H1, H2), lambda i: (0, 0)),   # w2
                pl.BlockSpec((1, H2), lambda i: (0, 0)),    # b2
                pl.BlockSpec((H2, 1), lambda i: (0, 0)),    # wg
                pl.BlockSpec((1, 1), lambda i: (0, 0)),     # bg
                pl.BlockSpec((tn, 1), lambda i: (i, 0)),    # noise
            ],
            out_specs=[
                pl.BlockSpec((tn, FE), lambda i: (i, 0)),   # x_gated
                pl.BlockSpec((tn, 1), lambda i: (i, 0)),    # raw_gate
            ],
        ),
        compiler_params=pltpu.CompilerParams(
            dimension_semantics=("parallel",),   # shard sample axis over v7x TCs
            vmem_limit_bytes=48 * 1024 * 1024,   # fits v5e/v6e/v7x budgets at tn<=4096
        ),
    )(x2d, w1p, b1, w2, b2, wg, bg, noise2)

    # gate recomputed from the f32 raw output (same a, same f32 values ->
    # bit-identical to the in-kernel gate used for x_gated); saves one
    # lane-padded (tn,1) output stream in the kernel.
    gate = jnp.clip(a * raw + 0.5, 0.0, 1.0)

    return (xg.reshape(B, S, F, E),
            gate.reshape(B, S, 1),
            raw.reshape(B, S, 1))


def _reference(x, params, noise, a=1.0, sigma=0.5):
    """Pure-JAX reference mirroring the PyTorch forward (train_gates=True)."""
    w1, b1, w2, b2, wg, bg = params
    B, S, F, E = x.shape
    x_flat = jnp.mean(x, axis=2)                       # (B, S, E)
    h = jnp.maximum(x_flat @ w1 + b1[0], 0.0)
    h = jnp.maximum(h @ w2 + b2[0], 0.0)
    raw = h @ wg + bg[0]                               # (B, S, 1)
    raw = raw + sigma * noise
    gate = jnp.clip(a * raw + 0.5, 0.0, 1.0)
    x_gated = gate * x_flat                            # (B, S, E)
    x_gated = jnp.broadcast_to(x_gated[:, :, None, :], (B, S, F, E))
    return x_gated, gate, raw


if __name__ == "__main__":
    # Small shapes consistent with the module's forward:
    # x: (batch, seq, feat_per_group, embed) with input_dim == embed.
    # N = 1000 is deliberately not a multiple of the chosen tile to exercise
    # the partial-last-block (pl.cdiv grid, masked tail stores) path.
    batch, seq, feat_p_g, embed = 2, 500, 4, 32
    hidden_dims = [64, 32]
    a_param, sigma = 1.0, 0.5

    key = jax.random.PRNGKey(0)
    kx, kn, k1, k2, k3, k4, k5, k6 = jax.random.split(key, 8)

    x = jax.random.normal(kx, (batch, seq, feat_p_g, embed), dtype=jnp.float32)

    # Deterministic parameter init (shapes from __init__). Stored as (in, out),
    # i.e. transposed relative to torch.nn.Linear's (out, in) weight.
    H1, H2 = hidden_dims
    w1 = jax.random.normal(k1, (embed, H1), dtype=jnp.float32) * 0.1
    b1 = jax.random.normal(k2, (1, H1), dtype=jnp.float32) * 0.1
    w2 = jax.random.normal(k3, (H1, H2), dtype=jnp.float32) * 0.1
    b2 = jax.random.normal(k4, (1, H2), dtype=jnp.float32) * 0.1
    wg = jax.random.normal(k5, (H2, 1), dtype=jnp.float32) * 0.1
    bg = jax.random.normal(k6, (1, 1), dtype=jnp.float32) * 0.1
    params = (w1, b1, w2, b2, wg, bg)

    # train_gates=True path: Gaussian noise generated deterministically here
    # (equivalent of torch.randn_like(raw_gate)).
    noise = jax.random.normal(kn, (batch, seq, 1), dtype=jnp.float32)

    x_gated, gate, raw_gate = learned_sample_gating(
        x, params, noise, a=a_param, sigma=sigma)
    jax.block_until_ready((x_gated, gate, raw_gate))

    # Sanity check against a pure-JAX reference.
    ref_xg, ref_gate, ref_raw = _reference(x, params, noise, a=a_param, sigma=sigma)
    assert x_gated.shape == (batch, seq, feat_p_g, embed)
    assert gate.shape == (batch, seq, 1)
    assert raw_gate.shape == (batch, seq, 1)
    assert jnp.allclose(x_gated, ref_xg, atol=1e-5)
    assert jnp.allclose(gate, ref_gate, atol=1e-5)
    assert jnp.allclose(raw_gate, ref_raw, atol=1e-5)

    print("KERNEL_OK")
</pallas_src>

<mosaic_0001>
module attributes {stable_mosaic.version = 11 : i64} {
  func.func @_gating_kernel(%arg0: i32, %arg1: memref<512x128xf32, #tpu.memory_space<vmem>>, %arg2: memref<128x64xf32, #tpu.memory_space<vmem>>, %arg3: memref<1x64xf32, #tpu.memory_space<vmem>>, %arg4: memref<64x32xf32, #tpu.memory_space<vmem>>, %arg5: memref<1x32xf32, #tpu.memory_space<vmem>>, %arg6: memref<32x1xf32, #tpu.memory_space<vmem>>, %arg7: memref<1x1xf32, #tpu.memory_space<vmem>>, %arg8: memref<512x1xf32, #tpu.memory_space<vmem>>, %arg9: memref<512x128xf32, #tpu.memory_space<vmem>>, %arg10: memref<512x1xf32, #tpu.memory_space<vmem>>) attributes {dimension_semantics = [#tpu.dimension_semantics<parallel>], iteration_bounds = array<i64: 2>, scalar_prefetch = 0 : i64, scratch_operands = 0 : i64, tpu.core_type = #tpu.core_type<tc>, window_params = [{transform_indices = @transform_0, window_bounds = array<i64: 512, 128>}, {pipeline_mode = #tpu.pipeline_mode<synchronous>, transform_indices = @transform_1, window_bounds = array<i64: 128, 64>}, {pipeline_mode = #tpu.pipeline_mode<synchronous>, transform_indices = @transform_2, window_bounds = array<i64: 1, 64>}, {pipeline_mode = #tpu.pipeline_mode<synchronous>, transform_indices = @transform_3, window_bounds = array<i64: 64, 32>}, {pipeline_mode = #tpu.pipeline_mode<synchronous>, transform_indices = @transform_4, window_bounds = array<i64: 1, 32>}, {pipeline_mode = #tpu.pipeline_mode<synchronous>, transform_indices = @transform_5, window_bounds = array<i64: 32, 1>}, {pipeline_mode = #tpu.pipeline_mode<synchronous>, transform_indices = @transform_6, window_bounds = array<i64: 1, 1>}, {transform_indices = @transform_7, window_bounds = array<i64: 512, 1>}, {transform_indices = @transform_8, window_bounds = array<i64: 512, 128>}, {transform_indices = @transform_9, window_bounds = array<i64: 512, 1>}]} {
    %c0 = arith.constant 0 : index
    %c0_0 = arith.constant 0 : index
    %0 = vector.load %arg1[%c0, %c0_0] : memref<512x128xf32, #tpu.memory_space<vmem>>, vector<512x128xf32>
    %c32_i32 = arith.constant 32 : i32
    %1 = tpu.dynamic_rotate %0 by %c32_i32 dim 1 : vector<512x128xf32>, i32 -> vector<512x128xf32>
    %2 = arith.addf %0, %1 : vector<512x128xf32>
    %c64_i32 = arith.constant 64 : i32
    %3 = tpu.dynamic_rotate %2 by %c64_i32 dim 1 : vector<512x128xf32>, i32 -> vector<512x128xf32>
    %4 = arith.addf %2, %3 : vector<512x128xf32>
    %c0_1 = arith.constant 0 : index
    %c0_2 = arith.constant 0 : index
    %5 = vector.load %arg2[%c0_1, %c0_2] : memref<128x64xf32, #tpu.memory_space<vmem>>, vector<128x64xf32>
    %cst = arith.constant dense<0.000000e+00> : vector<512x64xf32>
    %6 = tpu.matmul %4, %5, %cst {dimension_numbers = #tpu.dot_dimension_numbers<[1], [0], [0], [1], [0, 0, 1, 1], [], []>} : vector<512x128xf32>, vector<128x64xf32>, vector<512x64xf32> -> vector<512x64xf32>
    %c0_3 = arith.constant 0 : index
    %c0_4 = arith.constant 0 : index
    %7 = vector.load %arg3[%c0_3, %c0_4] : memref<1x64xf32, #tpu.memory_space<vmem>>, vector<1x64xf32>
    %8 = vector.broadcast %7 : vector<1x64xf32> to vector<512x64xf32>
    %9 = arith.addf %6, %8 : vector<512x64xf32>
    %cst_5 = arith.constant 0.000000e+00 : f32
    %10 = vector.broadcast %cst_5 : f32 to vector<512x64xf32>
    %11 = arith.maximumf %9, %10 : vector<512x64xf32>
    %c0_6 = arith.constant 0 : index
    %c0_7 = arith.constant 0 : index
    %12 = vector.load %arg4[%c0_6, %c0_7] : memref<64x32xf32, #tpu.memory_space<vmem>>, vector<64x32xf32>
    %cst_8 = arith.constant dense<0.000000e+00> : vector<512x32xf32>
    %13 = tpu.matmul %11, %12, %cst_8 {dimension_numbers = #tpu.dot_dimension_numbers<[1], [0], [0], [1], [0, 0, 1, 1], [], []>} : vector<512x64xf32>, vector<64x32xf32>, vector<512x32xf32> -> vector<512x32xf32>
    %c0_9 = arith.constant 0 : index
    %c0_10 = arith.constant 0 : index
    %14 = vector.load %arg5[%c0_9, %c0_10] : memref<1x32xf32, #tpu.memory_space<vmem>>, vector<1x32xf32>
    %15 = vector.broadcast %14 : vector<1x32xf32> to vector<512x32xf32>
    %16 = arith.addf %13, %15 : vector<512x32xf32>
    %cst_11 = arith.constant 0.000000e+00 : f32
    %17 = vector.broadcast %cst_11 : f32 to vector<512x32xf32>
    %18 = arith.maximumf %16, %17 : vector<512x32xf32>
    %c0_12 = arith.constant 0 : index
    %c0_13 = arith.constant 0 : index
    %19 = vector.load %arg6[%c0_12, %c0_13] : memref<32x1xf32, #tpu.memory_space<vmem>>, vector<32x1xf32>
    %cst_14 = arith.constant dense<0.000000e+00> : vector<512x1xf32>
    %20 = tpu.matmul %18, %19, %cst_14 {dimension_numbers = #tpu.dot_dimension_numbers<[1], [0], [0], [1], [0, 0, 1, 1], [], []>} : vector<512x32xf32>, vector<32x1xf32>, vector<512x1xf32> -> vector<512x1xf32>
    %c0_15 = arith.constant 0 : index
    %c0_16 = arith.constant 0 : index
    %21 = vector.load %arg7[%c0_15, %c0_16] : memref<1x1xf32, #tpu.memory_space<vmem>>, vector<1x1xf32>
    %22 = vector.broadcast %21 : vector<1x1xf32> to vector<512x1xf32>
    %23 = arith.addf %20, %22 : vector<512x1xf32>
    %c0_17 = arith.constant 0 : index
    %c0_18 = arith.constant 0 : index
    %24 = vector.load %arg8[%c0_17, %c0_18] : memref<512x1xf32, #tpu.memory_space<vmem>>, vector<512x1xf32>
    %cst_19 = arith.constant 5.000000e-01 : f32
    %25 = vector.broadcast %cst_19 : f32 to vector<512x1xf32>
    %26 = arith.mulf %25, %24 : vector<512x1xf32>
    %27 = arith.addf %23, %26 : vector<512x1xf32>
    %c0_20 = arith.constant 0 : index
    %c0_21 = arith.constant 0 : index
    %28 = vector.load %arg10[%c0_20, %c0_21] : memref<512x1xf32, #tpu.memory_space<vmem>>, vector<512x1xf32>
    tpu.vector_store %arg10[%c0_20, %c0_21], %27 {strides = array<i32>} : memref<512x1xf32, #tpu.memory_space<vmem>>, vector<512x1xf32>,
    %cst_22 = arith.constant 1.000000e+00 : f32
    %29 = vector.broadcast %cst_22 : f32 to vector<512x1xf32>
    %30 = arith.mulf %29, %27 : vector<512x1xf32>
    %cst_23 = arith.constant 5.000000e-01 : f32
    %31 = vector.broadcast %cst_23 : f32 to vector<512x1xf32>
    %32 = arith.addf %30, %31 : vector<512x1xf32>
    %cst_24 = arith.constant 0.000000e+00 : f32
    %cst_25 = arith.constant 1.000000e+00 : f32
    %33 = vector.broadcast %cst_24 : f32 to vector<512x1xf32>
    %34 = arith.maximumf %33, %32 : vector<512x1xf32>
    %35 = vector.broadcast %cst_25 : f32 to vector<512x1xf32>
    %36 = arith.minimumf %35, %34 : vector<512x1xf32>
    %cst_26 = arith.constant 2.500000e-01 : f32
    %37 = vector.broadcast %cst_26 : f32 to vector<512x1xf32>
    %38 = arith.mulf %36, %37 : vector<512x1xf32>
    %39 = vector.broadcast %38 : vector<512x1xf32> to vector<512x128xf32>
    %40 = arith.mulf %39, %4 : vector<512x128xf32>
    %c0_27 = arith.constant 0 : index
    %c0_28 = arith.constant 0 : index
    %41 = vector.load %arg9[%c0_27, %c0_28] : memref<512x128xf32, #tpu.memory_space<vmem>>, vector<512x128xf32>
    tpu.vector_store %arg9[%c0_27, %c0_28], %40 {strides = array<i32>} : memref<512x128xf32, #tpu.memory_space<vmem>>, vector<512x128xf32>,
    return
  }
  func.func @transform_0(%arg0: i32) -> (i32, i32) {
    %c0_i32 = arith.constant 0 : i32
    %c0_i32_0 = arith.constant 0 : i32
    return %arg0, %c0_i32 : i32, i32
  }
  func.func @transform_1(%arg0: i32) -> (i32, i32) {
    %c0_i32 = arith.constant 0 : i32
    %c0_i32_0 = arith.constant 0 : i32
    %c0_i32_1 = arith.constant 0 : i32
    return %c0_i32, %c0_i32_0 : i32, i32
  }
  func.func @transform_2(%arg0: i32) -> (i32, i32) {
    %c0_i32 = arith.constant 0 : i32
    %c0_i32_0 = arith.constant 0 : i32
    %c0_i32_1 = arith.constant 0 : i32
    return %c0_i32, %c0_i32_0 : i32, i32
  }
  func.func @transform_3(%arg0: i32) -> (i32, i32) {
    %c0_i32 = arith.constant 0 : i32
    %c0_i32_0 = arith.constant 0 : i32
    %c0_i32_1 = arith.constant 0 : i32
    return %c0_i32, %c0_i32_0 : i32, i32
  }
  func.func @transform_4(%arg0: i32) -> (i32, i32) {
    %c0_i32 = arith.constant 0 : i32
    %c0_i32_0 = arith.constant 0 : i32
    %c0_i32_1 = arith.constant 0 : i32
    return %c0_i32, %c0_i32_0 : i32, i32
  }
  func.func @transform_5(%arg0: i32) -> (i32, i32) {
    %c0_i32 = arith.constant 0 : i32
    %c0_i32_0 = arith.constant 0 : i32
    %c0_i32_1 = arith.constant 0 : i32
    return %c0_i32, %c0_i32_0 : i32, i32
  }
  func.func @transform_6(%arg0: i32) -> (i32, i32) {
    %c0_i32 = arith.constant 0 : i32
    %c0_i32_0 = arith.constant 0 : i32
    %c0_i32_1 = arith.constant 0 : i32
    return %c0_i32, %c0_i32_0 : i32, i32
  }
  func.func @transform_7(%arg0: i32) -> (i32, i32) {
    %c0_i32 = arith.constant 0 : i32
    %c0_i32_0 = arith.constant 0 : i32
    return %arg0, %c0_i32 : i32, i32
  }
  func.func @transform_8(%arg0: i32) -> (i32, i32) {
    %c0_i32 = arith.constant 0 : i32
    %c0_i32_0 = arith.constant 0 : i32
    return %arg0, %c0_i32 : i32, i32
  }
  func.func @transform_9(%arg0: i32) -> (i32, i32) {
    %c0_i32 = arith.constant 0 : i32
    %c0_i32_0 = arith.constant 0 : i32
    return %arg0, %c0_i32 : i32, i32
  }
}

</mosaic_0001>

<llo_original>
// kernel: tpu_custom_call.1
$region0: #{tpu_custom_call.1}
  #allocation0 [shape = 'u32[]', space=smem, size = 0x4, offset = 0x4, fixed_abs, tag = 'smem constant byte address 0x4 - core index']
  #allocation1 [shape = 'u32[72,128]{1,0:T(1,128)}', space=vmem, size = 0x9000, scoped, tag = 'internal scratch']
  #allocation2 [shape = 'f32[1,1]{1,0:T(1,128)S(1)}', space=vmem, size = 0x200, scoped, tag = 'scoped memory for tpu_custom_call.1']
  %s0 = inlined_call_operand.vmem [shape: f32[1000,128], index: 0, kind: input, shape index: {}]
  %s1 = inlined_call_operand.vmem [shape: f32[128,64], index: 1, kind: input, shape index: {}]
  %s2 = inlined_call_operand.vmem [shape: f32[1,64], index: 2, kind: input, shape index: {}]
  %s3 = inlined_call_operand.vmem [shape: f32[64,32], index: 3, kind: input, shape index: {}]
  %s4 = inlined_call_operand.vmem [shape: f32[1,32], index: 4, kind: input, shape index: {}]
  %s5 = inlined_call_operand.vmem [shape: f32[32,1], index: 5, kind: input, shape index: {}]
  %s6 = inlined_call_operand.<no memory space> [shape: f32[1,1], index: 6, kind: input, shape index: {}]
  %s7 = inlined_call_operand.vmem [shape: f32[1000,1], index: 7, kind: input, shape index: {}]
  %s8 = inlined_call_operand.hbm [shape: f32[1000,128], index: 8, kind: output, shape index: {0}]
  %s9 = inlined_call_operand.vmem [shape: f32[1000,1], index: 9, kind: output, shape index: {1}]
  %10 = xla_tuple %s8, %s9
  %s11 = sld [smem:[#allocation0]]
  $region121: #{tpu_custom_call.1} parent=0
    _
  %s13 = ssub.s32 1, %s11
  %s14 = scalar_select 0, %s13, %s11
  %v15 = vstv %s6
  %16 = vst [vmem:[#allocation2] sm:$0x1] %v15
  $region1: #{tpu_custom_call.1} parent=0
    #allocation3 [shape = 'u8[524288]{0}', space=vmem, size = 0x80000, scoped, tag = 'output window, operand 0']
    #allocation4 [shape = 's32[2]{0}', space=sflag, size = 0x8, scoped, tag = 'scoped memory for tpu_custom_call.1']
    #allocation5 [shape = 'u8[524288]{0}', space=vmem, size = 0x80000, scoped, tag = 'output window, operand 1']
    %17 = vsyncpa [#allocation4], 0
    %s18 = scalar_lea.sflag [#allocation4], 1
    %19 = vsyncpa %s18, 0
    loop: start=0, step=1, limit=4
    $region2: #{tpu_custom_call.1} parent=1 // loop_pre_header
      _
    $region3: #{tpu_custom_call.1} parent=1 // loop_header
      %s21 = sphi 0, %s25
      %p22 = scmp.ge.s32.totalorder %s21, 4
      %s31 = sphi 0, %s33
      %s34 = sphi 0, %s31
      %s35 = sphi 0, %s34
      %s51 = sphi 0, %s35
      %s55 = sphi 0, %s55
      %s57 = sphi 0, %s55
      %s58 = sphi 0, %s57
      %s72 = sphi 0, %s58
      %s76 = sphi 0, %s76
      %s78 = sphi 0, %s76
      %s79 = sphi 0, %s78
      %s93 = sphi 0, %s79
      %s97 = sphi 0, %s97
      %s99 = sphi 0, %s97
      %s100 = sphi 0, %s99
      %s114 = sphi 0, %s100
      %s118 = sphi 0, %s118
      %s120 = sphi 0, %s118
      %s121 = sphi 0, %s120
      %s135 = sphi 0, %s121
      %s139 = sphi 0, %s139
      %s141 = sphi 0, %s139
      %s142 = sphi 0, %s141
      %s156 = sphi 0, %s142
      %s160 = sphi 0, %s160
      %s162 = sphi 0, %s160
      %s163 = sphi 0, %s162
      %s177 = sphi 0, %s163
      %s183 = sphi 0, %s185
      %s186 = sphi 0, %s183
      %s187 = sphi 0, %s186
      %s203 = sphi 0, %s187
      %s209 = sphi 0, %s211
      %s212 = sphi 0, %s209
      %s213 = sphi 0, %s212
      %s229 = sphi 0, %s213
      %s235 = sphi 0, %s237
      %s238 = sphi 0, %s235
      %s239 = sphi 0, %s238
      %s255 = sphi 0, %s239
    $region4: #{tpu_custom_call.1} parent=1 // loop_header_branch
      %24 = sbr.rel (%p22) target = $region8
    $region5: #{tpu_custom_call.1} parent=1 // loop_body
      %s26 = ssub.s32 %s21, 1
      %s27 = ssub.s32 %s21, 2
      %s28 = sadd.s32 %s21, 1
      %s29 = ssub.s32 %s21, %s28
      %p30 = scmp.eq.s32.totalorder %s29, 0
      %s32 = sadd.s32 %s31, 1
      %s33 = scalar_select %p30, %s31, %s32
      %p36 = pneg %p30
      %p37 = scmp.eq.s32.totalorder %s21, 1
      %p38 = por %p36, %p37
      %p39 = scmp.ne.s32.totalorder %s31, %s34
      %p40 = scmp.eq.s32.totalorder %s21, 0
      %p41 = por %p39, %p40
      %p42 = scmp.ne.s32.totalorder %s31, %s34
      %p43 = scmp.eq.s32.totalorder %s26, 1
      %p44 = por %p42, %p43
      %p45 = scmp.ne.s32.totalorder %s34, %s35
      %p46 = scmp.eq.s32.totalorder %s26, 0
      %p47 = por %p45, %p46
      %p48 = scmp.ne.s32.totalorder %s34, %s35
      %p49 = scmp.eq.s32.totalorder %s27, 1
      %p50 = por %p48, %p49
      %p52 = scmp.ne.s32.totalorder %s35, %s51
      %p53 = scmp.eq.s32.totalorder %s27, 0
      %p54 = por %p52, %p53
      %s56 = sadd.s32 %s55, 1
      %p59 = scmp.eq.s32.totalorder %s21, 1
      %p60 = scmp.ne.s32.totalorder %s55, %s57
      %p61 = scmp.eq.s32.totalorder %s21, 0
      %p62 = por %p60, %p61
      %p63 = scmp.ne.s32.totalorder %s55, %s57
      %p64 = scmp.eq.s32.totalorder %s26, 1
      %p65 = por %p63, %p64
      %p66 = scmp.ne.s32.totalorder %s57, %s58
      %p67 = scmp.eq.s32.totalorder %s26, 0
      %p68 = por %p66, %p67
      %p69 = scmp.ne.s32.totalorder %s57, %s58
      %p70 = scmp.eq.s32.totalorder %s27, 1
      %p71 = por %p69, %p70
      %p73 = scmp.ne.s32.totalorder %s58, %s72
      %p74 = scmp.eq.s32.totalorder %s27, 0
      %p75 = por %p73, %p74
      %s77 = sadd.s32 %s76, 1
      %p80 = scmp.eq.s32.totalorder %s21, 1
      %p81 = scmp.ne.s32.totalorder %s76, %s78
      %p82 = scmp.eq.s32.totalorder %s21, 0
      %p83 = por %p81, %p82
      %p84 = scmp.ne.s32.totalorder %s76, %s78
      %p85 = scmp.eq.s32.totalorder %s26, 1
      %p86 = por %p84, %p85
      %p87 = scmp.ne.s32.totalorder %s78, %s79
      %p88 = scmp.eq.s32.totalorder %s26, 0
      %p89 = por %p87, %p88
      %p90 = scmp.ne.s32.totalorder %s78, %s79
      %p91 = scmp.eq.s32.totalorder %s27, 1
      %p92 = por %p90, %p91
      %p94 = scmp.ne.s32.totalorder %s79, %s93
      %p95 = scmp.eq.s32.totalorder %s27, 0
      %p96 = por %p94, %p95
      %s98 = sadd.s32 %s97, 1
      %p101 = scmp.eq.s32.totalorder %s21, 1
      %p102 = scmp.ne.s32.totalorder %s97, %s99
      %p103 = scmp.eq.s32.totalorder %s21, 0
      %p104 = por %p102, %p103
      %p105 = scmp.ne.s32.totalorder %s97, %s99
      %p106 = scmp.eq.s32.totalorder %s26, 1
      %p107 = por %p105, %p106
      %p108 = scmp.ne.s32.totalorder %s99, %s100
      %p109 = scmp.eq.s32.totalorder %s26, 0
      %p110 = por %p108, %p109
      %p111 = scmp.ne.s32.totalorder %s99, %s100
      %p112 = scmp.eq.s32.totalorder %s27, 1
      %p113 = por %p111, %p112
      %p115 = scmp.ne.s32.totalorder %s100, %s114
      %p116 = scmp.eq.s32.totalorder %s27, 0
      %p117 = por %p115, %p116
      %s119 = sadd.s32 %s118, 1
      %p122 = scmp.eq.s32.totalorder %s21, 1
      %p123 = scmp.ne.s32.totalorder %s118, %s120
      %p124 = scmp.eq.s32.totalorder %s21, 0
      %p125 = por %p123, %p124
      %p126 = scmp.ne.s32.totalorder %s118, %s120
      %p127 = scmp.eq.s32.totalorder %s26, 1
      %p128 = por %p126, %p127
      %p129 = scmp.ne.s32.totalorder %s120, %s121
      %p130 = scmp.eq.s32.totalorder %s26, 0
      %p131 = por %p129, %p130
      %p132 = scmp.ne.s32.totalorder %s120, %s121
      %p133 = scmp.eq.s32.totalorder %s27, 1
      %p134 = por %p132, %p133
      %p136 = scmp.ne.s32.totalorder %s121, %s135
      %p137 = scmp.eq.s32.totalorder %s27, 0
      %p138 = por %p136, %p137
      %s140 = sadd.s32 %s139, 1
      %p143 = scmp.eq.s32.totalorder %s21, 1
      %p144 = scmp.ne.s32.totalorder %s139, %s141
      %p145 = scmp.eq.s32.totalorder %s21, 0
      %p146 = por %p144, %p145
      %p147 = scmp.ne.s32.totalorder %s139, %s141
      %p148 = scmp.eq.s32.totalorder %s26, 1
      %p149 = por %p147, %p148
      %p150 = scmp.ne.s32.totalorder %s141, %s142
      %p151 = scmp.eq.s32.totalorder %s26, 0
      %p152 = por %p150, %p151
      %p153 = scmp.ne.s32.totalorder %s141, %s142
      %p154 = scmp.eq.s32.totalorder %s27, 1
      %p155 = por %p153, %p154
      %p157 = scmp.ne.s32.totalorder %s142, %s156
      %p158 = scmp.eq.s32.totalorder %s27, 0
      %p159 = por %p157, %p158
      %s161 = sadd.s32 %s160, 1
      %p164 = scmp.eq.s32.totalorder %s21, 1
      %p165 = scmp.ne.s32.totalorder %s160, %s162
      %p166 = scmp.eq.s32.totalorder %s21, 0
      %p167 = por %p165, %p166
      %p168 = scmp.ne.s32.totalorder %s160, %s162
      %p169 = scmp.eq.s32.totalorder %s26, 1
      %p170 = por %p168, %p169
      %p171 = scmp.ne.s32.totalorder %s162, %s163
      %p172 = scmp.eq.s32.totalorder %s26, 0
      %p173 = por %p171, %p172
      %p174 = scmp.ne.s32.totalorder %s162, %s163
      %p175 = scmp.eq.s32.totalorder %s27, 1
      %p176 = por %p174, %p175
      %p178 = scmp.ne.s32.totalorder %s163, %s177
      %p179 = scmp.eq.s32.totalorder %s27, 0
      %p180 = por %p178, %p179
      %s181 = ssub.s32 %s21, %s28
      %p182 = scmp.eq.s32.totalorder %s181, 0
      %s184 = sadd.s32 %s183, 1
      %s185 = scalar_select %p182, %s183, %s184
      %p188 = pneg %p182
      %p189 = scmp.eq.s32.totalorder %s21, 1
      %p190 = por %p188, %p189
      %p191 = scmp.ne.s32.totalorder %s183, %s186
      %p192 = scmp.eq.s32.totalorder %s21, 0
      %p193 = por %p191, %p192
      %p194 = scmp.ne.s32.totalorder %s183, %s186
      %p195 = scmp.eq.s32.totalorder %s26, 1
      %p196 = por %p194, %p195
      %p197 = scmp.ne.s32.totalorder %s186, %s187
      %p198 = scmp.eq.s32.totalorder %s26, 0
      %p199 = por %p197, %p198
      %p200 = scmp.ne.s32.totalorder %s186, %s187
      %p201 = scmp.eq.s32.totalorder %s27, 1
      %p202 = por %p200, %p201
      %p204 = scmp.ne.s32.totalorder %s187, %s203
      %p205 = scmp.eq.s32.totalorder %s27, 0
      %p206 = por %p204, %p205
      %s207 = ssub.s32 %s21, %s28
      %p208 = scmp.eq.s32.totalorder %s207, 0
      %s210 = sadd.s32 %s209, 1
      %s211 = scalar_select %p208, %s209, %s210
      %p214 = pneg %p208
      %p215 = scmp.eq.s32.totalorder %s21, 1
      %p216 = por %p214, %p215
      %p217 = scmp.ne.s32.totalorder %s209, %s212
      %p218 = scmp.eq.s32.totalorder %s21, 0
      %p219 = por %p217, %p218
      %p220 = scmp.ne.s32.totalorder %s209, %s212
      %p221 = scmp.eq.s32.totalorder %s26, 1
      %p222 = por %p220, %p221
      %p223 = scmp.ne.s32.totalorder %s212, %s213
      %p224 = scmp.eq.s32.totalorder %s26, 0
      %p225 = por %p223, %p224
      %p226 = scmp.ne.s32.totalorder %s212, %s213
      %p227 = scmp.eq.s32.totalorder %s27, 1
      %p228 = por %p226, %p227
      %p230 = scmp.ne.s32.totalorder %s213, %s229
      %p231 = scmp.eq.s32.totalorder %s27, 0
      %p232 = por %p230, %p231
      %s233 = ssub.s32 %s21, %s28
      %p234 = scmp.eq.s32.totalorder %s233, 0
      %s236 = sadd.s32 %s235, 1
      %s237 = scalar_select %p234, %s235, %s236
      %p240 = pneg %p234
      %p241 = scmp.eq.s32.totalorder %s21, 1
      %p242 = por %p240, %p241
      %p243 = scmp.ne.s32.totalorder %s235, %s238
      %p244 = scmp.eq.s32.totalorder %s21, 0
      %p245 = por %p243, %p244
      %p246 = scmp.ne.s32.totalorder %s235, %s238
      %p247 = scmp.eq.s32.totalorder %s26, 1
      %p248 = por %p246, %p247
      %p249 = scmp.ne.s32.totalorder %s238, %s239
      %p250 = scmp.eq.s32.totalorder %s26, 0
      %p251 = por %p249, %p250
      %p252 = scmp.ne.s32.totalorder %s238, %s239
      %p253 = scmp.eq.s32.totalorder %s27, 1
      %p254 = por %p252, %p253
      %p256 = scmp.ne.s32.totalorder %s239, %s255
      %p257 = scmp.eq.s32.totalorder %s27, 0
      %p258 = por %p256, %p257
      %p259 = scmp.le.s32.totalorder 1, %s21
      %p260 = scmp.lt.s32.totalorder %s21, 3
      %p261 = pnand %p259, %p260
      %p262 = pneg %p261
      // Predicated region
      $region9: #{tpu_custom_call.1} parent=5 // pred_check
        _
      $region10: #{tpu_custom_call.1} parent=5 // pred_check_branch
        %264 = sbr.rel (%p261) target = $region12
      $region11: #{tpu_custom_call.1} parent=5 // pred_region
        %s265 = ssub.s32 %s21, 1
        // Predicated region
        $region13: #{tpu_custom_call.1} parent=11 // pred_check
          %p266 = pneg %p68
        $region14: #{tpu_custom_call.1} parent=11 // pred_check_branch
          %268 = sbr.rel (%p266) target = $region16
        $region15: #{tpu_custom_call.1} parent=11 // pred_region
          _
        $region16: #{tpu_custom_call.1} parent=11 // pred_fallthru
          _
        // Predicated region
        $region17: #{tpu_custom_call.1} parent=11 // pred_check
          %p269 = pneg %p89
        $region18: #{tpu_custom_call.1} parent=11 // pred_check_branch
          %271 = sbr.rel (%p269) target = $region20
        $region19: #{tpu_custom_call.1} parent=11 // pred_region
          _
        $region20: #{tpu_custom_call.1} parent=11 // pred_fallthru
          _
        // Predicated region
        $region21: #{tpu_custom_call.1} parent=11 // pred_check
          %p272 = pneg %p110
        $region22: #{tpu_custom_call.1} parent=11 // pred_check_branch
          %274 = sbr.rel (%p272) target = $region24
        $region23: #{tpu_custom_call.1} parent=11 // pred_region
          _
        $region24: #{tpu_custom_call.1} parent=11 // pred_fallthru
          _
        // Predicated region
        $region25: #{tpu_custom_call.1} parent=11 // pred_check
          %p275 = pneg %p131
        $region26: #{tpu_custom_call.1} parent=11 // pred_check_branch
          %277 = sbr.rel (%p275) target = $region28
        $region27: #{tpu_custom_call.1} parent=11 // pred_region
          _
        $region28: #{tpu_custom_call.1} parent=11 // pred_fallthru
          _
        // Predicated region
        $region29: #{tpu_custom_call.1} parent=11 // pred_check
          %p278 = pneg %p152
        $region30: #{tpu_custom_call.1} parent=11 // pred_check_branch
          %280 = sbr.rel (%p278) target = $region32
        $region31: #{tpu_custom_call.1} parent=11 // pred_region
          _
        $region32: #{tpu_custom_call.1} parent=11 // pred_fallthru
          _
        // Predicated region
        $region33: #{tpu_custom_call.1} parent=11 // pred_check
          %p281 = pneg %p173
        $region34: #{tpu_custom_call.1} parent=11 // pred_check_branch
          %283 = sbr.rel (%p281) target = $region36
        $region35: #{tpu_custom_call.1} parent=11 // pred_region
          _
        $region36: #{tpu_custom_call.1} parent=11 // pred_fallthru
          _
      $region12: #{tpu_custom_call.1} parent=5 // pred_fallthru
        _
      %p284 = scmp.lt.s32.totalorder %s21, 2
      // Predicated region
      $region37: #{tpu_custom_call.1} parent=5 // pred_check
        %p285 = pneg %p284
      $region38: #{tpu_custom_call.1} parent=5 // pred_check_branch
        %287 = sbr.rel (%p285) target = $region40
      $region39: #{tpu_custom_call.1} parent=5 // pred_region
        // Predicated region
        $region41: #{tpu_custom_call.1} parent=39 // pred_check
          %p288 = pneg %p41
        $region42: #{tpu_custom_call.1} parent=39 // pred_check_branch
          %290 = sbr.rel (%p288) target = $region44
        $region43: #{tpu_custom_call.1} parent=39 // pred_region
          %s291 = smul.u32 64, %s21
          %s292 = ssub.s32 125, %s291
          %p293 = scmp.lt.s32.totalorder %s292, 64
          %s294 = scalar_select %p293, %s292, 64
          %s295 = smul.u32 8, %s294
          %p296 = scmp.lt.s32.totalorder %s291, 124
          %s297 = scalar_select %p296, %s291, 124
          %s298 = smul.addr %s297, 8
          %s299 = scalar_lea.vmem %s0, %s298
          %s300 = smul.u32 64, %s21
          %s301 = ssub.s32 125, %s300
          %p302 = scmp.lt.s32.totalorder %s301, 64
          %s303 = scalar_select %p302, %s301, 64
          %s304 = smul.u32 8, %s303
        $region44: #{tpu_custom_call.1} parent=39 // pred_fallthru
          _
        // Predicated region
        $region45: #{tpu_custom_call.1} parent=39 // pred_check
          %p305 = pneg %p193
        $region46: #{tpu_custom_call.1} parent=39 // pred_check_branch
          %307 = sbr.rel (%p305) target = $region48
        $region47: #{tpu_custom_call.1} parent=39 // pred_region
          %s308 = smul.u32 64, %s21
          %s309 = ssub.s32 125, %s308
          %p310 = scmp.lt.s32.totalorder %s309, 64
          %s311 = scalar_select %p310, %s309, 64
          %s312 = smul.u32 8, %s311
          %p313 = scmp.lt.s32.totalorder %s308, 124
          %s314 = scalar_select %p313, %s308, 124
          %s315 = smul.addr %s314, 8
          %s316 = scalar_lea.vmem %s7, %s315
          %s317 = smul.u32 64, %s21
          %s318 = ssub.s32 125, %s317
          %p319 = scmp.lt.s32.totalorder %s318, 64
          %s320 = scalar_select %p319, %s318, 64
          %s321 = smul.u32 8, %s320
        $region48: #{tpu_custom_call.1} parent=39 // pred_fallthru
          _
      $region40: #{tpu_custom_call.1} parent=5 // pred_fallthru
        _
      %p322 = scmp.le.s32.totalorder 1, %s21
      %p323 = scmp.lt.s32.totalorder %s21, 3
      %p324 = pnand %p322, %p323
      %p325 = pneg %p324
      // Predicated region
      $region49: #{tpu_custom_call.1} parent=5 // pred_check
        _
      $region50: #{tpu_custom_call.1} parent=5 // pred_check_branch
        %327 = sbr.rel (%p324) target = $region52
      $region51: #{tpu_custom_call.1} parent=5 // pred_region
        %s328 = ssub.s32 %s21, 1
        %s329 = smul.u32 64, %s26
        %s330 = ssub.s32 125, %s329
        %p331 = scmp.lt.s32.totalorder %s330, 64
        %s332 = scalar_select %p331, %s330, 64
        %s333 = smul.u32 8, %s332
        %p334 = scmp.lt.s32.totalorder %s329, 124
        %s335 = scalar_select %p334, %s329, 124
        %s336 = smul.addr %s335, 8
        %s337 = scalar_lea.vmem %s0, %s336
        %p338 = pneg %p47
        %p339 = pneg %p44
        %p340 = pneg %p68
        %p341 = pneg %p65
        %p342 = pneg %p89
        %p343 = pneg %p86
        %p344 = pneg %p110
        %p345 = pneg %p107
        %p346 = pneg %p131
        %p347 = pneg %p128
        %p348 = pneg %p152
        %p349 = pneg %p149
        %p350 = pneg %p173
        %p351 = pneg %p170
        %s352 = smul.u32 64, %s26
        %s353 = ssub.s32 125, %s352
        %p354 = scmp.lt.s32.totalorder %s353, 64
        %s355 = scalar_select %p354, %s353, 64
        %s356 = smul.u32 8, %s355
        %p357 = scmp.lt.s32.totalorder %s352, 124
        %s358 = scalar_select %p357, %s352, 124
        %s359 = smul.addr %s358, 8
        %s360 = scalar_lea.vmem %s7, %s359
        %p361 = pneg %p199
        %p362 = pneg %p196
        %p363 = pneg %p225
        %p364 = pneg %p222
        %s365 = sand.u32 %s212, 1
        %s366 = scalar_lea.sflag [#allocation4], %s365
        %s367 = sand.u32 %s212, 1
        %s368 = smul.addr %s367, 512
        %s369 = scalar_lea.vmem [#allocation3], %s368
        %p370 = pneg %p251
        %p371 = pneg %p248
        %s372 = sand.u32 %s238, 1
        %s373 = sand.u32 %s238, 1
        %s374 = smul.addr %s373, 512
        %s375 = scalar_lea.vmem [#allocation5], %s374
        %s376 = smul.u32 64, %s26
        %s377 = ssub.s32 125, %s376
        %p378 = scmp.lt.s32.totalorder %s377, 64
        %s379 = scalar_select %p378, %s377, 64
        %s380 = smul.u32 8, %s379
        %p381 = scmp.lt.s32.totalorder %s376, 124
        %s382 = scalar_select %p381, %s376, 124
        %s383 = smul.addr %s382, 8
        %s384 = scalar_lea.vmem %s0, %s383
        %s385 = smul.u32 64, %s26
        %s386 = ssub.s32 125, %s385
        %p387 = scmp.lt.s32.totalorder %s386, 64
        %s388 = scalar_select %p387, %s386, 64
        %s389 = smul.u32 8, %s388
        %s390 = smul.u32 64, %s26
        %s391 = ssub.s32 125, %s390
        %p392 = scmp.lt.s32.totalorder %s391, 64
        %s393 = scalar_select %p392, %s391, 64
        %s394 = smul.u32 8, %s393
        %p395 = scmp.lt.s32.totalorder %s390, 124
        %s396 = scalar_select %p395, %s390, 124
        %s397 = smul.addr %s396, 8
        %s398 = scalar_lea.vmem %s7, %s397
        %s399 = smul.u32 64, %s26
        %s400 = ssub.s32 125, %s399
        %p401 = scmp.lt.s32.totalorder %s400, 64
        %s402 = scalar_select %p401, %s400, 64
        %s403 = smul.u32 8, %s402
        %s404 = smul.u32 64, %s26
        %s405 = ssub.s32 125, %s404
        %p406 = scmp.lt.s32.totalorder %s405, 64
        %s407 = scalar_select %p406, %s405, 64
        %s408 = smul.u32 8, %s407
        %s409 = smul.u32 64, %s26
        %s410 = ssub.s32 125, %s409
        %p411 = scmp.lt.s32.totalorder %s410, 64
        %s412 = scalar_select %p411, %s410, 64
        %s413 = smul.u32 8, %s412
        %v414 = vld [vmem:[%s384] sm:$0xff]
        %v415 = vld [vmem:[%s384 + $0x8] sm:$0xff]
        %v416 = vld [vmem:[%s384 + $0x10] sm:$0xff]
        %v417 = vld [vmem:[%s384 + $0x18] sm:$0xff]
        %v418 = vld [vmem:[%s384 + $0x20] sm:$0xff]
        %v419 = vld [vmem:[%s384 + $0x28] sm:$0xff]
        %v420 = vld [vmem:[%s384 + $0x30] sm:$0xff]
        %v421 = vld [vmem:[%s384 + $0x38] sm:$0xff]
        %v422 = vld [vmem:[%s384 + $0x40] sm:$0xff]
        %v423 = vld [vmem:[%s384 + $0x48] sm:$0xff]
        %v424 = vld [vmem:[%s384 + $0x50] sm:$0xff]
        %v425 = vld [vmem:[%s384 + $0x58] sm:$0xff]
        %v426 = vld [vmem:[%s384 + $0x60] sm:$0xff]
        %v427 = vld [vmem:[%s384 + $0x68] sm:$0xff]
        %v428 = vld [vmem:[%s384 + $0x70] sm:$0xff]
        %v429 = vld [vmem:[%s384 + $0x78] sm:$0xff]
        %v430 = vld [vmem:[%s384 + $0x80] sm:$0xff]
        %v431 = vld [vmem:[%s384 + $0x88] sm:$0xff]
        %v432 = vld [vmem:[%s384 + $0x90] sm:$0xff]
        %v433 = vld [vmem:[%s384 + $0x98] sm:$0xff]
        %v434 = vld [vmem:[%s384 + $0xa0] sm:$0xff]
        %v435 = vld [vmem:[%s384 + $0xa8] sm:$0xff]
        %v436 = vld [vmem:[%s384 + $0xb0] sm:$0xff]
        %v437 = vld [vmem:[%s384 + $0xb8] sm:$0xff]
        %v438 = vld [vmem:[%s384 + $0xc0] sm:$0xff]
        %v439 = vld [vmem:[%s384 + $0xc8] sm:$0xff]
        %v440 = vld [vmem:[%s384 + $0xd0] sm:$0xff]
        %v441 = vld [vmem:[%s384 + $0xd8] sm:$0xff]
        %v442 = vld [vmem:[%s384 + $0xe0] sm:$0xff]
        %v443 = vld [vmem:[%s384 + $0xe8] sm:$0xff]
        %v444 = vld [vmem:[%s384 + $0xf0] sm:$0xff]
        %v445 = vld [vmem:[%s384 + $0xf8] sm:$0xff]
        %v446 = vld [vmem:[%s384 + $0x100] sm:$0xff]
        %v447 = vld [vmem:[%s384 + $0x108] sm:$0xff]
        %v448 = vld [vmem:[%s384 + $0x110] sm:$0xff]
        %v449 = vld [vmem:[%s384 + $0x118] sm:$0xff]
        %v450 = vld [vmem:[%s384 + $0x120] sm:$0xff]
        %v451 = vld [vmem:[%s384 + $0x128] sm:$0xff]
        %v452 = vld [vmem:[%s384 + $0x130] sm:$0xff]
        %v453 = vld [vmem:[%s384 + $0x138] sm:$0xff]
        %v454 = vld [vmem:[%s384 + $0x140] sm:$0xff]
        %v455 = vld [vmem:[%s384 + $0x148] sm:$0xff]
        %v456 = vld [vmem:[%s384 + $0x150] sm:$0xff]
        %v457 = vld [vmem:[%s384 + $0x158] sm:$0xff]
        %v458 = vld [vmem:[%s384 + $0x160] sm:$0xff]
        %v459 = vld [vmem:[%s384 + $0x168] sm:$0xff]
        %v460 = vld [vmem:[%s384 + $0x170] sm:$0xff]
        %v461 = vld [vmem:[%s384 + $0x178] sm:$0xff]
        %v462 = vld [vmem:[%s384 + $0x180] sm:$0xff]
        %v463 = vld [vmem:[%s384 + $0x188] sm:$0xff]
        %v464 = vld [vmem:[%s384 + $0x190] sm:$0xff]
        %v465 = vld [vmem:[%s384 + $0x198] sm:$0xff]
        %v466 = vld [vmem:[%s384 + $0x1a0] sm:$0xff]
        %v467 = vld [vmem:[%s384 + $0x1a8] sm:$0xff]
        %v468 = vld [vmem:[%s384 + $0x1b0] sm:$0xff]
        %v469 = vld [vmem:[%s384 + $0x1b8] sm:$0xff]
        %v470 = vld [vmem:[%s384 + $0x1c0] sm:$0xff]
        %v471 = vld [vmem:[%s384 + $0x1c8] sm:$0xff]
        %v472 = vld [vmem:[%s384 + $0x1d0] sm:$0xff]
        %v473 = vld [vmem:[%s384 + $0x1d8] sm:$0xff]
        %v474 = vld [vmem:[%s384 + $0x1e0] sm:$0xff]
        %v475 = vld [vmem:[%s384 + $0x1e8] sm:$0xff]
        %v476 = vld [vmem:[%s384 + $0x1f0] sm:$0xff]
        %v477 = vld [vmem:[%s384 + $0x1f8] sm:$0xff]
        %478 = vrot.lane.b32.xlu0 %v414, 32
        %v479 = vpop.permute.xlu0 %478
        %480 = vrot.lane.b32.xlu0 %v415, 32
        %v481 = vpop.permute.xlu0 %480
        %482 = vrot.lane.b32.xlu0 %v416, 32
        %v483 = vpop.permute.xlu0 %482
        %484 = vrot.lane.b32.xlu0 %v417, 32
        %v485 = vpop.permute.xlu0 %484
        %486 = vrot.lane.b32.xlu0 %v418, 32
        %v487 = vpop.permute.xlu0 %486
        %488 = vrot.lane.b32.xlu0 %v419, 32
        %v489 = vpop.permute.xlu0 %488
        %490 = vrot.lane.b32.xlu0 %v420, 32
        %v491 = vpop.permute.xlu0 %490
        %492 = vrot.lane.b32.xlu0 %v421, 32
        %v493 = vpop.permute.xlu0 %492
        %494 = vrot.lane.b32.xlu0 %v422, 32
        %v495 = vpop.permute.xlu0 %494
        %496 = vrot.lane.b32.xlu0 %v423, 32
        %v497 = vpop.permute.xlu0 %496
        %498 = vrot.lane.b32.xlu0 %v424, 32
        %v499 = vpop.permute.xlu0 %498
        %500 = vrot.lane.b32.xlu0 %v425, 32
        %v501 = vpop.permute.xlu0 %500
        %502 = vrot.lane.b32.xlu0 %v426, 32
        %v503 = vpop.permute.xlu0 %502
        %504 = vrot.lane.b32.xlu0 %v427, 32
        %v505 = vpop.permute.xlu0 %504
        %506 = vrot.lane.b32.xlu0 %v428, 32
        %v507 = vpop.permute.xlu0 %506
        %508 = vrot.lane.b32.xlu0 %v429, 32
        %v509 = vpop.permute.xlu0 %508
        %510 = vrot.lane.b32.xlu0 %v430, 32
        %v511 = vpop.permute.xlu0 %510
        %512 = vrot.lane.b32.xlu0 %v431, 32
        %v513 = vpop.permute.xlu0 %512
        %514 = vrot.lane.b32.xlu0 %v432, 32
        %v515 = vpop.permute.xlu0 %514
        %516 = vrot.lane.b32.xlu0 %v433, 32
        %v517 = vpop.permute.xlu0 %516
        %518 = vrot.lane.b32.xlu0 %v434, 32
        %v519 = vpop.permute.xlu0 %518
        %520 = vrot.lane.b32.xlu0 %v435, 32
        %v521 = vpop.permute.xlu0 %520
        %522 = vrot.lane.b32.xlu0 %v436, 32
        %v523 = vpop.permute.xlu0 %522
        %524 = vrot.lane.b32.xlu0 %v437, 32
        %v525 = vpop.permute.xlu0 %524
        %526 = vrot.lane.b32.xlu0 %v438, 32
        %v527 = vpop.permute.xlu0 %526
        %528 = vrot.lane.b32.xlu0 %v439, 32
        %v529 = vpop.permute.xlu0 %528
        %530 = vrot.lane.b32.xlu0 %v440, 32
        %v531 = vpop.permute.xlu0 %530
        %532 = vrot.lane.b32.xlu0 %v441, 32
        %v533 = vpop.permute.xlu0 %532
        %534 = vrot.lane.b32.xlu0 %v442, 32
        %v535 = vpop.permute.xlu0 %534
        %536 = vrot.lane.b32.xlu0 %v443, 32
        %v537 = vpop.permute.xlu0 %536
        %538 = vrot.lane.b32.xlu0 %v444, 32
        %v539 = vpop.permute.xlu0 %538
        %540 = vrot.lane.b32.xlu0 %v445, 32
        %v541 = vpop.permute.xlu0 %540
        %542 = vrot.lane.b32.xlu0 %v446, 32
        %v543 = vpop.permute.xlu0 %542
        %544 = vrot.lane.b32.xlu0 %v447, 32
        %v545 = vpop.permute.xlu0 %544
        %546 = vrot.lane.b32.xlu0 %v448, 32
        %v547 = vpop.permute.xlu0 %546
        %548 = vrot.lane.b32.xlu0 %v449, 32
        %v549 = vpop.permute.xlu0 %548
        %550 = vrot.lane.b32.xlu0 %v450, 32
        %v551 = vpop.permute.xlu0 %550
        %552 = vrot.lane.b32.xlu0 %v451, 32
        %v553 = vpop.permute.xlu0 %552
        %554 = vrot.lane.b32.xlu0 %v452, 32
        %v555 = vpop.permute.xlu0 %554
        %556 = vrot.lane.b32.xlu0 %v453, 32
        %v557 = vpop.permute.xlu0 %556
        %558 = vrot.lane.b32.xlu0 %v454, 32
        %v559 = vpop.permute.xlu0 %558
        %560 = vrot.lane.b32.xlu0 %v455, 32
        %v561 = vpop.permute.xlu0 %560
        %562 = vrot.lane.b32.xlu0 %v456, 32
        %v563 = vpop.permute.xlu0 %562
        %564 = vrot.lane.b32.xlu0 %v457, 32
        %v565 = vpop.permute.xlu0 %564
        %566 = vrot.lane.b32.xlu0 %v458, 32
        %v567 = vpop.permute.xlu0 %566
        %568 = vrot.lane.b32.xlu0 %v459, 32
        %v569 = vpop.permute.xlu0 %568
        %570 = vrot.lane.b32.xlu0 %v460, 32
        %v571 = vpop.permute.xlu0 %570
        %572 = vrot.lane.b32.xlu0 %v461, 32
        %v573 = vpop.permute.xlu0 %572
        %574 = vrot.lane.b32.xlu0 %v462, 32
        %v575 = vpop.permute.xlu0 %574
        %576 = vrot.lane.b32.xlu0 %v463, 32
        %v577 = vpop.permute.xlu0 %576
        %578 = vrot.lane.b32.xlu0 %v464, 32
        %v579 = vpop.permute.xlu0 %578
        %580 = vrot.lane.b32.xlu0 %v465, 32
        %v581 = vpop.permute.xlu0 %580
        %582 = vrot.lane.b32.xlu0 %v466, 32
        %v583 = vpop.permute.xlu0 %582
        %584 = vrot.lane.b32.xlu0 %v467, 32
        %v585 = vpop.permute.xlu0 %584
        %586 = vrot.lane.b32.xlu0 %v468, 32
        %v587 = vpop.permute.xlu0 %586
        %588 = vrot.lane.b32.xlu0 %v469, 32
        %v589 = vpop.permute.xlu0 %588
        %590 = vrot.lane.b32.xlu0 %v470, 32
        %v591 = vpop.permute.xlu0 %590
        %592 = vrot.lane.b32.xlu0 %v471, 32
        %v593 = vpop.permute.xlu0 %592
        %594 = vrot.lane.b32.xlu0 %v472, 32
        %v595 = vpop.permute.xlu0 %594
        %596 = vrot.lane.b32.xlu0 %v473, 32
        %v597 = vpop.permute.xlu0 %596
        %598 = vrot.lane.b32.xlu0 %v474, 32
        %v599 = vpop.permute.xlu0 %598
        %600 = vrot.lane.b32.xlu0 %v475, 32
        %v601 = vpop.permute.xlu0 %600
        %602 = vrot.lane.b32.xlu0 %v476, 32
        %v603 = vpop.permute.xlu0 %602
        %604 = vrot.lane.b32.xlu0 %v477, 32
        %v605 = vpop.permute.xlu0 %604
        %v606 = vadd.f32 %v414, %v479
        %v607 = vadd.f32 %v415, %v481
        %v608 = vadd.f32 %v416, %v483
        %v609 = vadd.f32 %v417, %v485
        %v610 = vadd.f32 %v418, %v487
        %v611 = vadd.f32 %v419, %v489
        %v612 = vadd.f32 %v420, %v491
        %v613 = vadd.f32 %v421, %v493
        %v614 = vadd.f32 %v422, %v495
        %v615 = vadd.f32 %v423, %v497
        %v616 = vadd.f32 %v424, %v499
        %v617 = vadd.f32 %v425, %v501
        %v618 = vadd.f32 %v426, %v503
        %v619 = vadd.f32 %v427, %v505
        %v620 = vadd.f32 %v428, %v507
        %v621 = vadd.f32 %v429, %v509
        %v622 = vadd.f32 %v430, %v511
        %v623 = vadd.f32 %v431, %v513
        %v624 = vadd.f32 %v432, %v515
        %v625 = vadd.f32 %v433, %v517
        %v626 = vadd.f32 %v434, %v519
        %v627 = vadd.f32 %v435, %v521
        %v628 = vadd.f32 %v436, %v523
        %v629 = vadd.f32 %v437, %v525
        %v630 = vadd.f32 %v438, %v527
        %v631 = vadd.f32 %v439, %v529
        %v632 = vadd.f32 %v440, %v531
        %v633 = vadd.f32 %v441, %v533
        %v634 = vadd.f32 %v442, %v535
        %v635 = vadd.f32 %v443, %v537
        %v636 = vadd.f32 %v444, %v539
        %v637 = vadd.f32 %v445, %v541
        %v638 = vadd.f32 %v446, %v543
        %v639 = vadd.f32 %v447, %v545
        %v640 = vadd.f32 %v448, %v547
        %v641 = vadd.f32 %v449, %v549
        %v642 = vadd.f32 %v450, %v551
        %v643 = vadd.f32 %v451, %v553
        %v644 = vadd.f32 %v452, %v555
        %v645 = vadd.f32 %v453, %v557
        %v646 = vadd.f32 %v454, %v559
        %v647 = vadd.f32 %v455, %v561
        %v648 = vadd.f32 %v456, %v563
        %v649 = vadd.f32 %v457, %v565
        %v650 = vadd.f32 %v458, %v567
        %v651 = vadd.f32 %v459, %v569
        %v652 = vadd.f32 %v460, %v571
        %v653 = vadd.f32 %v461, %v573
        %v654 = vadd.f32 %v462, %v575
        %v655 = vadd.f32 %v463, %v577
        %v656 = vadd.f32 %v464, %v579
        %v657 = vadd.f32 %v465, %v581
        %v658 = vadd.f32 %v466, %v583
        %v659 = vadd.f32 %v467, %v585
        %v660 = vadd.f32 %v468, %v587
        %v661 = vadd.f32 %v469, %v589
        %v662 = vadd.f32 %v470, %v591
        %v663 = vadd.f32 %v471, %v593
        %v664 = vadd.f32 %v472, %v595
        %v665 = vadd.f32 %v473, %v597
        %v666 = vadd.f32 %v474, %v599
        %v667 = vadd.f32 %v475, %v601
        %v668 = vadd.f32 %v476, %v603
        %v669 = vadd.f32 %v477, %v605
        %670 = vrot.lane.b32.xlu0 %v606, 64
        %v671 = vpop.permute.xlu0 %670
        %672 = vrot.lane.b32.xlu0 %v607, 64
        %v673 = vpop.permute.xlu0 %672
        %674 = vrot.lane.b32.xlu0 %v608, 64
        %v675 = vpop.permute.xlu0 %674
        %676 = vrot.lane.b32.xlu0 %v609, 64
        %v677 = vpop.permute.xlu0 %676
        %678 = vrot.lane.b32.xlu0 %v610, 64
        %v679 = vpop.permute.xlu0 %678
        %680 = vrot.lane.b32.xlu0 %v611, 64
        %v681 = vpop.permute.xlu0 %680
        %682 = vrot.lane.b32.xlu0 %v612, 64
        %v683 = vpop.permute.xlu0 %682
        %684 = vrot.lane.b32.xlu0 %v613, 64
        %v685 = vpop.permute.xlu0 %684
        %686 = vrot.lane.b32.xlu0 %v614, 64
        %v687 = vpop.permute.xlu0 %686
        %688 = vrot.lane.b32.xlu0 %v615, 64
        %v689 = vpop.permute.xlu0 %688
        %690 = vrot.lane.b32.xlu0 %v616, 64
        %v691 = vpop.permute.xlu0 %690
        %692 = vrot.lane.b32.xlu0 %v617, 64
        %v693 = vpop.permute.xlu0 %692
        %694 = vrot.lane.b32.xlu0 %v618, 64
        %v695 = vpop.permute.xlu0 %694
        %696 = vrot.lane.b32.xlu0 %v619, 64
        %v697 = vpop.permute.xlu0 %696
        %698 = vrot.lane.b32.xlu0 %v620, 64
        %v699 = vpop.permute.xlu0 %698
        %700 = vrot.lane.b32.xlu0 %v621, 64
        %v701 = vpop.permute.xlu0 %700
        %702 = vrot.lane.b32.xlu0 %v622, 64
        %v703 = vpop.permute.xlu0 %702
        %704 = vrot.lane.b32.xlu0 %v623, 64
        %v705 = vpop.permute.xlu0 %704
        %706 = vrot.lane.b32.xlu0 %v624, 64
        %v707 = vpop.permute.xlu0 %706
        %708 = vrot.lane.b32.xlu0 %v625, 64
        %v709 = vpop.permute.xlu0 %708
        %710 = vrot.lane.b32.xlu0 %v626, 64
        %v711 = vpop.permute.xlu0 %710
        %712 = vrot.lane.b32.xlu0 %v627, 64
        %v713 = vpop.permute.xlu0 %712
        %714 = vrot.lane.b32.xlu0 %v628, 64
        %v715 = vpop.permute.xlu0 %714
        %716 = vrot.lane.b32.xlu0 %v629, 64
        %v717 = vpop.permute.xlu0 %716
        %718 = vrot.lane.b32.xlu0 %v630, 64
        %v719 = vpop.permute.xlu0 %718
        %720 = vrot.lane.b32.xlu0 %v631, 64
        %v721 = vpop.permute.xlu0 %720
        %722 = vrot.lane.b32.xlu0 %v632, 64
        %v723 = vpop.permute.xlu0 %722
        %724 = vrot.lane.b32.xlu0 %v633, 64
        %v725 = vpop.permute.xlu0 %724
        %726 = vrot.lane.b32.xlu0 %v634, 64
        %v727 = vpop.permute.xlu0 %726
        %728 = vrot.lane.b32.xlu0 %v635, 64
        %v729 = vpop.permute.xlu0 %728
        %730 = vrot.lane.b32.xlu0 %v636, 64
        %v731 = vpop.permute.xlu0 %730
        %732 = vrot.lane.b32.xlu0 %v637, 64
        %v733 = vpop.permute.xlu0 %732
        %734 = vrot.lane.b32.xlu0 %v638, 64
        %v735 = vpop.permute.xlu0 %734
        %736 = vrot.lane.b32.xlu0 %v639, 64
        %v737 = vpop.permute.xlu0 %736
        %738 = vrot.lane.b32.xlu0 %v640, 64
        %v739 = vpop.permute.xlu0 %738
        %740 = vrot.lane.b32.xlu0 %v641, 64
        %v741 = vpop.permute.xlu0 %740
        %742 = vrot.lane.b32.xlu0 %v642, 64
        %v743 = vpop.permute.xlu0 %742
        %744 = vrot.lane.b32.xlu0 %v643, 64
        %v745 = vpop.permute.xlu0 %744
        %746 = vrot.lane.b32.xlu0 %v644, 64
        %v747 = vpop.permute.xlu0 %746
        %748 = vrot.lane.b32.xlu0 %v645, 64
        %v749 = vpop.permute.xlu0 %748
        %750 = vrot.lane.b32.xlu0 %v646, 64
        %v751 = vpop.permute.xlu0 %750
        %752 = vrot.lane.b32.xlu0 %v647, 64
        %v753 = vpop.permute.xlu0 %752
        %754 = vrot.lane.b32.xlu0 %v648, 64
        %v755 = vpop.permute.xlu0 %754
        %756 = vrot.lane.b32.xlu0 %v649, 64
        %v757 = vpop.permute.xlu0 %756
        %758 = vrot.lane.b32.xlu0 %v650, 64
        %v759 = vpop.permute.xlu0 %758
        %760 = vrot.lane.b32.xlu0 %v651, 64
        %v761 = vpop.permute.xlu0 %760
        %762 = vrot.lane.b32.xlu0 %v652, 64
        %v763 = vpop.permute.xlu0 %762
        %764 = vrot.lane.b32.xlu0 %v653, 64
        %v765 = vpop.permute.xlu0 %764
        %766 = vrot.lane.b32.xlu0 %v654, 64
        %v767 = vpop.permute.xlu0 %766
        %768 = vrot.lane.b32.xlu0 %v655, 64
        %v769 = vpop.permute.xlu0 %768
        %770 = vrot.lane.b32.xlu0 %v656, 64
        %v771 = vpop.permute.xlu0 %770
        %772 = vrot.lane.b32.xlu0 %v657, 64
        %v773 = vpop.permute.xlu0 %772
        %774 = vrot.lane.b32.xlu0 %v658, 64
        %v775 = vpop.permute.xlu0 %774
        %776 = vrot.lane.b32.xlu0 %v659, 64
        %v777 = vpop.permute.xlu0 %776
        %778 = vrot.lane.b32.xlu0 %v660, 64
        %v779 = vpop.permute.xlu0 %778
        %780 = vrot.lane.b32.xlu0 %v661, 64
        %v781 = vpop.permute.xlu0 %780
        %782 = vrot.lane.b32.xlu0 %v662, 64
        %v783 = vpop.permute.xlu0 %782
        %784 = vrot.lane.b32.xlu0 %v663, 64
        %v785 = vpop.permute.xlu0 %784
        %786 = vrot.lane.b32.xlu0 %v664, 64
        %v787 = vpop.permute.xlu0 %786
        %788 = vrot.lane.b32.xlu0 %v665, 64
        %v789 = vpop.permute.xlu0 %788
        %790 = vrot.lane.b32.xlu0 %v666, 64
        %v791 = vpop.permute.xlu0 %790
        %792 = vrot.lane.b32.xlu0 %v667, 64
        %v793 = vpop.permute.xlu0 %792
        %794 = vrot.lane.b32.xlu0 %v668, 64
        %v795 = vpop.permute.xlu0 %794
        %796 = vrot.lane.b32.xlu0 %v669, 64
        %v797 = vpop.permute.xlu0 %796
        %v798 = vadd.f32 %v606, %v671
        %v799 = vadd.f32 %v607, %v673
        %v800 = vadd.f32 %v608, %v675
        %v801 = vadd.f32 %v609, %v677
        %v802 = vadd.f32 %v610, %v679
        %v803 = vadd.f32 %v611, %v681
        %v804 = vadd.f32 %v612, %v683
        %v805 = vadd.f32 %v613, %v685
        %v806 = vadd.f32 %v614, %v687
        %v807 = vadd.f32 %v615, %v689
        %v808 = vadd.f32 %v616, %v691
        %v809 = vadd.f32 %v617, %v693
        %v810 = vadd.f32 %v618, %v695
        %v811 = vadd.f32 %v619, %v697
        %v812 = vadd.f32 %v620, %v699
        %v813 = vadd.f32 %v621, %v701
        %v814 = vadd.f32 %v622, %v703
        %v815 = vadd.f32 %v623, %v705
        %v816 = vadd.f32 %v624, %v707
        %v817 = vadd.f32 %v625, %v709
        %v818 = vadd.f32 %v626, %v711
        %v819 = vadd.f32 %v627, %v713
        %v820 = vadd.f32 %v628, %v715
        %v821 = vadd.f32 %v629, %v717
        %v822 = vadd.f32 %v630, %v719
        %v823 = vadd.f32 %v631, %v721
        %v824 = vadd.f32 %v632, %v723
        %v825 = vadd.f32 %v633, %v725
        %v826 = vadd.f32 %v634, %v727
        %v827 = vadd.f32 %v635, %v729
        %v828 = vadd.f32 %v636, %v731
        %v829 = vadd.f32 %v637, %v733
        %v830 = vadd.f32 %v638, %v735
        %v831 = vadd.f32 %v639, %v737
        %v832 = vadd.f32 %v640, %v739
        %v833 = vadd.f32 %v641, %v741
        %v834 = vadd.f32 %v642, %v743
        %v835 = vadd.f32 %v643, %v745
        %v836 = vadd.f32 %v644, %v747
        %v837 = vadd.f32 %v645, %v749
        %v838 = vadd.f32 %v646, %v751
        %v839 = vadd.f32 %v647, %v753
        %v840 = vadd.f32 %v648, %v755
        %v841 = vadd.f32 %v649, %v757
        %v842 = vadd.f32 %v650, %v759
        %v843 = vadd.f32 %v651, %v761
        %v844 = vadd.f32 %v652, %v763
        %v845 = vadd.f32 %v653, %v765
        %v846 = vadd.f32 %v654, %v767
        %v847 = vadd.f32 %v655, %v769
        %v848 = vadd.f32 %v656, %v771
        %v849 = vadd.f32 %v657, %v773
        %v850 = vadd.f32 %v658, %v775
        %v851 = vadd.f32 %v659, %v777
        %v852 = vadd.f32 %v660, %v779
        %v853 = vadd.f32 %v661, %v781
        %v854 = vadd.f32 %v662, %v783
        %v855 = vadd.f32 %v663, %v785
        %v856 = vadd.f32 %v664, %v787
        %v857 = vadd.f32 %v665, %v789
        %v858 = vadd.f32 %v666, %v791
        %v859 = vadd.f32 %v667, %v793
        %v860 = vadd.f32 %v668, %v795
        %v861 = vadd.f32 %v669, %v797
        %v862 = vld [vmem:[%s1] sm:$0xff]
        %v863 = vld [vmem:[%s1 + $0x8] sm:$0xff]
        %v864 = vld [vmem:[%s1 + $0x10] sm:$0xff]
        %v865 = vld [vmem:[%s1 + $0x18] sm:$0xff]
        %v866 = vld [vmem:[%s1 + $0x20] sm:$0xff]
        %v867 = vld [vmem:[%s1 + $0x28] sm:$0xff]
        %v868 = vld [vmem:[%s1 + $0x30] sm:$0xff]
        %v869 = vld [vmem:[%s1 + $0x38] sm:$0xff]
        %v870 = vld [vmem:[%s1 + $0x40] sm:$0xff]
        %v871 = vld [vmem:[%s1 + $0x48] sm:$0xff]
        %v872 = vld [vmem:[%s1 + $0x50] sm:$0xff]
        %v873 = vld [vmem:[%s1 + $0x58] sm:$0xff]
        %v874 = vld [vmem:[%s1 + $0x60] sm:$0xff]
        %v875 = vld [vmem:[%s1 + $0x68] sm:$0xff]
        %v876 = vld [vmem:[%s1 + $0x70] sm:$0xff]
        %v877 = vld [vmem:[%s1 + $0x78] sm:$0xff]
        %v878 = vld [vmem:[%s2] sm:$0x1]
        %v880 = vperm.slane %v878, 0
        %882 = vmatpush.msra.mxu0 %v877
        %883 = vmatpush.msra.mxu0 %v876
        %884 = vmatpush.msra.mxu0 %v875
        %885 = vmatpush.msra.mxu0 %v874
        %886 = vmatpush.msra.mxu0 %v873
        %887 = vmatpush.msra.mxu0 %v872
        %888 = vmatpush.msra.mxu0 %v871
        %889 = vmatpush.msra.mxu0 %v870
        %890 = vmatpush.msra.mxu0 %v869
        %891 = vmatpush.msra.mxu0 %v868
        %892 = vmatpush.msra.mxu0 %v867
        %893 = vmatpush.msra.mxu0 %v866
        %894 = vmatpush.msra.mxu0 %v865
        %895 = vmatpush.msra.mxu0 %v864
        %896 = vmatpush.msra.mxu0 %v863
        %897 = vmatpush.msra.mxu0 %v862
        %898 = vmatmul.f32.gmra.mxu0 %v798
        %v899 = vpop.f32.mrf.mxu0
        %v900 = vadd.f32 %v880, %v899
        %901 = vmatmul.f32.gmra.mxu0 %v799
        %v902 = vpop.f32.mrf.mxu0
        %v903 = vadd.f32 %v880, %v902
        %904 = vmatmul.f32.gmra.mxu0 %v800
        %v905 = vpop.f32.mrf.mxu0
        %v906 = vadd.f32 %v880, %v905
        %907 = vmatmul.f32.gmra.mxu0 %v801
        %v908 = vpop.f32.mrf.mxu0
        %v909 = vadd.f32 %v880, %v908
        %910 = vmatmul.f32.gmra.mxu0 %v802
        %v911 = vpop.f32.mrf.mxu0
        %v912 = vadd.f32 %v880, %v911
        %913 = vmatmul.f32.gmra.mxu0 %v803
        %v914 = vpop.f32.mrf.mxu0
        %v915 = vadd.f32 %v880, %v914
        %916 = vmatmul.f32.gmra.mxu0 %v804
        %v917 = vpop.f32.mrf.mxu0
        %v918 = vadd.f32 %v880, %v917
        %919 = vmatmul.f32.gmra.mxu0 %v805
        %v920 = vpop.f32.mrf.mxu0
        %v921 = vadd.f32 %v880, %v920
        %922 = vmatmul.f32.gmra.mxu0 %v806
        %v923 = vpop.f32.mrf.mxu0
        %v924 = vadd.f32 %v880, %v923
        %925 = vmatmul.f32.gmra.mxu0 %v807
        %v926 = vpop.f32.mrf.mxu0
        %v927 = vadd.f32 %v880, %v926
        %928 = vmatmul.f32.gmra.mxu0 %v808
        %v929 = vpop.f32.mrf.mxu0
        %v930 = vadd.f32 %v880, %v929
        %931 = vmatmul.f32.gmra.mxu0 %v809
        %v932 = vpop.f32.mrf.mxu0
        %v933 = vadd.f32 %v880, %v932
        %934 = vmatmul.f32.gmra.mxu0 %v810
        %v935 = vpop.f32.mrf.mxu0
        %v936 = vadd.f32 %v880, %v935
        %937 = vmatmul.f32.gmra.mxu0 %v811
        %v938 = vpop.f32.mrf.mxu0
        %v939 = vadd.f32 %v880, %v938
        %940 = vmatmul.f32.gmra.mxu0 %v812
        %v941 = vpop.f32.mrf.mxu0
        %v942 = vadd.f32 %v880, %v941
        %943 = vmatmul.f32.gmra.mxu0 %v813
        %v944 = vpop.f32.mrf.mxu0
        %v945 = vadd.f32 %v880, %v944
        %946 = vmatmul.f32.gmra.mxu0 %v814
        %v947 = vpop.f32.mrf.mxu0
        %v948 = vadd.f32 %v880, %v947
        %949 = vmatmul.f32.gmra.mxu0 %v815
        %v950 = vpop.f32.mrf.mxu0
        %v951 = vadd.f32 %v880, %v950
        %952 = vmatmul.f32.gmra.mxu0 %v816
        %v953 = vpop.f32.mrf.mxu0
        %v954 = vadd.f32 %v880, %v953
        %955 = vmatmul.f32.gmra.mxu0 %v817
        %v956 = vpop.f32.mrf.mxu0
        %v957 = vadd.f32 %v880, %v956
        %958 = vmatmul.f32.gmra.mxu0 %v818
        %v959 = vpop.f32.mrf.mxu0
        %v960 = vadd.f32 %v880, %v959
        %961 = vmatmul.f32.gmra.mxu0 %v819
        %v962 = vpop.f32.mrf.mxu0
        %v963 = vadd.f32 %v880, %v962
        %964 = vmatmul.f32.gmra.mxu0 %v820
        %v965 = vpop.f32.mrf.mxu0
        %v966 = vadd.f32 %v880, %v965
        %967 = vmatmul.f32.gmra.mxu0 %v821
        %v968 = vpop.f32.mrf.mxu0
        %v969 = vadd.f32 %v880, %v968
        %970 = vmatmul.f32.gmra.mxu0 %v822
        %v971 = vpop.f32.mrf.mxu0
        %v972 = vadd.f32 %v880, %v971
        %973 = vmatmul.f32.gmra.mxu0 %v823
        %v974 = vpop.f32.mrf.mxu0
        %v975 = vadd.f32 %v880, %v974
        %976 = vmatmul.f32.gmra.mxu0 %v824
        %v977 = vpop.f32.mrf.mxu0
        %v978 = vadd.f32 %v880, %v977
        %979 = vmatmul.f32.gmra.mxu0 %v825
        %v980 = vpop.f32.mrf.mxu0
        %v981 = vadd.f32 %v880, %v980
        %982 = vmatmul.f32.gmra.mxu0 %v826
        %v983 = vpop.f32.mrf.mxu0
        %v984 = vadd.f32 %v880, %v983
        %985 = vmatmul.f32.gmra.mxu0 %v827
        %v986 = vpop.f32.mrf.mxu0
        %v987 = vadd.f32 %v880, %v986
        %988 = vmatmul.f32.gmra.mxu0 %v828
        %v989 = vpop.f32.mrf.mxu0
        %v990 = vadd.f32 %v880, %v989
        %991 = vmatmul.f32.gmra.mxu0 %v829
        %v992 = vpop.f32.mrf.mxu0
        %v993 = vadd.f32 %v880, %v992
        %994 = vmatmul.f32.gmra.mxu0 %v830
        %v995 = vpop.f32.mrf.mxu0
        %v996 = vadd.f32 %v880, %v995
        %997 = vmatmul.f32.gmra.mxu0 %v831
        %v998 = vpop.f32.mrf.mxu0
        %v999 = vadd.f32 %v880, %v998
        %1000 = vmatmul.f32.gmra.mxu0 %v832
        %v1001 = vpop.f32.mrf.mxu0
        %v1002 = vadd.f32 %v880, %v1001
        %1003 = vmatmul.f32.gmra.mxu0 %v833
        %v1004 = vpop.f32.mrf.mxu0
        %v1005 = vadd.f32 %v880, %v1004
        %1006 = vmatmul.f32.gmra.mxu0 %v834
        %v1007 = vpop.f32.mrf.mxu0
        %v1008 = vadd.f32 %v880, %v1007
        %1009 = vmatmul.f32.gmra.mxu0 %v835
        %v1010 = vpop.f32.mrf.mxu0
        %v1011 = vadd.f32 %v880, %v1010
        %1012 = vmatmul.f32.gmra.mxu0 %v836
        %v1013 = vpop.f32.mrf.mxu0
        %v1014 = vadd.f32 %v880, %v1013
        %1015 = vmatmul.f32.gmra.mxu0 %v837
        %v1016 = vpop.f32.mrf.mxu0
        %v1017 = vadd.f32 %v880, %v1016
        %1018 = vmatmul.f32.gmra.mxu0 %v838
        %v1019 = vpop.f32.mrf.mxu0
        %v1020 = vadd.f32 %v880, %v1019
        %1021 = vmatmul.f32.gmra.mxu0 %v839
        %v1022 = vpop.f32.mrf.mxu0
        %v1023 = vadd.f32 %v880, %v1022
        %1024 = vmatmul.f32.gmra.mxu0 %v840
        %v1025 = vpop.f32.mrf.mxu0
        %v1026 = vadd.f32 %v880, %v1025
        %1027 = vmatmul.f32.gmra.mxu0 %v841
        %v1028 = vpop.f32.mrf.mxu0
        %v1029 = vadd.f32 %v880, %v1028
        %1030 = vmatmul.f32.gmra.mxu0 %v842
        %v1031 = vpop.f32.mrf.mxu0
        %v1032 = vadd.f32 %v880, %v1031
        %1033 = vmatmul.f32.gmra.mxu0 %v843
        %v1034 = vpop.f32.mrf.mxu0
        %v1035 = vadd.f32 %v880, %v1034
        %1036 = vmatmul.f32.gmra.mxu0 %v844
        %v1037 = vpop.f32.mrf.mxu0
        %v1038 = vadd.f32 %v880, %v1037
        %1039 = vmatmul.f32.gmra.mxu0 %v845
        %v1040 = vpop.f32.mrf.mxu0
        %v1041 = vadd.f32 %v880, %v1040
        %1042 = vmatmul.f32.gmra.mxu0 %v846
        %v1043 = vpop.f32.mrf.mxu0
        %v1044 = vadd.f32 %v880, %v1043
        %1045 = vmatmul.f32.gmra.mxu0 %v847
        %v1046 = vpop.f32.mrf.mxu0
        %v1047 = vadd.f32 %v880, %v1046
        %1048 = vmatmul.f32.gmra.mxu0 %v848
        %v1049 = vpop.f32.mrf.mxu0
        %v1050 = vadd.f32 %v880, %v1049
        %1051 = vmatmul.f32.gmra.mxu0 %v849
        %v1052 = vpop.f32.mrf.mxu0
        %v1053 = vadd.f32 %v880, %v1052
        %1054 = vmatmul.f32.gmra.mxu0 %v850
        %v1055 = vpop.f32.mrf.mxu0
        %v1056 = vadd.f32 %v880, %v1055
        %1057 = vmatmul.f32.gmra.mxu0 %v851
        %v1058 = vpop.f32.mrf.mxu0
        %v1059 = vadd.f32 %v880, %v1058
        %1060 = vmatmul.f32.gmra.mxu0 %v852
        %v1061 = vpop.f32.mrf.mxu0
        %v1062 = vadd.f32 %v880, %v1061
        %1063 = vmatmul.f32.gmra.mxu0 %v853
        %v1064 = vpop.f32.mrf.mxu0
        %v1065 = vadd.f32 %v880, %v1064
        %1066 = vmatmul.f32.gmra.mxu0 %v854
        %v1067 = vpop.f32.mrf.mxu0
        %v1068 = vadd.f32 %v880, %v1067
        %1069 = vmatmul.f32.gmra.mxu0 %v855
        %v1070 = vpop.f32.mrf.mxu0
        %v1071 = vadd.f32 %v880, %v1070
        %1072 = vmatmul.f32.gmra.mxu0 %v856
        %v1073 = vpop.f32.mrf.mxu0
        %v1074 = vadd.f32 %v880, %v1073
        %1075 = vmatmul.f32.gmra.mxu0 %v857
        %v1076 = vpop.f32.mrf.mxu0
        %v1077 = vadd.f32 %v880, %v1076
        %1078 = vmatmul.f32.gmra.mxu0 %v858
        %v1079 = vpop.f32.mrf.mxu0
        %v1080 = vadd.f32 %v880, %v1079
        %1081 = vmatmul.f32.gmra.mxu0 %v859
        %v1082 = vpop.f32.mrf.mxu0
        %v1083 = vadd.f32 %v880, %v1082
        %1084 = vmatmul.f32.gmra.mxu0 %v860
        %v1085 = vpop.f32.mrf.mxu0
        %v1086 = vadd.f32 %v880, %v1085
        %1087 = vmatmul.f32.gmra.mxu0 %v861
        %v1088 = vpop.f32.mrf.mxu0
        %v1089 = vadd.f32 %v880, %v1088
        %1090 = vdwg.mxu0
        %v1091 = vmax.f32 %v900, 0.0
        %v1092 = vmax.f32 %v903, 0.0
        %v1093 = vmax.f32 %v906, 0.0
        %v1094 = vmax.f32 %v909, 0.0
        %v1095 = vmax.f32 %v912, 0.0
        %v1096 = vmax.f32 %v915, 0.0
        %v1097 = vmax.f32 %v918, 0.0
        %v1098 = vmax.f32 %v921, 0.0
        %v1099 = vmax.f32 %v924, 0.0
        %v1100 = vmax.f32 %v927, 0.0
        %v1101 = vmax.f32 %v930, 0.0
        %v1102 = vmax.f32 %v933, 0.0
        %v1103 = vmax.f32 %v936, 0.0
        %v1104 = vmax.f32 %v939, 0.0
        %v1105 = vmax.f32 %v942, 0.0
        %v1106 = vmax.f32 %v945, 0.0
        %v1107 = vmax.f32 %v948, 0.0
        %v1108 = vmax.f32 %v951, 0.0
        %v1109 = vmax.f32 %v954, 0.0
        %v1110 = vmax.f32 %v957, 0.0
        %v1111 = vmax.f32 %v960, 0.0
        %v1112 = vmax.f32 %v963, 0.0
        %v1113 = vmax.f32 %v966, 0.0
        %v1114 = vmax.f32 %v969, 0.0
        %v1115 = vmax.f32 %v972, 0.0
        %v1116 = vmax.f32 %v975, 0.0
        %v1117 = vmax.f32 %v978, 0.0
        %v1118 = vmax.f32 %v981, 0.0
        %v1119 = vmax.f32 %v984, 0.0
        %v1120 = vmax.f32 %v987, 0.0
        %v1121 = vmax.f32 %v990, 0.0
        %v1122 = vmax.f32 %v993, 0.0
        %v1123 = vmax.f32 %v996, 0.0
        %v1124 = vmax.f32 %v999, 0.0
        %v1125 = vmax.f32 %v1002, 0.0
        %v1126 = vmax.f32 %v1005, 0.0
        %v1127 = vmax.f32 %v1008, 0.0
        %v1128 = vmax.f32 %v1011, 0.0
        %v1129 = vmax.f32 %v1014, 0.0
        %v1130 = vmax.f32 %v1017, 0.0
        %v1131 = vmax.f32 %v1020, 0.0
        %v1132 = vmax.f32 %v1023, 0.0
        %v1133 = vmax.f32 %v1026, 0.0
        %v1134 = vmax.f32 %v1029, 0.0
        %v1135 = vmax.f32 %v1032, 0.0
        %v1136 = vmax.f32 %v1035, 0.0
        %v1137 = vmax.f32 %v1038, 0.0
        %v1138 = vmax.f32 %v1041, 0.0
        %v1139 = vmax.f32 %v1044, 0.0
        %v1140 = vmax.f32 %v1047, 0.0
        %v1141 = vmax.f32 %v1050, 0.0
        %v1142 = vmax.f32 %v1053, 0.0
        %v1143 = vmax.f32 %v1056, 0.0
        %v1144 = vmax.f32 %v1059, 0.0
        %v1145 = vmax.f32 %v1062, 0.0
        %v1146 = vmax.f32 %v1065, 0.0
        %v1147 = vmax.f32 %v1068, 0.0
        %v1148 = vmax.f32 %v1071, 0.0
        %v1149 = vmax.f32 %v1074, 0.0
        %v1150 = vmax.f32 %v1077, 0.0
        %v1151 = vmax.f32 %v1080, 0.0
        %v1152 = vmax.f32 %v1083, 0.0
        %v1153 = vmax.f32 %v1086, 0.0
        %v1154 = vmax.f32 %v1089, 0.0
        %v1155 = vld [vmem:[%s3] sm:$0xff]
        %v1156 = vld [vmem:[%s3 + $0x8] sm:$0xff]
        %v1157 = vld [vmem:[%s3 + $0x10] sm:$0xff]
        %v1158 = vld [vmem:[%s3 + $0x18] sm:$0xff]
        %v1159 = vld [vmem:[%s3 + $0x20] sm:$0xff]
        %v1160 = vld [vmem:[%s3 + $0x28] sm:$0xff]
        %v1161 = vld [vmem:[%s3 + $0x30] sm:$0xff]
        %v1162 = vld [vmem:[%s3 + $0x38] sm:$0xff]
        %v1163 = vld [vmem:[%s4] sm:$0x1]
        %v1165 = vperm.slane %v1163, 0
        %vm1167 = vcmask 523264
        %v1169 = vsel %vm1167, %v1091, 0
        %v1172 = vsel %vm1167, %v1092, 0
        %v1175 = vsel %vm1167, %v1093, 0
        %v1178 = vsel %vm1167, %v1094, 0
        %v1181 = vsel %vm1167, %v1095, 0
        %v1184 = vsel %vm1167, %v1096, 0
        %v1187 = vsel %vm1167, %v1097, 0
        %v1190 = vsel %vm1167, %v1098, 0
        %v1193 = vsel %vm1167, %v1099, 0
        %v1196 = vsel %vm1167, %v1100, 0
        %v1199 = vsel %vm1167, %v1101, 0
        %v1202 = vsel %vm1167, %v1102, 0
        %v1205 = vsel %vm1167, %v1103, 0
        %v1208 = vsel %vm1167, %v1104, 0
        %v1211 = vsel %vm1167, %v1105, 0
        %v1214 = vsel %vm1167, %v1106, 0
        %v1217 = vsel %vm1167, %v1107, 0
        %v1220 = vsel %vm1167, %v1108, 0
        %v1223 = vsel %vm1167, %v1109, 0
        %v1226 = vsel %vm1167, %v1110, 0
        %v1229 = vsel %vm1167, %v1111, 0
        %v1232 = vsel %vm1167, %v1112, 0
        %v1235 = vsel %vm1167, %v1113, 0
        %v1238 = vsel %vm1167, %v1114, 0
        %v1241 = vsel %vm1167, %v1115, 0
        %v1244 = vsel %vm1167, %v1116, 0
        %v1247 = vsel %vm1167, %v1117, 0
        %v1250 = vsel %vm1167, %v1118, 0
        %v1253 = vsel %vm1167, %v1119, 0
        %v1256 = vsel %vm1167, %v1120, 0
        %v1259 = vsel %vm1167, %v1121, 0
        %v1262 = vsel %vm1167, %v1122, 0
        %v1265 = vsel %vm1167, %v1123, 0
        %v1268 = vsel %vm1167, %v1124, 0
        %v1271 = vsel %vm1167, %v1125, 0
        %v1274 = vsel %vm1167, %v1126, 0
        %v1277 = vsel %vm1167, %v1127, 0
        %v1280 = vsel %vm1167, %v1128, 0
        %v1283 = vsel %vm1167, %v1129, 0
        %v1286 = vsel %vm1167, %v1130, 0
        %v1289 = vsel %vm1167, %v1131, 0
        %v1292 = vsel %vm1167, %v1132, 0
        %v1295 = vsel %vm1167, %v1133, 0
        %v1298 = vsel %vm1167, %v1134, 0
        %v1301 = vsel %vm1167, %v1135, 0
        %v1304 = vsel %vm1167, %v1136, 0
        %v1307 = vsel %vm1167, %v1137, 0
        %v1310 = vsel %vm1167, %v1138, 0
        %v1313 = vsel %vm1167, %v1139, 0
        %v1316 = vsel %vm1167, %v1140, 0
        %v1319 = vsel %vm1167, %v1141, 0
        %v1322 = vsel %vm1167, %v1142, 0
        %v1325 = vsel %vm1167, %v1143, 0
        %v1328 = vsel %vm1167, %v1144, 0
        %v1331 = vsel %vm1167, %v1145, 0
        %v1334 = vsel %vm1167, %v1146, 0
        %v1337 = vsel %vm1167, %v1147, 0
        %v1340 = vsel %vm1167, %v1148, 0
        %v1343 = vsel %vm1167, %v1149, 0
        %v1346 = vsel %vm1167, %v1150, 0
        %v1349 = vsel %vm1167, %v1151, 0
        %v1352 = vsel %vm1167, %v1152, 0
        %v1355 = vsel %vm1167, %v1153, 0
        %v1358 = vsel %vm1167, %v1154, 0
        %1360 = vmatpush.msra.mxu0 0.0
        %1361 = vmatpush.msra.mxu0 0.0
        %1362 = vmatpush.msra.mxu0 0.0
        %1363 = vmatpush.msra.mxu0 0.0
        %1364 = vmatpush.msra.mxu0 0.0
        %1365 = vmatpush.msra.mxu0 0.0
        %1366 = vmatpush.msra.mxu0 0.0
        %1367 = vmatpush.msra.mxu0 0.0
        %1368 = vmatpush.msra.mxu0 %v1162
        %1369 = vmatpush.msra.mxu0 %v1161
        %1370 = vmatpush.msra.mxu0 %v1160
        %1371 = vmatpush.msra.mxu0 %v1159
        %1372 = vmatpush.msra.mxu0 %v1158
        %1373 = vmatpush.msra.mxu0 %v1157
        %1374 = vmatpush.msra.mxu0 %v1156
        %1375 = vmatpush.msra.mxu0 %v1155
        %1376 = vmatmul.f32.gmra.mxu0 %v1169
        %v1377 = vpop.f32.mrf.mxu0
        %v1378 = vadd.f32 %v1165, %v1377
        %1379 = vmatmul.f32.gmra.mxu0 %v1172
        %v1380 = vpop.f32.mrf.mxu0
        %v1381 = vadd.f32 %v1165, %v1380
        %1382 = vmatmul.f32.gmra.mxu0 %v1175
        %v1383 = vpop.f32.mrf.mxu0
        %v1384 = vadd.f32 %v1165, %v1383
        %1385 = vmatmul.f32.gmra.mxu0 %v1178
        %v1386 = vpop.f32.mrf.mxu0
        %v1387 = vadd.f32 %v1165, %v1386
        %1388 = vmatmul.f32.gmra.mxu0 %v1181
        %v1389 = vpop.f32.mrf.mxu0
        %v1390 = vadd.f32 %v1165, %v1389
        %1391 = vmatmul.f32.gmra.mxu0 %v1184
        %v1392 = vpop.f32.mrf.mxu0
        %v1393 = vadd.f32 %v1165, %v1392
        %1394 = vmatmul.f32.gmra.mxu0 %v1187
        %v1395 = vpop.f32.mrf.mxu0
        %v1396 = vadd.f32 %v1165, %v1395
        %1397 = vmatmul.f32.gmra.mxu0 %v1190
        %v1398 = vpop.f32.mrf.mxu0
        %v1399 = vadd.f32 %v1165, %v1398
        %1400 = vmatmul.f32.gmra.mxu0 %v1193
        %v1401 = vpop.f32.mrf.mxu0
        %v1402 = vadd.f32 %v1165, %v1401
        %1403 = vmatmul.f32.gmra.mxu0 %v1196
        %v1404 = vpop.f32.mrf.mxu0
        %v1405 = vadd.f32 %v1165, %v1404
        %1406 = vmatmul.f32.gmra.mxu0 %v1199
        %v1407 = vpop.f32.mrf.mxu0
        %v1408 = vadd.f32 %v1165, %v1407
        %1409 = vmatmul.f32.gmra.mxu0 %v1202
        %v1410 = vpop.f32.mrf.mxu0
        %v1411 = vadd.f32 %v1165, %v1410
        %1412 = vmatmul.f32.gmra.mxu0 %v1205
        %v1413 = vpop.f32.mrf.mxu0
        %v1414 = vadd.f32 %v1165, %v1413
        %1415 = vmatmul.f32.gmra.mxu0 %v1208
        %v1416 = vpop.f32.mrf.mxu0
        %v1417 = vadd.f32 %v1165, %v1416
        %1418 = vmatmul.f32.gmra.mxu0 %v1211
        %v1419 = vpop.f32.mrf.mxu0
        %v1420 = vadd.f32 %v1165, %v1419
        %1421 = vmatmul.f32.gmra.mxu0 %v1214
        %v1422 = vpop.f32.mrf.mxu0
        %v1423 = vadd.f32 %v1165, %v1422
        %1424 = vmatmul.f32.gmra.mxu0 %v1217
        %v1425 = vpop.f32.mrf.mxu0
        %v1426 = vadd.f32 %v1165, %v1425
        %1427 = vmatmul.f32.gmra.mxu0 %v1220
        %v1428 = vpop.f32.mrf.mxu0
        %v1429 = vadd.f32 %v1165, %v1428
        %1430 = vmatmul.f32.gmra.mxu0 %v1223
        %v1431 = vpop.f32.mrf.mxu0
        %v1432 = vadd.f32 %v1165, %v1431
        %1433 = vmatmul.f32.gmra.mxu0 %v1226
        %v1434 = vpop.f32.mrf.mxu0
        %v1435 = vadd.f32 %v1165, %v1434
        %1436 = vmatmul.f32.gmra.mxu0 %v1229
        %v1437 = vpop.f32.mrf.mxu0
        %v1438 = vadd.f32 %v1165, %v1437
        %1439 = vmatmul.f32.gmra.mxu0 %v1232
        %v1440 = vpop.f32.mrf.mxu0
        %v1441 = vadd.f32 %v1165, %v1440
        %1442 = vmatmul.f32.gmra.mxu0 %v1235
        %v1443 = vpop.f32.mrf.mxu0
        %v1444 = vadd.f32 %v1165, %v1443
        %1445 = vmatmul.f32.gmra.mxu0 %v1238
        %v1446 = vpop.f32.mrf.mxu0
        %v1447 = vadd.f32 %v1165, %v1446
        %1448 = vmatmul.f32.gmra.mxu0 %v1241
        %v1449 = vpop.f32.mrf.mxu0
        %v1450 = vadd.f32 %v1165, %v1449
        %1451 = vmatmul.f32.gmra.mxu0 %v1244
        %v1452 = vpop.f32.mrf.mxu0
        %v1453 = vadd.f32 %v1165, %v1452
        %1454 = vmatmul.f32.gmra.mxu0 %v1247
        %v1455 = vpop.f32.mrf.mxu0
        %v1456 = vadd.f32 %v1165, %v1455
        %1457 = vmatmul.f32.gmra.mxu0 %v1250
        %v1458 = vpop.f32.mrf.mxu0
        %v1459 = vadd.f32 %v1165, %v1458
        %1460 = vmatmul.f32.gmra.mxu0 %v1253
        %v1461 = vpop.f32.mrf.mxu0
        %v1462 = vadd.f32 %v1165, %v1461
        %1463 = vmatmul.f32.gmra.mxu0 %v1256
        %v1464 = vpop.f32.mrf.mxu0
        %v1465 = vadd.f32 %v1165, %v1464
        %1466 = vmatmul.f32.gmra.mxu0 %v1259
        %v1467 = vpop.f32.mrf.mxu0
        %v1468 = vadd.f32 %v1165, %v1467
        %1469 = vmatmul.f32.gmra.mxu0 %v1262
        %v1470 = vpop.f32.mrf.mxu0
        %v1471 = vadd.f32 %v1165, %v1470
        %1472 = vmatmul.f32.gmra.mxu0 %v1265
        %v1473 = vpop.f32.mrf.mxu0
        %v1474 = vadd.f32 %v1165, %v1473
        %1475 = vmatmul.f32.gmra.mxu0 %v1268
        %v1476 = vpop.f32.mrf.mxu0
        %v1477 = vadd.f32 %v1165, %v1476
        %1478 = vmatmul.f32.gmra.mxu0 %v1271
        %v1479 = vpop.f32.mrf.mxu0
        %v1480 = vadd.f32 %v1165, %v1479
        %1481 = vmatmul.f32.gmra.mxu0 %v1274
        %v1482 = vpop.f32.mrf.mxu0
        %v1483 = vadd.f32 %v1165, %v1482
        %1484 = vmatmul.f32.gmra.mxu0 %v1277
        %v1485 = vpop.f32.mrf.mxu0
        %v1486 = vadd.f32 %v1165, %v1485
        %1487 = vmatmul.f32.gmra.mxu0 %v1280
        %v1488 = vpop.f32.mrf.mxu0
        %v1489 = vadd.f32 %v1165, %v1488
        %1490 = vmatmul.f32.gmra.mxu0 %v1283
        %v1491 = vpop.f32.mrf.mxu0
        %v1492 = vadd.f32 %v1165, %v1491
        %1493 = vmatmul.f32.gmra.mxu0 %v1286
        %v1494 = vpop.f32.mrf.mxu0
        %v1495 = vadd.f32 %v1165, %v1494
        %1496 = vmatmul.f32.gmra.mxu0 %v1289
        %v1497 = vpop.f32.mrf.mxu0
        %v1498 = vadd.f32 %v1165, %v1497
        %1499 = vmatmul.f32.gmra.mxu0 %v1292
        %v1500 = vpop.f32.mrf.mxu0
        %v1501 = vadd.f32 %v1165, %v1500
        %1502 = vmatmul.f32.gmra.mxu0 %v1295
        %v1503 = vpop.f32.mrf.mxu0
        %v1504 = vadd.f32 %v1165, %v1503
        %1505 = vmatmul.f32.gmra.mxu0 %v1298
        %v1506 = vpop.f32.mrf.mxu0
        %v1507 = vadd.f32 %v1165, %v1506
        %1508 = vmatmul.f32.gmra.mxu0 %v1301
        %v1509 = vpop.f32.mrf.mxu0
        %v1510 = vadd.f32 %v1165, %v1509
        %1511 = vmatmul.f32.gmra.mxu0 %v1304
        %v1512 = vpop.f32.mrf.mxu0
        %v1513 = vadd.f32 %v1165, %v1512
        %1514 = vmatmul.f32.gmra.mxu0 %v1307
        %v1515 = vpop.f32.mrf.mxu0
        %v1516 = vadd.f32 %v1165, %v1515
        %1517 = vmatmul.f32.gmra.mxu0 %v1310
        %v1518 = vpop.f32.mrf.mxu0
        %v1519 = vadd.f32 %v1165, %v1518
        %1520 = vmatmul.f32.gmra.mxu0 %v1313
        %v1521 = vpop.f32.mrf.mxu0
        %v1522 = vadd.f32 %v1165, %v1521
        %1523 = vmatmul.f32.gmra.mxu0 %v1316
        %v1524 = vpop.f32.mrf.mxu0
        %v1525 = vadd.f32 %v1165, %v1524
        %1526 = vmatmul.f32.gmra.mxu0 %v1319
        %v1527 = vpop.f32.mrf.mxu0
        %v1528 = vadd.f32 %v1165, %v1527
        %1529 = vmatmul.f32.gmra.mxu0 %v1322
        %v1530 = vpop.f32.mrf.mxu0
        %v1531 = vadd.f32 %v1165, %v1530
        %1532 = vmatmul.f32.gmra.mxu0 %v1325
        %v1533 = vpop.f32.mrf.mxu0
        %v1534 = vadd.f32 %v1165, %v1533
        %1535 = vmatmul.f32.gmra.mxu0 %v1328
        %v1536 = vpop.f32.mrf.mxu0
        %v1537 = vadd.f32 %v1165, %v1536
        %1538 = vmatmul.f32.gmra.mxu0 %v1331
        %v1539 = vpop.f32.mrf.mxu0
        %v1540 = vadd.f32 %v1165, %v1539
        %1541 = vmatmul.f32.gmra.mxu0 %v1334
        %v1542 = vpop.f32.mrf.mxu0
        %v1543 = vadd.f32 %v1165, %v1542
        %1544 = vmatmul.f32.gmra.mxu0 %v1337
        %v1545 = vpop.f32.mrf.mxu0
        %v1546 = vadd.f32 %v1165, %v1545
        %1547 = vmatmul.f32.gmra.mxu0 %v1340
        %v1548 = vpop.f32.mrf.mxu0
        %v1549 = vadd.f32 %v1165, %v1548
        %1550 = vmatmul.f32.gmra.mxu0 %v1343
        %v1551 = vpop.f32.mrf.mxu0
        %v1552 = vadd.f32 %v1165, %v1551
        %1553 = vmatmul.f32.gmra.mxu0 %v1346
        %v1554 = vpop.f32.mrf.mxu0
        %v1555 = vadd.f32 %v1165, %v1554
        %1556 = vmatmul.f32.gmra.mxu0 %v1349
        %v1557 = vpop.f32.mrf.mxu0
        %v1558 = vadd.f32 %v1165, %v1557
        %1559 = vmatmul.f32.gmra.mxu0 %v1352
        %v1560 = vpop.f32.mrf.mxu0
        %v1561 = vadd.f32 %v1165, %v1560
        %1562 = vmatmul.f32.gmra.mxu0 %v1355
        %v1563 = vpop.f32.mrf.mxu0
        %v1564 = vadd.f32 %v1165, %v1563
        %1565 = vmatmul.f32.gmra.mxu0 %v1358
        %v1566 = vpop.f32.mrf.mxu0
        %v1567 = vadd.f32 %v1165, %v1566
        %1568 = vdwg.mxu0
        %v1569 = vmax.f32 %v1378, 0.0
        %v1570 = vmax.f32 %v1381, 0.0
        %v1571 = vmax.f32 %v1384, 0.0
        %v1572 = vmax.f32 %v1387, 0.0
        %v1573 = vmax.f32 %v1390, 0.0
        %v1574 = vmax.f32 %v1393, 0.0
        %v1575 = vmax.f32 %v1396, 0.0
        %v1576 = vmax.f32 %v1399, 0.0
        %v1577 = vmax.f32 %v1402, 0.0
        %v1578 = vmax.f32 %v1405, 0.0
        %v1579 = vmax.f32 %v1408, 0.0
        %v1580 = vmax.f32 %v1411, 0.0
        %v1581 = vmax.f32 %v1414, 0.0
        %v1582 = vmax.f32 %v1417, 0.0
        %v1583 = vmax.f32 %v1420, 0.0
        %v1584 = vmax.f32 %v1423, 0.0
        %v1585 = vmax.f32 %v1426, 0.0
        %v1586 = vmax.f32 %v1429, 0.0
        %v1587 = vmax.f32 %v1432, 0.0
        %v1588 = vmax.f32 %v1435, 0.0
        %v1589 = vmax.f32 %v1438, 0.0
        %v1590 = vmax.f32 %v1441, 0.0
        %v1591 = vmax.f32 %v1444, 0.0
        %v1592 = vmax.f32 %v1447, 0.0
        %v1593 = vmax.f32 %v1450, 0.0
        %v1594 = vmax.f32 %v1453, 0.0
        %v1595 = vmax.f32 %v1456, 0.0
        %v1596 = vmax.f32 %v1459, 0.0
        %v1597 = vmax.f32 %v1462, 0.0
        %v1598 = vmax.f32 %v1465, 0.0
        %v1599 = vmax.f32 %v1468, 0.0
        %v1600 = vmax.f32 %v1471, 0.0
        %v1601 = vmax.f32 %v1474, 0.0
        %v1602 = vmax.f32 %v1477, 0.0
        %v1603 = vmax.f32 %v1480, 0.0
        %v1604 = vmax.f32 %v1483, 0.0
        %v1605 = vmax.f32 %v1486, 0.0
        %v1606 = vmax.f32 %v1489, 0.0
        %v1607 = vmax.f32 %v1492, 0.0
        %v1608 = vmax.f32 %v1495, 0.0
        %v1609 = vmax.f32 %v1498, 0.0
        %v1610 = vmax.f32 %v1501, 0.0
        %v1611 = vmax.f32 %v1504, 0.0
        %v1612 = vmax.f32 %v1507, 0.0
        %v1613 = vmax.f32 %v1510, 0.0
        %v1614 = vmax.f32 %v1513, 0.0
        %v1615 = vmax.f32 %v1516, 0.0
        %v1616 = vmax.f32 %v1519, 0.0
        %v1617 = vmax.f32 %v1522, 0.0
        %v1618 = vmax.f32 %v1525, 0.0
        %v1619 = vmax.f32 %v1528, 0.0
        %v1620 = vmax.f32 %v1531, 0.0
        %v1621 = vmax.f32 %v1534, 0.0
        %v1622 = vmax.f32 %v1537, 0.0
        %v1623 = vmax.f32 %v1540, 0.0
        %v1624 = vmax.f32 %v1543, 0.0
        %v1625 = vmax.f32 %v1546, 0.0
        %v1626 = vmax.f32 %v1549, 0.0
        %v1627 = vmax.f32 %v1552, 0.0
        %v1628 = vmax.f32 %v1555, 0.0
        %v1629 = vmax.f32 %v1558, 0.0
        %v1630 = vmax.f32 %v1561, 0.0
        %v1631 = vmax.f32 %v1564, 0.0
        %v1632 = vmax.f32 %v1567, 0.0
        %v1633 = vld [vmem:[%s5] sm:$0xff]
        %v1634 = vld [vmem:[%s5 + $0x8] sm:$0xff]
        %v1635 = vld [vmem:[%s5 + $0x10] sm:$0xff]
        %v1636 = vld [vmem:[%s5 + $0x18] sm:$0xff]
        %v1637 = vld [vmem:[#allocation2] sm:$0x1]
        %v1639 = vperm.slane %v1637, 0
        %vm1641 = vcmask 261120
        %v1643 = vsel %vm1641, %v1569, 0
        %v1646 = vsel %vm1641, %v1570, 0
        %v1649 = vsel %vm1641, %v1571, 0
        %v1652 = vsel %vm1641, %v1572, 0
        %v1655 = vsel %vm1641, %v1573, 0
        %v1658 = vsel %vm1641, %v1574, 0
        %v1661 = vsel %vm1641, %v1575, 0
        %v1664 = vsel %vm1641, %v1576, 0
        %v1667 = vsel %vm1641, %v1577, 0
        %v1670 = vsel %vm1641, %v1578, 0
        %v1673 = vsel %vm1641, %v1579, 0
        %v1676 = vsel %vm1641, %v1580, 0
        %v1679 = vsel %vm1641, %v1581, 0
        %v1682 = vsel %vm1641, %v1582, 0
        %v1685 = vsel %vm1641, %v1583, 0
        %v1688 = vsel %vm1641, %v1584, 0
        %v1691 = vsel %vm1641, %v1585, 0
        %v1694 = vsel %vm1641, %v1586, 0
        %v1697 = vsel %vm1641, %v1587, 0
        %v1700 = vsel %vm1641, %v1588, 0
        %v1703 = vsel %vm1641, %v1589, 0
        %v1706 = vsel %vm1641, %v1590, 0
        %v1709 = vsel %vm1641, %v1591, 0
        %v1712 = vsel %vm1641, %v1592, 0
        %v1715 = vsel %vm1641, %v1593, 0
        %v1718 = vsel %vm1641, %v1594, 0
        %v1721 = vsel %vm1641, %v1595, 0
        %v1724 = vsel %vm1641, %v1596, 0
        %v1727 = vsel %vm1641, %v1597, 0
        %v1730 = vsel %vm1641, %v1598, 0
        %v1733 = vsel %vm1641, %v1599, 0
        %v1736 = vsel %vm1641, %v1600, 0
        %v1739 = vsel %vm1641, %v1601, 0
        %v1742 = vsel %vm1641, %v1602, 0
        %v1745 = vsel %vm1641, %v1603, 0
        %v1748 = vsel %vm1641, %v1604, 0
        %v1751 = vsel %vm1641, %v1605, 0
        %v1754 = vsel %vm1641, %v1606, 0
        %v1757 = vsel %vm1641, %v1607, 0
        %v1760 = vsel %vm1641, %v1608, 0
        %v1763 = vsel %vm1641, %v1609, 0
        %v1766 = vsel %vm1641, %v1610, 0
        %v1769 = vsel %vm1641, %v1611, 0
        %v1772 = vsel %vm1641, %v1612, 0
        %v1775 = vsel %vm1641, %v1613, 0
        %v1778 = vsel %vm1641, %v1614, 0
        %v1781 = vsel %vm1641, %v1615, 0
        %v1784 = vsel %vm1641, %v1616, 0
        %v1787 = vsel %vm1641, %v1617, 0
        %v1790 = vsel %vm1641, %v1618, 0
        %v1793 = vsel %vm1641, %v1619, 0
        %v1796 = vsel %vm1641, %v1620, 0
        %v1799 = vsel %vm1641, %v1621, 0
        %v1802 = vsel %vm1641, %v1622, 0
        %v1805 = vsel %vm1641, %v1623, 0
        %v1808 = vsel %vm1641, %v1624, 0
        %v1811 = vsel %vm1641, %v1625, 0
        %v1814 = vsel %vm1641, %v1626, 0
        %v1817 = vsel %vm1641, %v1627, 0
        %v1820 = vsel %vm1641, %v1628, 0
        %v1823 = vsel %vm1641, %v1629, 0
        %v1826 = vsel %vm1641, %v1630, 0
        %v1829 = vsel %vm1641, %v1631, 0
        %v1832 = vsel %vm1641, %v1632, 0
        %1834 = vmatpush.msra.mxu0 0.0
        %1835 = vmatpush.msra.mxu0 0.0
        %1836 = vmatpush.msra.mxu0 0.0
        %1837 = vmatpush.msra.mxu0 0.0
        %1838 = vmatpush.msra.mxu0 0.0
        %1839 = vmatpush.msra.mxu0 0.0
        %1840 = vmatpush.msra.mxu0 0.0
        %1841 = vmatpush.msra.mxu0 0.0
        %1842 = vmatpush.msra.mxu0 0.0
        %1843 = vmatpush.msra.mxu0 0.0
        %1844 = vmatpush.msra.mxu0 0.0
        %1845 = vmatpush.msra.mxu0 0.0
        %1846 = vmatpush.msra.mxu0 %v1636
        %1847 = vmatpush.msra.mxu0 %v1635
        %1848 = vmatpush.msra.mxu0 %v1634
        %1849 = vmatpush.msra.mxu0 %v1633
        %1850 = vmatmul.f32.gmra.mxu0 %v1643
        %v1851 = vpop.f32.mrf.mxu0
        %v1852 = vadd.f32 %v1639, %v1851
        %1853 = vmatmul.f32.gmra.mxu0 %v1646
        %v1854 = vpop.f32.mrf.mxu0
        %v1855 = vadd.f32 %v1639, %v1854
        %1856 = vmatmul.f32.gmra.mxu0 %v1649
        %v1857 = vpop.f32.mrf.mxu0
        %v1858 = vadd.f32 %v1639, %v1857
        %1859 = vmatmul.f32.gmra.mxu0 %v1652
        %v1860 = vpop.f32.mrf.mxu0
        %v1861 = vadd.f32 %v1639, %v1860
        %1862 = vmatmul.f32.gmra.mxu0 %v1655
        %v1863 = vpop.f32.mrf.mxu0
        %v1864 = vadd.f32 %v1639, %v1863
        %1865 = vmatmul.f32.gmra.mxu0 %v1658
        %v1866 = vpop.f32.mrf.mxu0
        %v1867 = vadd.f32 %v1639, %v1866
        %1868 = vmatmul.f32.gmra.mxu0 %v1661
        %v1869 = vpop.f32.mrf.mxu0
        %v1870 = vadd.f32 %v1639, %v1869
        %1871 = vmatmul.f32.gmra.mxu0 %v1664
        %v1872 = vpop.f32.mrf.mxu0
        %v1873 = vadd.f32 %v1639, %v1872
        %1874 = vmatmul.f32.gmra.mxu0 %v1667
        %v1875 = vpop.f32.mrf.mxu0
        %v1876 = vadd.f32 %v1639, %v1875
        %1877 = vmatmul.f32.gmra.mxu0 %v1670
        %v1878 = vpop.f32.mrf.mxu0
        %v1879 = vadd.f32 %v1639, %v1878
        %1880 = vmatmul.f32.gmra.mxu0 %v1673
        %v1881 = vpop.f32.mrf.mxu0
        %v1882 = vadd.f32 %v1639, %v1881
        %1883 = vmatmul.f32.gmra.mxu0 %v1676
        %v1884 = vpop.f32.mrf.mxu0
        %v1885 = vadd.f32 %v1639, %v1884
        %1886 = vmatmul.f32.gmra.mxu0 %v1679
        %v1887 = vpop.f32.mrf.mxu0
        %v1888 = vadd.f32 %v1639, %v1887
        %1889 = vmatmul.f32.gmra.mxu0 %v1682
        %v1890 = vpop.f32.mrf.mxu0
        %v1891 = vadd.f32 %v1639, %v1890
        %1892 = vmatmul.f32.gmra.mxu0 %v1685
        %v1893 = vpop.f32.mrf.mxu0
        %v1894 = vadd.f32 %v1639, %v1893
        %1895 = vmatmul.f32.gmra.mxu0 %v1688
        %v1896 = vpop.f32.mrf.mxu0
        %v1897 = vadd.f32 %v1639, %v1896
        %1898 = vmatmul.f32.gmra.mxu0 %v1691
        %v1899 = vpop.f32.mrf.mxu0
        %v1900 = vadd.f32 %v1639, %v1899
        %1901 = vmatmul.f32.gmra.mxu0 %v1694
        %v1902 = vpop.f32.mrf.mxu0
        %v1903 = vadd.f32 %v1639, %v1902
        %1904 = vmatmul.f32.gmra.mxu0 %v1697
        %v1905 = vpop.f32.mrf.mxu0
        %v1906 = vadd.f32 %v1639, %v1905
        %1907 = vmatmul.f32.gmra.mxu0 %v1700
        %v1908 = vpop.f32.mrf.mxu0
        %v1909 = vadd.f32 %v1639, %v1908
        %1910 = vmatmul.f32.gmra.mxu0 %v1703
        %v1911 = vpop.f32.mrf.mxu0
        %v1912 = vadd.f32 %v1639, %v1911
        %1913 = vmatmul.f32.gmra.mxu0 %v1706
        %v1914 = vpop.f32.mrf.mxu0
        %v1915 = vadd.f32 %v1639, %v1914
        %1916 = vmatmul.f32.gmra.mxu0 %v1709
        %v1917 = vpop.f32.mrf.mxu0
        %v1918 = vadd.f32 %v1639, %v1917
        %1919 = vmatmul.f32.gmra.mxu0 %v1712
        %v1920 = vpop.f32.mrf.mxu0
        %v1921 = vadd.f32 %v1639, %v1920
        %1922 = vmatmul.f32.gmra.mxu0 %v1715
        %v1923 = vpop.f32.mrf.mxu0
        %v1924 = vadd.f32 %v1639, %v1923
        %1925 = vmatmul.f32.gmra.mxu0 %v1718
        %v1926 = vpop.f32.mrf.mxu0
        %v1927 = vadd.f32 %v1639, %v1926
        %1928 = vmatmul.f32.gmra.mxu0 %v1721
        %v1929 = vpop.f32.mrf.mxu0
        %v1930 = vadd.f32 %v1639, %v1929
        %1931 = vmatmul.f32.gmra.mxu0 %v1724
        %v1932 = vpop.f32.mrf.mxu0
        %v1933 = vadd.f32 %v1639, %v1932
        %1934 = vmatmul.f32.gmra.mxu0 %v1727
        %v1935 = vpop.f32.mrf.mxu0
        %v1936 = vadd.f32 %v1639, %v1935
        %1937 = vmatmul.f32.gmra.mxu0 %v1730
        %v1938 = vpop.f32.mrf.mxu0
        %v1939 = vadd.f32 %v1639, %v1938
        %1940 = vmatmul.f32.gmra.mxu0 %v1733
        %v1941 = vpop.f32.mrf.mxu0
        %v1942 = vadd.f32 %v1639, %v1941
        %1943 = vmatmul.f32.gmra.mxu0 %v1736
        %v1944 = vpop.f32.mrf.mxu0
        %v1945 = vadd.f32 %v1639, %v1944
        %1946 = vmatmul.f32.gmra.mxu0 %v1739
        %v1947 = vpop.f32.mrf.mxu0
        %v1948 = vadd.f32 %v1639, %v1947
        %1949 = vmatmul.f32.gmra.mxu0 %v1742
        %v1950 = vpop.f32.mrf.mxu0
        %v1951 = vadd.f32 %v1639, %v1950
        %1952 = vmatmul.f32.gmra.mxu0 %v1745
        %v1953 = vpop.f32.mrf.mxu0
        %v1954 = vadd.f32 %v1639, %v1953
        %1955 = vmatmul.f32.gmra.mxu0 %v1748
        %v1956 = vpop.f32.mrf.mxu0
        %v1957 = vadd.f32 %v1639, %v1956
        %1958 = vmatmul.f32.gmra.mxu0 %v1751
        %v1959 = vpop.f32.mrf.mxu0
        %v1960 = vadd.f32 %v1639, %v1959
        %1961 = vmatmul.f32.gmra.mxu0 %v1754
        %v1962 = vpop.f32.mrf.mxu0
        %v1963 = vadd.f32 %v1639, %v1962
        %1964 = vmatmul.f32.gmra.mxu0 %v1757
        %v1965 = vpop.f32.mrf.mxu0
        %v1966 = vadd.f32 %v1639, %v1965
        %1967 = vmatmul.f32.gmra.mxu0 %v1760
        %v1968 = vpop.f32.mrf.mxu0
        %v1969 = vadd.f32 %v1639, %v1968
        %1970 = vmatmul.f32.gmra.mxu0 %v1763
        %v1971 = vpop.f32.mrf.mxu0
        %v1972 = vadd.f32 %v1639, %v1971
        %1973 = vmatmul.f32.gmra.mxu0 %v1766
        %v1974 = vpop.f32.mrf.mxu0
        %v1975 = vadd.f32 %v1639, %v1974
        %1976 = vmatmul.f32.gmra.mxu0 %v1769
        %v1977 = vpop.f32.mrf.mxu0
        %v1978 = vadd.f32 %v1639, %v1977
        %1979 = vmatmul.f32.gmra.mxu0 %v1772
        %v1980 = vpop.f32.mrf.mxu0
        %v1981 = vadd.f32 %v1639, %v1980
        %1982 = vmatmul.f32.gmra.mxu0 %v1775
        %v1983 = vpop.f32.mrf.mxu0
        %v1984 = vadd.f32 %v1639, %v1983
        %1985 = vmatmul.f32.gmra.mxu0 %v1778
        %v1986 = vpop.f32.mrf.mxu0
        %v1987 = vadd.f32 %v1639, %v1986
        %1988 = vmatmul.f32.gmra.mxu0 %v1781
        %v1989 = vpop.f32.mrf.mxu0
        %v1990 = vadd.f32 %v1639, %v1989
        %1991 = vmatmul.f32.gmra.mxu0 %v1784
        %v1992 = vpop.f32.mrf.mxu0
        %v1993 = vadd.f32 %v1639, %v1992
        %1994 = vmatmul.f32.gmra.mxu0 %v1787
        %v1995 = vpop.f32.mrf.mxu0
        %v1996 = vadd.f32 %v1639, %v1995
        %1997 = vmatmul.f32.gmra.mxu0 %v1790
        %v1998 = vpop.f32.mrf.mxu0
        %v1999 = vadd.f32 %v1639, %v1998
        %2000 = vmatmul.f32.gmra.mxu0 %v1793
        %v2001 = vpop.f32.mrf.mxu0
        %v2002 = vadd.f32 %v1639, %v2001
        %2003 = vmatmul.f32.gmra.mxu0 %v1796
        %v2004 = vpop.f32.mrf.mxu0
        %v2005 = vadd.f32 %v1639, %v2004
        %2006 = vmatmul.f32.gmra.mxu0 %v1799
        %v2007 = vpop.f32.mrf.mxu0
        %v2008 = vadd.f32 %v1639, %v2007
        %2009 = vmatmul.f32.gmra.mxu0 %v1802
        %v2010 = vpop.f32.mrf.mxu0
        %v2011 = vadd.f32 %v1639, %v2010
        %2012 = vmatmul.f32.gmra.mxu0 %v1805
        %v2013 = vpop.f32.mrf.mxu0
        %v2014 = vadd.f32 %v1639, %v2013
        %2015 = vmatmul.f32.gmra.mxu0 %v1808
        %v2016 = vpop.f32.mrf.mxu0
        %v2017 = vadd.f32 %v1639, %v2016
        %2018 = vmatmul.f32.gmra.mxu0 %v1811
        %v2019 = vpop.f32.mrf.mxu0
        %v2020 = vadd.f32 %v1639, %v2019
        %2021 = vmatmul.f32.gmra.mxu0 %v1814
        %v2022 = vpop.f32.mrf.mxu0
        %v2023 = vadd.f32 %v1639, %v2022
        %2024 = vmatmul.f32.gmra.mxu0 %v1817
        %v2025 = vpop.f32.mrf.mxu0
        %v2026 = vadd.f32 %v1639, %v2025
        %2027 = vmatmul.f32.gmra.mxu0 %v1820
        %v2028 = vpop.f32.mrf.mxu0
        %v2029 = vadd.f32 %v1639, %v2028
        %2030 = vmatmul.f32.gmra.mxu0 %v1823
        %v2031 = vpop.f32.mrf.mxu0
        %v2032 = vadd.f32 %v1639, %v2031
        %2033 = vmatmul.f32.gmra.mxu0 %v1826
        %v2034 = vpop.f32.mrf.mxu0
        %v2035 = vadd.f32 %v1639, %v2034
        %2036 = vmatmul.f32.gmra.mxu0 %v1829
        %v2037 = vpop.f32.mrf.mxu0
        %v2038 = vadd.f32 %v1639, %v2037
        %2039 = vmatmul.f32.gmra.mxu0 %v1832
        %v2040 = vpop.f32.mrf.mxu0
        %v2041 = vadd.f32 %v1639, %v2040
        %2042 = vdwg.mxu0
        %v2043 = vld [vmem:[%s398] sm:$0xff]
        %v2044 = vld [vmem:[%s398 + $0x8] sm:$0xff]
        %v2045 = vld [vmem:[%s398 + $0x10] sm:$0xff]
        %v2046 = vld [vmem:[%s398 + $0x18] sm:$0xff]
        %v2047 = vld [vmem:[%s398 + $0x20] sm:$0xff]
        %v2048 = vld [vmem:[%s398 + $0x28] sm:$0xff]
        %v2049 = vld [vmem:[%s398 + $0x30] sm:$0xff]
        %v2050 = vld [vmem:[%s398 + $0x38] sm:$0xff]
        %v2051 = vld [vmem:[%s398 + $0x40] sm:$0xff]
        %v2052 = vld [vmem:[%s398 + $0x48] sm:$0xff]
        %v2053 = vld [vmem:[%s398 + $0x50] sm:$0xff]
        %v2054 = vld [vmem:[%s398 + $0x58] sm:$0xff]
        %v2055 = vld [vmem:[%s398 + $0x60] sm:$0xff]
        %v2056 = vld [vmem:[%s398 + $0x68] sm:$0xff]
        %v2057 = vld [vmem:[%s398 + $0x70] sm:$0xff]
        %v2058 = vld [vmem:[%s398 + $0x78] sm:$0xff]
        %v2059 = vld [vmem:[%s398 + $0x80] sm:$0xff]
        %v2060 = vld [vmem:[%s398 + $0x88] sm:$0xff]
        %v2061 = vld [vmem:[%s398 + $0x90] sm:$0xff]
        %v2062 = vld [vmem:[%s398 + $0x98] sm:$0xff]
        %v2063 = vld [vmem:[%s398 + $0xa0] sm:$0xff]
        %v2064 = vld [vmem:[%s398 + $0xa8] sm:$0xff]
        %v2065 = vld [vmem:[%s398 + $0xb0] sm:$0xff]
        %v2066 = vld [vmem:[%s398 + $0xb8] sm:$0xff]
        %v2067 = vld [vmem:[%s398 + $0xc0] sm:$0xff]
        %v2068 = vld [vmem:[%s398 + $0xc8] sm:$0xff]
        %v2069 = vld [vmem:[%s398 + $0xd0] sm:$0xff]
        %v2070 = vld [vmem:[%s398 + $0xd8] sm:$0xff]
        %v2071 = vld [vmem:[%s398 + $0xe0] sm:$0xff]
        %v2072 = vld [vmem:[%s398 + $0xe8] sm:$0xff]
        %v2073 = vld [vmem:[%s398 + $0xf0] sm:$0xff]
        %v2074 = vld [vmem:[%s398 + $0xf8] sm:$0xff]
        %v2075 = vld [vmem:[%s398 + $0x100] sm:$0xff]
        %v2076 = vld [vmem:[%s398 + $0x108] sm:$0xff]
        %v2077 = vld [vmem:[%s398 + $0x110] sm:$0xff]
        %v2078 = vld [vmem:[%s398 + $0x118] sm:$0xff]
        %v2079 = vld [vmem:[%s398 + $0x120] sm:$0xff]
        %v2080 = vld [vmem:[%s398 + $0x128] sm:$0xff]
        %v2081 = vld [vmem:[%s398 + $0x130] sm:$0xff]
        %v2082 = vld [vmem:[%s398 + $0x138] sm:$0xff]
        %v2083 = vld [vmem:[%s398 + $0x140] sm:$0xff]
        %v2084 = vld [vmem:[%s398 + $0x148] sm:$0xff]
        %v2085 = vld [vmem:[%s398 + $0x150] sm:$0xff]
        %v2086 = vld [vmem:[%s398 + $0x158] sm:$0xff]
        %v2087 = vld [vmem:[%s398 + $0x160] sm:$0xff]
        %v2088 = vld [vmem:[%s398 + $0x168] sm:$0xff]
        %v2089 = vld [vmem:[%s398 + $0x170] sm:$0xff]
        %v2090 = vld [vmem:[%s398 + $0x178] sm:$0xff]
        %v2091 = vld [vmem:[%s398 + $0x180] sm:$0xff]
        %v2092 = vld [vmem:[%s398 + $0x188] sm:$0xff]
        %v2093 = vld [vmem:[%s398 + $0x190] sm:$0xff]
        %v2094 = vld [vmem:[%s398 + $0x198] sm:$0xff]
        %v2095 = vld [vmem:[%s398 + $0x1a0] sm:$0xff]
        %v2096 = vld [vmem:[%s398 + $0x1a8] sm:$0xff]
        %v2097 = vld [vmem:[%s398 + $0x1b0] sm:$0xff]
        %v2098 = vld [vmem:[%s398 + $0x1b8] sm:$0xff]
        %v2099 = vld [vmem:[%s398 + $0x1c0] sm:$0xff]
        %v2100 = vld [vmem:[%s398 + $0x1c8] sm:$0xff]
        %v2101 = vld [vmem:[%s398 + $0x1d0] sm:$0xff]
        %v2102 = vld [vmem:[%s398 + $0x1d8] sm:$0xff]
        %v2103 = vld [vmem:[%s398 + $0x1e0] sm:$0xff]
        %v2104 = vld [vmem:[%s398 + $0x1e8] sm:$0xff]
        %v2105 = vld [vmem:[%s398 + $0x1f0] sm:$0xff]
        %v2106 = vld [vmem:[%s398 + $0x1f8] sm:$0xff]
        %v2107 = vmul.f32 %v2043, 0.5
        %v2108 = vmul.f32 %v2044, 0.5
        %v2109 = vmul.f32 %v2045, 0.5
        %v2110 = vmul.f32 %v2046, 0.5
        %v2111 = vmul.f32 %v2047, 0.5
        %v2112 = vmul.f32 %v2048, 0.5
        %v2113 = vmul.f32 %v2049, 0.5
        %v2114 = vmul.f32 %v2050, 0.5
        %v2115 = vmul.f32 %v2051, 0.5
        %v2116 = vmul.f32 %v2052, 0.5
        %v2117 = vmul.f32 %v2053, 0.5
        %v2118 = vmul.f32 %v2054, 0.5
        %v2119 = vmul.f32 %v2055, 0.5
        %v2120 = vmul.f32 %v2056, 0.5
        %v2121 = vmul.f32 %v2057, 0.5
        %v2122 = vmul.f32 %v2058, 0.5
        %v2123 = vmul.f32 %v2059, 0.5
        %v2124 = vmul.f32 %v2060, 0.5
        %v2125 = vmul.f32 %v2061, 0.5
        %v2126 = vmul.f32 %v2062, 0.5
        %v2127 = vmul.f32 %v2063, 0.5
        %v2128 = vmul.f32 %v2064, 0.5
        %v2129 = vmul.f32 %v2065, 0.5
        %v2130 = vmul.f32 %v2066, 0.5
        %v2131 = vmul.f32 %v2067, 0.5
        %v2132 = vmul.f32 %v2068, 0.5
        %v2133 = vmul.f32 %v2069, 0.5
        %v2134 = vmul.f32 %v2070, 0.5
        %v2135 = vmul.f32 %v2071, 0.5
        %v2136 = vmul.f32 %v2072, 0.5
        %v2137 = vmul.f32 %v2073, 0.5
        %v2138 = vmul.f32 %v2074, 0.5
        %v2139 = vmul.f32 %v2075, 0.5
        %v2140 = vmul.f32 %v2076, 0.5
        %v2141 = vmul.f32 %v2077, 0.5
        %v2142 = vmul.f32 %v2078, 0.5
        %v2143 = vmul.f32 %v2079, 0.5
        %v2144 = vmul.f32 %v2080, 0.5
        %v2145 = vmul.f32 %v2081, 0.5
        %v2146 = vmul.f32 %v2082, 0.5
        %v2147 = vmul.f32 %v2083, 0.5
        %v2148 = vmul.f32 %v2084, 0.5
        %v2149 = vmul.f32 %v2085, 0.5
        %v2150 = vmul.f32 %v2086, 0.5
        %v2151 = vmul.f32 %v2087, 0.5
        %v2152 = vmul.f32 %v2088, 0.5
        %v2153 = vmul.f32 %v2089, 0.5
        %v2154 = vmul.f32 %v2090, 0.5
        %v2155 = vmul.f32 %v2091, 0.5
        %v2156 = vmul.f32 %v2092, 0.5
        %v2157 = vmul.f32 %v2093, 0.5
        %v2158 = vmul.f32 %v2094, 0.5
        %v2159 = vmul.f32 %v2095, 0.5
        %v2160 = vmul.f32 %v2096, 0.5
        %v2161 = vmul.f32 %v2097, 0.5
        %v2162 = vmul.f32 %v2098, 0.5
        %v2163 = vmul.f32 %v2099, 0.5
        %v2164 = vmul.f32 %v2100, 0.5
        %v2165 = vmul.f32 %v2101, 0.5
        %v2166 = vmul.f32 %v2102, 0.5
        %v2167 = vmul.f32 %v2103, 0.5
        %v2168 = vmul.f32 %v2104, 0.5
        %v2169 = vmul.f32 %v2105, 0.5
        %v2170 = vmul.f32 %v2106, 0.5
        %v2171 = vadd.f32 %v1852, %v2107
        %v2172 = vadd.f32 %v1855, %v2108
        %v2173 = vadd.f32 %v1858, %v2109
        %v2174 = vadd.f32 %v1861, %v2110
        %v2175 = vadd.f32 %v1864, %v2111
        %v2176 = vadd.f32 %v1867, %v2112
        %v2177 = vadd.f32 %v1870, %v2113
        %v2178 = vadd.f32 %v1873, %v2114
        %v2179 = vadd.f32 %v1876, %v2115
        %v2180 = vadd.f32 %v1879, %v2116
        %v2181 = vadd.f32 %v1882, %v2117
        %v2182 = vadd.f32 %v1885, %v2118
        %v2183 = vadd.f32 %v1888, %v2119
        %v2184 = vadd.f32 %v1891, %v2120
        %v2185 = vadd.f32 %v1894, %v2121
        %v2186 = vadd.f32 %v1897, %v2122
        %v2187 = vadd.f32 %v1900, %v2123
        %v2188 = vadd.f32 %v1903, %v2124
        %v2189 = vadd.f32 %v1906, %v2125
        %v2190 = vadd.f32 %v1909, %v2126
        %v2191 = vadd.f32 %v1912, %v2127
        %v2192 = vadd.f32 %v1915, %v2128
        %v2193 = vadd.f32 %v1918, %v2129
        %v2194 = vadd.f32 %v1921, %v2130
        %v2195 = vadd.f32 %v1924, %v2131
        %v2196 = vadd.f32 %v1927, %v2132
        %v2197 = vadd.f32 %v1930, %v2133
        %v2198 = vadd.f32 %v1933, %v2134
        %v2199 = vadd.f32 %v1936, %v2135
        %v2200 = vadd.f32 %v1939, %v2136
        %v2201 = vadd.f32 %v1942, %v2137
        %v2202 = vadd.f32 %v1945, %v2138
        %v2203 = vadd.f32 %v1948, %v2139
        %v2204 = vadd.f32 %v1951, %v2140
        %v2205 = vadd.f32 %v1954, %v2141
        %v2206 = vadd.f32 %v1957, %v2142
        %v2207 = vadd.f32 %v1960, %v2143
        %v2208 = vadd.f32 %v1963, %v2144
        %v2209 = vadd.f32 %v1966, %v2145
        %v2210 = vadd.f32 %v1969, %v2146
        %v2211 = vadd.f32 %v1972, %v2147
        %v2212 = vadd.f32 %v1975, %v2148
        %v2213 = vadd.f32 %v1978, %v2149
        %v2214 = vadd.f32 %v1981, %v2150
        %v2215 = vadd.f32 %v1984, %v2151
        %v2216 = vadd.f32 %v1987, %v2152
        %v2217 = vadd.f32 %v1990, %v2153
        %v2218 = vadd.f32 %v1993, %v2154
        %v2219 = vadd.f32 %v1996, %v2155
        %v2220 = vadd.f32 %v1999, %v2156
        %v2221 = vadd.f32 %v2002, %v2157
        %v2222 = vadd.f32 %v2005, %v2158
        %v2223 = vadd.f32 %v2008, %v2159
        %v2224 = vadd.f32 %v2011, %v2160
        %v2225 = vadd.f32 %v2014, %v2161
        %v2226 = vadd.f32 %v2017, %v2162
        %v2227 = vadd.f32 %v2020, %v2163
        %v2228 = vadd.f32 %v2023, %v2164
        %v2229 = vadd.f32 %v2026, %v2165
        %v2230 = vadd.f32 %v2029, %v2166
        %v2231 = vadd.f32 %v2032, %v2167
        %v2232 = vadd.f32 %v2035, %v2168
        %v2233 = vadd.f32 %v2038, %v2169
        %v2234 = vadd.f32 %v2041, %v2170
        %vm2235 = vcmask 7168
        %2236 = vst.msk [vmem:[%s375] sm:$0xff] %vm2235, %v2171
        %2237 = vst.msk [vmem:[%s375 + $0x8] sm:$0xff] %vm2235, %v2172
        %2238 = vst.msk [vmem:[%s375 + $0x10] sm:$0xff] %vm2235, %v2173
        %2239 = vst.msk [vmem:[%s375 + $0x18] sm:$0xff] %vm2235, %v2174
        %2240 = vst.msk [vmem:[%s375 + $0x20] sm:$0xff] %vm2235, %v2175
        %2241 = vst.msk [vmem:[%s375 + $0x28] sm:$0xff] %vm2235, %v2176
        %2242 = vst.msk [vmem:[%s375 + $0x30] sm:$0xff] %vm2235, %v2177
        %2243 = vst.msk [vmem:[%s375 + $0x38] sm:$0xff] %vm2235, %v2178
        %2244 = vst.msk [vmem:[%s375 + $0x40] sm:$0xff] %vm2235, %v2179
        %2245 = vst.msk [vmem:[%s375 + $0x48] sm:$0xff] %vm2235, %v2180
        %2246 = vst.msk [vmem:[%s375 + $0x50] sm:$0xff] %vm2235, %v2181
        %2247 = vst.msk [vmem:[%s375 + $0x58] sm:$0xff] %vm2235, %v2182
        %2248 = vst.msk [vmem:[%s375 + $0x60] sm:$0xff] %vm2235, %v2183
        %2249 = vst.msk [vmem:[%s375 + $0x68] sm:$0xff] %vm2235, %v2184
        %2250 = vst.msk [vmem:[%s375 + $0x70] sm:$0xff] %vm2235, %v2185
        %2251 = vst.msk [vmem:[%s375 + $0x78] sm:$0xff] %vm2235, %v2186
        %2252 = vst.msk [vmem:[%s375 + $0x80] sm:$0xff] %vm2235, %v2187
        %2253 = vst.msk [vmem:[%s375 + $0x88] sm:$0xff] %vm2235, %v2188
        %2254 = vst.msk [vmem:[%s375 + $0x90] sm:$0xff] %vm2235, %v2189
        %2255 = vst.msk [vmem:[%s375 + $0x98] sm:$0xff] %vm2235, %v2190
        %2256 = vst.msk [vmem:[%s375 + $0xa0] sm:$0xff] %vm2235, %v2191
        %2257 = vst.msk [vmem:[%s375 + $0xa8] sm:$0xff] %vm2235, %v2192
        %2258 = vst.msk [vmem:[%s375 + $0xb0] sm:$0xff] %vm2235, %v2193
        %2259 = vst.msk [vmem:[%s375 + $0xb8] sm:$0xff] %vm2235, %v2194
        %2260 = vst.msk [vmem:[%s375 + $0xc0] sm:$0xff] %vm2235, %v2195
        %2261 = vst.msk [vmem:[%s375 + $0xc8] sm:$0xff] %vm2235, %v2196
        %2262 = vst.msk [vmem:[%s375 + $0xd0] sm:$0xff] %vm2235, %v2197
        %2263 = vst.msk [vmem:[%s375 + $0xd8] sm:$0xff] %vm2235, %v2198
        %2264 = vst.msk [vmem:[%s375 + $0xe0] sm:$0xff] %vm2235, %v2199
        %2265 = vst.msk [vmem:[%s375 + $0xe8] sm:$0xff] %vm2235, %v2200
        %2266 = vst.msk [vmem:[%s375 + $0xf0] sm:$0xff] %vm2235, %v2201
        %2267 = vst.msk [vmem:[%s375 + $0xf8] sm:$0xff] %vm2235, %v2202
        %2268 = vst.msk [vmem:[%s375 + $0x100] sm:$0xff] %vm2235, %v2203
        %2269 = vst.msk [vmem:[%s375 + $0x108] sm:$0xff] %vm2235, %v2204
        %2270 = vst.msk [vmem:[%s375 + $0x110] sm:$0xff] %vm2235, %v2205
        %2271 = vst.msk [vmem:[%s375 + $0x118] sm:$0xff] %vm2235, %v2206
        %2272 = vst.msk [vmem:[%s375 + $0x120] sm:$0xff] %vm2235, %v2207
        %2273 = vst.msk [vmem:[%s375 + $0x128] sm:$0xff] %vm2235, %v2208
        %2274 = vst.msk [vmem:[%s375 + $0x130] sm:$0xff] %vm2235, %v2209
        %2275 = vst.msk [vmem:[%s375 + $0x138] sm:$0xff] %vm2235, %v2210
        %2276 = vst.msk [vmem:[%s375 + $0x140] sm:$0xff] %vm2235, %v2211
        %2277 = vst.msk [vmem:[%s375 + $0x148] sm:$0xff] %vm2235, %v2212
        %2278 = vst.msk [vmem:[%s375 + $0x150] sm:$0xff] %vm2235, %v2213
        %2279 = vst.msk [vmem:[%s375 + $0x158] sm:$0xff] %vm2235, %v2214
        %2280 = vst.msk [vmem:[%s375 + $0x160] sm:$0xff] %vm2235, %v2215
        %2281 = vst.msk [vmem:[%s375 + $0x168] sm:$0xff] %vm2235, %v2216
        %2282 = vst.msk [vmem:[%s375 + $0x170] sm:$0xff] %vm2235, %v2217
        %2283 = vst.msk [vmem:[%s375 + $0x178] sm:$0xff] %vm2235, %v2218
        %2284 = vst.msk [vmem:[%s375 + $0x180] sm:$0xff] %vm2235, %v2219
        %2285 = vst.msk [vmem:[%s375 + $0x188] sm:$0xff] %vm2235, %v2220
        %2286 = vst.msk [vmem:[%s375 + $0x190] sm:$0xff] %vm2235, %v2221
        %2287 = vst.msk [vmem:[%s375 + $0x198] sm:$0xff] %vm2235, %v2222
        %2288 = vst.msk [vmem:[%s375 + $0x1a0] sm:$0xff] %vm2235, %v2223
        %2289 = vst.msk [vmem:[%s375 + $0x1a8] sm:$0xff] %vm2235, %v2224
        %2290 = vst.msk [vmem:[%s375 + $0x1b0] sm:$0xff] %vm2235, %v2225
        %2291 = vst.msk [vmem:[%s375 + $0x1b8] sm:$0xff] %vm2235, %v2226
        %2292 = vst.msk [vmem:[%s375 + $0x1c0] sm:$0xff] %vm2235, %v2227
        %2293 = vst.msk [vmem:[%s375 + $0x1c8] sm:$0xff] %vm2235, %v2228
        %2294 = vst.msk [vmem:[%s375 + $0x1d0] sm:$0xff] %vm2235, %v2229
        %2295 = vst.msk [vmem:[%s375 + $0x1d8] sm:$0xff] %vm2235, %v2230
        %2296 = vst.msk [vmem:[%s375 + $0x1e0] sm:$0xff] %vm2235, %v2231
        %2297 = vst.msk [vmem:[%s375 + $0x1e8] sm:$0xff] %vm2235, %v2232
        %2298 = vst.msk [vmem:[%s375 + $0x1f0] sm:$0xff] %vm2235, %v2233
        %2299 = vst.msk [vmem:[%s375 + $0x1f8] sm:$0xff] %vm2235, %v2234
        %v2300 = vadd.f32 %v2171, 0.5
        %v2301 = vadd.f32 %v2172, 0.5
        %v2302 = vadd.f32 %v2173, 0.5
        %v2303 = vadd.f32 %v2174, 0.5
        %v2304 = vadd.f32 %v2175, 0.5
        %v2305 = vadd.f32 %v2176, 0.5
        %v2306 = vadd.f32 %v2177, 0.5
        %v2307 = vadd.f32 %v2178, 0.5
        %v2308 = vadd.f32 %v2179, 0.5
        %v2309 = vadd.f32 %v2180, 0.5
        %v2310 = vadd.f32 %v2181, 0.5
        %v2311 = vadd.f32 %v2182, 0.5
        %v2312 = vadd.f32 %v2183, 0.5
        %v2313 = vadd.f32 %v2184, 0.5
        %v2314 = vadd.f32 %v2185, 0.5
        %v2315 = vadd.f32 %v2186, 0.5
        %v2316 = vadd.f32 %v2187, 0.5
        %v2317 = vadd.f32 %v2188, 0.5
        %v2318 = vadd.f32 %v2189, 0.5
        %v2319 = vadd.f32 %v2190, 0.5
        %v2320 = vadd.f32 %v2191, 0.5
        %v2321 = vadd.f32 %v2192, 0.5
        %v2322 = vadd.f32 %v2193, 0.5
        %v2323 = vadd.f32 %v2194, 0.5
        %v2324 = vadd.f32 %v2195, 0.5
        %v2325 = vadd.f32 %v2196, 0.5
        %v2326 = vadd.f32 %v2197, 0.5
        %v2327 = vadd.f32 %v2198, 0.5
        %v2328 = vadd.f32 %v2199, 0.5
        %v2329 = vadd.f32 %v2200, 0.5
        %v2330 = vadd.f32 %v2201, 0.5
        %v2331 = vadd.f32 %v2202, 0.5
        %v2332 = vadd.f32 %v2203, 0.5
        %v2333 = vadd.f32 %v2204, 0.5
        %v2334 = vadd.f32 %v2205, 0.5
        %v2335 = vadd.f32 %v2206, 0.5
        %v2336 = vadd.f32 %v2207, 0.5
        %v2337 = vadd.f32 %v2208, 0.5
        %v2338 = vadd.f32 %v2209, 0.5
        %v2339 = vadd.f32 %v2210, 0.5
        %v2340 = vadd.f32 %v2211, 0.5
        %v2341 = vadd.f32 %v2212, 0.5
        %v2342 = vadd.f32 %v2213, 0.5
        %v2343 = vadd.f32 %v2214, 0.5
        %v2344 = vadd.f32 %v2215, 0.5
        %v2345 = vadd.f32 %v2216, 0.5
        %v2346 = vadd.f32 %v2217, 0.5
        %v2347 = vadd.f32 %v2218, 0.5
        %v2348 = vadd.f32 %v2219, 0.5
        %v2349 = vadd.f32 %v2220, 0.5
        %v2350 = vadd.f32 %v2221, 0.5
        %v2351 = vadd.f32 %v2222, 0.5
        %v2352 = vadd.f32 %v2223, 0.5
        %v2353 = vadd.f32 %v2224, 0.5
        %v2354 = vadd.f32 %v2225, 0.5
        %v2355 = vadd.f32 %v2226, 0.5
        %v2356 = vadd.f32 %v2227, 0.5
        %v2357 = vadd.f32 %v2228, 0.5
        %v2358 = vadd.f32 %v2229, 0.5
        %v2359 = vadd.f32 %v2230, 0.5
        %v2360 = vadd.f32 %v2231, 0.5
        %v2361 = vadd.f32 %v2232, 0.5
        %v2362 = vadd.f32 %v2233, 0.5
        %v2363 = vadd.f32 %v2234, 0.5
        %v2364 = vmax.f32 %v2300, 0.0
        %v2365 = vmax.f32 %v2301, 0.0
        %v2366 = vmax.f32 %v2302, 0.0
        %v2367 = vmax.f32 %v2303, 0.0
        %v2368 = vmax.f32 %v2304, 0.0
        %v2369 = vmax.f32 %v2305, 0.0
        %v2370 = vmax.f32 %v2306, 0.0
        %v2371 = vmax.f32 %v2307, 0.0
        %v2372 = vmax.f32 %v2308, 0.0
        %v2373 = vmax.f32 %v2309, 0.0
        %v2374 = vmax.f32 %v2310, 0.0
        %v2375 = vmax.f32 %v2311, 0.0
        %v2376 = vmax.f32 %v2312, 0.0
        %v2377 = vmax.f32 %v2313, 0.0
        %v2378 = vmax.f32 %v2314, 0.0
        %v2379 = vmax.f32 %v2315, 0.0
        %v2380 = vmax.f32 %v2316, 0.0
        %v2381 = vmax.f32 %v2317, 0.0
        %v2382 = vmax.f32 %v2318, 0.0
        %v2383 = vmax.f32 %v2319, 0.0
        %v2384 = vmax.f32 %v2320, 0.0
        %v2385 = vmax.f32 %v2321, 0.0
        %v2386 = vmax.f32 %v2322, 0.0
        %v2387 = vmax.f32 %v2323, 0.0
        %v2388 = vmax.f32 %v2324, 0.0
        %v2389 = vmax.f32 %v2325, 0.0
        %v2390 = vmax.f32 %v2326, 0.0
        %v2391 = vmax.f32 %v2327, 0.0
        %v2392 = vmax.f32 %v2328, 0.0
        %v2393 = vmax.f32 %v2329, 0.0
        %v2394 = vmax.f32 %v2330, 0.0
        %v2395 = vmax.f32 %v2331, 0.0
        %v2396 = vmax.f32 %v2332, 0.0
        %v2397 = vmax.f32 %v2333, 0.0
        %v2398 = vmax.f32 %v2334, 0.0
        %v2399 = vmax.f32 %v2335, 0.0
        %v2400 = vmax.f32 %v2336, 0.0
        %v2401 = vmax.f32 %v2337, 0.0
        %v2402 = vmax.f32 %v2338, 0.0
        %v2403 = vmax.f32 %v2339, 0.0
        %v2404 = vmax.f32 %v2340, 0.0
        %v2405 = vmax.f32 %v2341, 0.0
        %v2406 = vmax.f32 %v2342, 0.0
        %v2407 = vmax.f32 %v2343, 0.0
        %v2408 = vmax.f32 %v2344, 0.0
        %v2409 = vmax.f32 %v2345, 0.0
        %v2410 = vmax.f32 %v2346, 0.0
        %v2411 = vmax.f32 %v2347, 0.0
        %v2412 = vmax.f32 %v2348, 0.0
        %v2413 = vmax.f32 %v2349, 0.0
        %v2414 = vmax.f32 %v2350, 0.0
        %v2415 = vmax.f32 %v2351, 0.0
        %v2416 = vmax.f32 %v2352, 0.0
        %v2417 = vmax.f32 %v2353, 0.0
        %v2418 = vmax.f32 %v2354, 0.0
        %v2419 = vmax.f32 %v2355, 0.0
        %v2420 = vmax.f32 %v2356, 0.0
        %v2421 = vmax.f32 %v2357, 0.0
        %v2422 = vmax.f32 %v2358, 0.0
        %v2423 = vmax.f32 %v2359, 0.0
        %v2424 = vmax.f32 %v2360, 0.0
        %v2425 = vmax.f32 %v2361, 0.0
        %v2426 = vmax.f32 %v2362, 0.0
        %v2427 = vmax.f32 %v2363, 0.0
        %v2428 = vmin.f32 %v2364, 1.0
        %v2429 = vmin.f32 %v2365, 1.0
        %v2430 = vmin.f32 %v2366, 1.0
        %v2431 = vmin.f32 %v2367, 1.0
        %v2432 = vmin.f32 %v2368, 1.0
        %v2433 = vmin.f32 %v2369, 1.0
        %v2434 = vmin.f32 %v2370, 1.0
        %v2435 = vmin.f32 %v2371, 1.0
        %v2436 = vmin.f32 %v2372, 1.0
        %v2437 = vmin.f32 %v2373, 1.0
        %v2438 = vmin.f32 %v2374, 1.0
        %v2439 = vmin.f32 %v2375, 1.0
        %v2440 = vmin.f32 %v2376, 1.0
        %v2441 = vmin.f32 %v2377, 1.0
        %v2442 = vmin.f32 %v2378, 1.0
        %v2443 = vmin.f32 %v2379, 1.0
        %v2444 = vmin.f32 %v2380, 1.0
        %v2445 = vmin.f32 %v2381, 1.0
        %v2446 = vmin.f32 %v2382, 1.0
        %v2447 = vmin.f32 %v2383, 1.0
        %v2448 = vmin.f32 %v2384, 1.0
        %v2449 = vmin.f32 %v2385, 1.0
        %v2450 = vmin.f32 %v2386, 1.0
        %v2451 = vmin.f32 %v2387, 1.0
        %v2452 = vmin.f32 %v2388, 1.0
        %v2453 = vmin.f32 %v2389, 1.0
        %v2454 = vmin.f32 %v2390, 1.0
        %v2455 = vmin.f32 %v2391, 1.0
        %v2456 = vmin.f32 %v2392, 1.0
        %v2457 = vmin.f32 %v2393, 1.0
        %v2458 = vmin.f32 %v2394, 1.0
        %v2459 = vmin.f32 %v2395, 1.0
        %v2460 = vmin.f32 %v2396, 1.0
        %v2461 = vmin.f32 %v2397, 1.0
        %v2462 = vmin.f32 %v2398, 1.0
        %v2463 = vmin.f32 %v2399, 1.0
        %v2464 = vmin.f32 %v2400, 1.0
        %v2465 = vmin.f32 %v2401, 1.0
        %v2466 = vmin.f32 %v2402, 1.0
        %v2467 = vmin.f32 %v2403, 1.0
        %v2468 = vmin.f32 %v2404, 1.0
        %v2469 = vmin.f32 %v2405, 1.0
        %v2470 = vmin.f32 %v2406, 1.0
        %v2471 = vmin.f32 %v2407, 1.0
        %v2472 = vmin.f32 %v2408, 1.0
        %v2473 = vmin.f32 %v2409, 1.0
        %v2474 = vmin.f32 %v2410, 1.0
        %v2475 = vmin.f32 %v2411, 1.0
        %v2476 = vmin.f32 %v2412, 1.0
        %v2477 = vmin.f32 %v2413, 1.0
        %v2478 = vmin.f32 %v2414, 1.0
        %v2479 = vmin.f32 %v2415, 1.0
        %v2480 = vmin.f32 %v2416, 1.0
        %v2481 = vmin.f32 %v2417, 1.0
        %v2482 = vmin.f32 %v2418, 1.0
        %v2483 = vmin.f32 %v2419, 1.0
        %v2484 = vmin.f32 %v2420, 1.0
        %v2485 = vmin.f32 %v2421, 1.0
        %v2486 = vmin.f32 %v2422, 1.0
        %v2487 = vmin.f32 %v2423, 1.0
        %v2488 = vmin.f32 %v2424, 1.0
        %v2489 = vmin.f32 %v2425, 1.0
        %v2490 = vmin.f32 %v2426, 1.0
        %v2491 = vmin.f32 %v2427, 1.0
        %v2492 = vmul.f32 %v2428, 0.25
        %v2493 = vmul.f32 %v2429, 0.25
        %v2494 = vmul.f32 %v2430, 0.25
        %v2495 = vmul.f32 %v2431, 0.25
        %v2496 = vmul.f32 %v2432, 0.25
        %v2497 = vmul.f32 %v2433, 0.25
        %v2498 = vmul.f32 %v2434, 0.25
        %v2499 = vmul.f32 %v2435, 0.25
        %v2500 = vmul.f32 %v2436, 0.25
        %v2501 = vmul.f32 %v2437, 0.25
        %v2502 = vmul.f32 %v2438, 0.25
        %v2503 = vmul.f32 %v2439, 0.25
        %v2504 = vmul.f32 %v2440, 0.25
        %v2505 = vmul.f32 %v2441, 0.25
        %v2506 = vmul.f32 %v2442, 0.25
        %v2507 = vmul.f32 %v2443, 0.25
        %v2508 = vmul.f32 %v2444, 0.25
        %v2509 = vmul.f32 %v2445, 0.25
        %v2510 = vmul.f32 %v2446, 0.25
        %v2511 = vmul.f32 %v2447, 0.25
        %v2512 = vmul.f32 %v2448, 0.25
        %v2513 = vmul.f32 %v2449, 0.25
        %v2514 = vmul.f32 %v2450, 0.25
        %v2515 = vmul.f32 %v2451, 0.25
        %v2516 = vmul.f32 %v2452, 0.25
        %v2517 = vmul.f32 %v2453, 0.25
        %v2518 = vmul.f32 %v2454, 0.25
        %v2519 = vmul.f32 %v2455, 0.25
        %v2520 = vmul.f32 %v2456, 0.25
        %v2521 = vmul.f32 %v2457, 0.25
        %v2522 = vmul.f32 %v2458, 0.25
        %v2523 = vmul.f32 %v2459, 0.25
        %v2524 = vmul.f32 %v2460, 0.25
        %v2525 = vmul.f32 %v2461, 0.25
        %v2526 = vmul.f32 %v2462, 0.25
        %v2527 = vmul.f32 %v2463, 0.25
        %v2528 = vmul.f32 %v2464, 0.25
        %v2529 = vmul.f32 %v2465, 0.25
        %v2530 = vmul.f32 %v2466, 0.25
        %v2531 = vmul.f32 %v2467, 0.25
        %v2532 = vmul.f32 %v2468, 0.25
        %v2533 = vmul.f32 %v2469, 0.25
        %v2534 = vmul.f32 %v2470, 0.25
        %v2535 = vmul.f32 %v2471, 0.25
        %v2536 = vmul.f32 %v2472, 0.25
        %v2537 = vmul.f32 %v2473, 0.25
        %v2538 = vmul.f32 %v2474, 0.25
        %v2539 = vmul.f32 %v2475, 0.25
        %v2540 = vmul.f32 %v2476, 0.25
        %v2541 = vmul.f32 %v2477, 0.25
        %v2542 = vmul.f32 %v2478, 0.25
        %v2543 = vmul.f32 %v2479, 0.25
        %v2544 = vmul.f32 %v2480, 0.25
        %v2545 = vmul.f32 %v2481, 0.25
        %v2546 = vmul.f32 %v2482, 0.25
        %v2547 = vmul.f32 %v2483, 0.25
        %v2548 = vmul.f32 %v2484, 0.25
        %v2549 = vmul.f32 %v2485, 0.25
        %v2550 = vmul.f32 %v2486, 0.25
        %v2551 = vmul.f32 %v2487, 0.25
        %v2552 = vmul.f32 %v2488, 0.25
        %v2553 = vmul.f32 %v2489, 0.25
        %v2554 = vmul.f32 %v2490, 0.25
        %v2555 = vmul.f32 %v2491, 0.25
        %2557 = vset.pattern.permute.xlu0 0
        %2558 = vperm.xlu0 %2557, %v2492
        %v2559 = vpop.permute.xlu0 %2558
        %2562 = vset.pattern.permute.xlu0 0
        %2563 = vperm.xlu0 %2562, %v2493
        %v2564 = vpop.permute.xlu0 %2563
        %2567 = vset.pattern.permute.xlu0 0
        %2568 = vperm.xlu0 %2567, %v2494
        %v2569 = vpop.permute.xlu0 %2568
        %2572 = vset.pattern.permute.xlu0 0
        %2573 = vperm.xlu0 %2572, %v2495
        %v2574 = vpop.permute.xlu0 %2573
        %2577 = vset.pattern.permute.xlu0 0
        %2578 = vperm.xlu0 %2577, %v2496
        %v2579 = vpop.permute.xlu0 %2578
        %2582 = vset.pattern.permute.xlu0 0
        %2583 = vperm.xlu0 %2582, %v2497
        %v2584 = vpop.permute.xlu0 %2583
        %2587 = vset.pattern.permute.xlu0 0
        %2588 = vperm.xlu0 %2587, %v2498
        %v2589 = vpop.permute.xlu0 %2588
        %2592 = vset.pattern.permute.xlu0 0
        %2593 = vperm.xlu0 %2592, %v2499
        %v2594 = vpop.permute.xlu0 %2593
        %2597 = vset.pattern.permute.xlu0 0
        %2598 = vperm.xlu0 %2597, %v2500
        %v2599 = vpop.permute.xlu0 %2598
        %2602 = vset.pattern.permute.xlu0 0
        %2603 = vperm.xlu0 %2602, %v2501
        %v2604 = vpop.permute.xlu0 %2603
        %2607 = vset.pattern.permute.xlu0 0
        %2608 = vperm.xlu0 %2607, %v2502
        %v2609 = vpop.permute.xlu0 %2608
        %2612 = vset.pattern.permute.xlu0 0
        %2613 = vperm.xlu0 %2612, %v2503
        %v2614 = vpop.permute.xlu0 %2613
        %2617 = vset.pattern.permute.xlu0 0
        %2618 = vperm.xlu0 %2617, %v2504
        %v2619 = vpop.permute.xlu0 %2618
        %2622 = vset.pattern.permute.xlu0 0
        %2623 = vperm.xlu0 %2622, %v2505
        %v2624 = vpop.permute.xlu0 %2623
        %2627 = vset.pattern.permute.xlu0 0
        %2628 = vperm.xlu0 %2627, %v2506
        %v2629 = vpop.permute.xlu0 %2628
        %2632 = vset.pattern.permute.xlu0 0
        %2633 = vperm.xlu0 %2632, %v2507
        %v2634 = vpop.permute.xlu0 %2633
        %2637 = vset.pattern.permute.xlu0 0
        %2638 = vperm.xlu0 %2637, %v2508
        %v2639 = vpop.permute.xlu0 %2638
        %2642 = vset.pattern.permute.xlu0 0
        %2643 = vperm.xlu0 %2642, %v2509
        %v2644 = vpop.permute.xlu0 %2643
        %2647 = vset.pattern.permute.xlu0 0
        %2648 = vperm.xlu0 %2647, %v2510
        %v2649 = vpop.permute.xlu0 %2648
        %2652 = vset.pattern.permute.xlu0 0
        %2653 = vperm.xlu0 %2652, %v2511
        %v2654 = vpop.permute.xlu0 %2653
        %2657 = vset.pattern.permute.xlu0 0
        %2658 = vperm.xlu0 %2657, %v2512
        %v2659 = vpop.permute.xlu0 %2658
        %2662 = vset.pattern.permute.xlu0 0
        %2663 = vperm.xlu0 %2662, %v2513
        %v2664 = vpop.permute.xlu0 %2663
        %2667 = vset.pattern.permute.xlu0 0
        %2668 = vperm.xlu0 %2667, %v2514
        %v2669 = vpop.permute.xlu0 %2668
        %2672 = vset.pattern.permute.xlu0 0
        %2673 = vperm.xlu0 %2672, %v2515
        %v2674 = vpop.permute.xlu0 %2673
        %2677 = vset.pattern.permute.xlu0 0
        %2678 = vperm.xlu0 %2677, %v2516
        %v2679 = vpop.permute.xlu0 %2678
        %2682 = vset.pattern.permute.xlu0 0
        %2683 = vperm.xlu0 %2682, %v2517
        %v2684 = vpop.permute.xlu0 %2683
        %2687 = vset.pattern.permute.xlu0 0
        %2688 = vperm.xlu0 %2687, %v2518
        %v2689 = vpop.permute.xlu0 %2688
        %2692 = vset.pattern.permute.xlu0 0
        %2693 = vperm.xlu0 %2692, %v2519
        %v2694 = vpop.permute.xlu0 %2693
        %2697 = vset.pattern.permute.xlu0 0
        %2698 = vperm.xlu0 %2697, %v2520
        %v2699 = vpop.permute.xlu0 %2698
        %2702 = vset.pattern.permute.xlu0 0
        %2703 = vperm.xlu0 %2702, %v2521
        %v2704 = vpop.permute.xlu0 %2703
        %2707 = vset.pattern.permute.xlu0 0
        %2708 = vperm.xlu0 %2707, %v2522
        %v2709 = vpop.permute.xlu0 %2708
        %2712 = vset.pattern.permute.xlu0 0
        %2713 = vperm.xlu0 %2712, %v2523
        %v2714 = vpop.permute.xlu0 %2713
        %2717 = vset.pattern.permute.xlu0 0
        %2718 = vperm.xlu0 %2717, %v2524
        %v2719 = vpop.permute.xlu0 %2718
        %2722 = vset.pattern.permute.xlu0 0
        %2723 = vperm.xlu0 %2722, %v2525
        %v2724 = vpop.permute.xlu0 %2723
        %2727 = vset.pattern.permute.xlu0 0
        %2728 = vperm.xlu0 %2727, %v2526
        %v2729 = vpop.permute.xlu0 %2728
        %2732 = vset.pattern.permute.xlu0 0
        %2733 = vperm.xlu0 %2732, %v2527
        %v2734 = vpop.permute.xlu0 %2733
        %2737 = vset.pattern.permute.xlu0 0
        %2738 = vperm.xlu0 %2737, %v2528
        %v2739 = vpop.permute.xlu0 %2738
        %2742 = vset.pattern.permute.xlu0 0
        %2743 = vperm.xlu0 %2742, %v2529
        %v2744 = vpop.permute.xlu0 %2743
        %2747 = vset.pattern.permute.xlu0 0
        %2748 = vperm.xlu0 %2747, %v2530
        %v2749 = vpop.permute.xlu0 %2748
        %2752 = vset.pattern.permute.xlu0 0
        %2753 = vperm.xlu0 %2752, %v2531
        %v2754 = vpop.permute.xlu0 %2753
        %2757 = vset.pattern.permute.xlu0 0
        %2758 = vperm.xlu0 %2757, %v2532
        %v2759 = vpop.permute.xlu0 %2758
        %2762 = vset.pattern.permute.xlu0 0
        %2763 = vperm.xlu0 %2762, %v2533
        %v2764 = vpop.permute.xlu0 %2763
        %2767 = vset.pattern.permute.xlu0 0
        %2768 = vperm.xlu0 %2767, %v2534
        %v2769 = vpop.permute.xlu0 %2768
        %2772 = vset.pattern.permute.xlu0 0
        %2773 = vperm.xlu0 %2772, %v2535
        %v2774 = vpop.permute.xlu0 %2773
        %2777 = vset.pattern.permute.xlu0 0
        %2778 = vperm.xlu0 %2777, %v2536
        %v2779 = vpop.permute.xlu0 %2778
        %2782 = vset.pattern.permute.xlu0 0
        %2783 = vperm.xlu0 %2782, %v2537
        %v2784 = vpop.permute.xlu0 %2783
        %2787 = vset.pattern.permute.xlu0 0
        %2788 = vperm.xlu0 %2787, %v2538
        %v2789 = vpop.permute.xlu0 %2788
        %2792 = vset.pattern.permute.xlu0 0
        %2793 = vperm.xlu0 %2792, %v2539
        %v2794 = vpop.permute.xlu0 %2793
        %2797 = vset.pattern.permute.xlu0 0
        %2798 = vperm.xlu0 %2797, %v2540
        %v2799 = vpop.permute.xlu0 %2798
        %2802 = vset.pattern.permute.xlu0 0
        %2803 = vperm.xlu0 %2802, %v2541
        %v2804 = vpop.permute.xlu0 %2803
        %2807 = vset.pattern.permute.xlu0 0
        %2808 = vperm.xlu0 %2807, %v2542
        %v2809 = vpop.permute.xlu0 %2808
        %2812 = vset.pattern.permute.xlu0 0
        %2813 = vperm.xlu0 %2812, %v2543
        %v2814 = vpop.permute.xlu0 %2813
        %2817 = vset.pattern.permute.xlu0 0
        %2818 = vperm.xlu0 %2817, %v2544
        %v2819 = vpop.permute.xlu0 %2818
        %2822 = vset.pattern.permute.xlu0 0
        %2823 = vperm.xlu0 %2822, %v2545
        %v2824 = vpop.permute.xlu0 %2823
        %2827 = vset.pattern.permute.xlu0 0
        %2828 = vperm.xlu0 %2827, %v2546
        %v2829 = vpop.permute.xlu0 %2828
        %2832 = vset.pattern.permute.xlu0 0
        %2833 = vperm.xlu0 %2832, %v2547
        %v2834 = vpop.permute.xlu0 %2833
        %2837 = vset.pattern.permute.xlu0 0
        %2838 = vperm.xlu0 %2837, %v2548
        %v2839 = vpop.permute.xlu0 %2838
        %2842 = vset.pattern.permute.xlu0 0
        %2843 = vperm.xlu0 %2842, %v2549
        %v2844 = vpop.permute.xlu0 %2843
        %2847 = vset.pattern.permute.xlu0 0
        %2848 = vperm.xlu0 %2847, %v2550
        %v2849 = vpop.permute.xlu0 %2848
        %2852 = vset.pattern.permute.xlu0 0
        %2853 = vperm.xlu0 %2852, %v2551
        %v2854 = vpop.permute.xlu0 %2853
        %2857 = vset.pattern.permute.xlu0 0
        %2858 = vperm.xlu0 %2857, %v2552
        %v2859 = vpop.permute.xlu0 %2858
        %2862 = vset.pattern.permute.xlu0 0
        %2863 = vperm.xlu0 %2862, %v2553
        %v2864 = vpop.permute.xlu0 %2863
        %2867 = vset.pattern.permute.xlu0 0
        %2868 = vperm.xlu0 %2867, %v2554
        %v2869 = vpop.permute.xlu0 %2868
        %2872 = vset.pattern.permute.xlu0 0
        %2873 = vperm.xlu0 %2872, %v2555
        %v2874 = vpop.permute.xlu0 %2873
        %v2876 = vmul.f32 %v2559, %v798
        %v2877 = vmul.f32 %v2564, %v799
        %v2878 = vmul.f32 %v2569, %v800
        %v2879 = vmul.f32 %v2574, %v801
        %v2880 = vmul.f32 %v2579, %v802
        %v2881 = vmul.f32 %v2584, %v803
        %v2882 = vmul.f32 %v2589, %v804
        %v2883 = vmul.f32 %v2594, %v805
        %v2884 = vmul.f32 %v2599, %v806
        %v2885 = vmul.f32 %v2604, %v807
        %v2886 = vmul.f32 %v2609, %v808
        %v2887 = vmul.f32 %v2614, %v809
        %v2888 = vmul.f32 %v2619, %v810
        %v2889 = vmul.f32 %v2624, %v811
        %v2890 = vmul.f32 %v2629, %v812
        %v2891 = vmul.f32 %v2634, %v813
        %v2892 = vmul.f32 %v2639, %v814
        %v2893 = vmul.f32 %v2644, %v815
        %v2894 = vmul.f32 %v2649, %v816
        %v2895 = vmul.f32 %v2654, %v817
        %v2896 = vmul.f32 %v2659, %v818
        %v2897 = vmul.f32 %v2664, %v819
        %v2898 = vmul.f32 %v2669, %v820
        %v2899 = vmul.f32 %v2674, %v821
        %v2900 = vmul.f32 %v2679, %v822
        %v2901 = vmul.f32 %v2684, %v823
        %v2902 = vmul.f32 %v2689, %v824
        %v2903 = vmul.f32 %v2694, %v825
        %v2904 = vmul.f32 %v2699, %v826
        %v2905 = vmul.f32 %v2704, %v827
        %v2906 = vmul.f32 %v2709, %v828
        %v2907 = vmul.f32 %v2714, %v829
        %v2908 = vmul.f32 %v2719, %v830
        %v2909 = vmul.f32 %v2724, %v831
        %v2910 = vmul.f32 %v2729, %v832
        %v2911 = vmul.f32 %v2734, %v833
        %v2912 = vmul.f32 %v2739, %v834
        %v2913 = vmul.f32 %v2744, %v835
        %v2914 = vmul.f32 %v2749, %v836
        %v2915 = vmul.f32 %v2754, %v837
        %v2916 = vmul.f32 %v2759, %v838
        %v2917 = vmul.f32 %v2764, %v839
        %v2918 = vmul.f32 %v2769, %v840
        %v2919 = vmul.f32 %v2774, %v841
        %v2920 = vmul.f32 %v2779, %v842
        %v2921 = vmul.f32 %v2784, %v843
        %v2922 = vmul.f32 %v2789, %v844
        %v2923 = vmul.f32 %v2794, %v845
        %v2924 = vmul.f32 %v2799, %v846
        %v2925 = vmul.f32 %v2804, %v847
        %v2926 = vmul.f32 %v2809, %v848
        %v2927 = vmul.f32 %v2814, %v849
        %v2928 = vmul.f32 %v2819, %v850
        %v2929 = vmul.f32 %v2824, %v851
        %v2930 = vmul.f32 %v2829, %v852
        %v2931 = vmul.f32 %v2834, %v853
        %v2932 = vmul.f32 %v2839, %v854
        %v2933 = vmul.f32 %v2844, %v855
        %v2934 = vmul.f32 %v2849, %v856
        %v2935 = vmul.f32 %v2854, %v857
        %v2936 = vmul.f32 %v2859, %v858
        %v2937 = vmul.f32 %v2864, %v859
        %v2938 = vmul.f32 %v2869, %v860
        %v2939 = vmul.f32 %v2874, %v861
        %2940 = vst [vmem:[%s369] sm:$0xff] %v2876
        %2941 = vst [vmem:[%s369 + $0x8] sm:$0xff] %v2877
        %2942 = vst [vmem:[%s369 + $0x10] sm:$0xff] %v2878
        %2943 = vst [vmem:[%s369 + $0x18] sm:$0xff] %v2879
        %2944 = vst [vmem:[%s369 + $0x20] sm:$0xff] %v2880
        %2945 = vst [vmem:[%s369 + $0x28] sm:$0xff] %v2881
        %2946 = vst [vmem:[%s369 + $0x30] sm:$0xff] %v2882
        %2947 = vst [vmem:[%s369 + $0x38] sm:$0xff] %v2883
        %2948 = vst [vmem:[%s369 + $0x40] sm:$0xff] %v2884
        %2949 = vst [vmem:[%s369 + $0x48] sm:$0xff] %v2885
        %2950 = vst [vmem:[%s369 + $0x50] sm:$0xff] %v2886
        %2951 = vst [vmem:[%s369 + $0x58] sm:$0xff] %v2887
        %2952 = vst [vmem:[%s369 + $0x60] sm:$0xff] %v2888
        %2953 = vst [vmem:[%s369 + $0x68] sm:$0xff] %v2889
        %2954 = vst [vmem:[%s369 + $0x70] sm:$0xff] %v2890
        %2955 = vst [vmem:[%s369 + $0x78] sm:$0xff] %v2891
        %2956 = vst [vmem:[%s369 + $0x80] sm:$0xff] %v2892
        %2957 = vst [vmem:[%s369 + $0x88] sm:$0xff] %v2893
        %2958 = vst [vmem:[%s369 + $0x90] sm:$0xff] %v2894
        %2959 = vst [vmem:[%s369 + $0x98] sm:$0xff] %v2895
        %2960 = vst [vmem:[%s369 + $0xa0] sm:$0xff] %v2896
        %2961 = vst [vmem:[%s369 + $0xa8] sm:$0xff] %v2897
        %2962 = vst [vmem:[%s369 + $0xb0] sm:$0xff] %v2898
        %2963 = vst [vmem:[%s369 + $0xb8] sm:$0xff] %v2899
        %2964 = vst [vmem:[%s369 + $0xc0] sm:$0xff] %v2900
        %2965 = vst [vmem:[%s369 + $0xc8] sm:$0xff] %v2901
        %2966 = vst [vmem:[%s369 + $0xd0] sm:$0xff] %v2902
        %2967 = vst [vmem:[%s369 + $0xd8] sm:$0xff] %v2903
        %2968 = vst [vmem:[%s369 + $0xe0] sm:$0xff] %v2904
        %2969 = vst [vmem:[%s369 + $0xe8] sm:$0xff] %v2905
        %2970 = vst [vmem:[%s369 + $0xf0] sm:$0xff] %v2906
        %2971 = vst [vmem:[%s369 + $0xf8] sm:$0xff] %v2907
        %2972 = vst [vmem:[%s369 + $0x100] sm:$0xff] %v2908
        %2973 = vst [vmem:[%s369 + $0x108] sm:$0xff] %v2909
        %2974 = vst [vmem:[%s369 + $0x110] sm:$0xff] %v2910
        %2975 = vst [vmem:[%s369 + $0x118] sm:$0xff] %v2911
        %2976 = vst [vmem:[%s369 + $0x120] sm:$0xff] %v2912
        %2977 = vst [vmem:[%s369 + $0x128] sm:$0xff] %v2913
        %2978 = vst [vmem:[%s369 + $0x130] sm:$0xff] %v2914
        %2979 = vst [vmem:[%s369 + $0x138] sm:$0xff] %v2915
        %2980 = vst [vmem:[%s369 + $0x140] sm:$0xff] %v2916
        %2981 = vst [vmem:[%s369 + $0x148] sm:$0xff] %v2917
        %2982 = vst [vmem:[%s369 + $0x150] sm:$0xff] %v2918
        %2983 = vst [vmem:[%s369 + $0x158] sm:$0xff] %v2919
        %2984 = vst [vmem:[%s369 + $0x160] sm:$0xff] %v2920
        %2985 = vst [vmem:[%s369 + $0x168] sm:$0xff] %v2921
        %2986 = vst [vmem:[%s369 + $0x170] sm:$0xff] %v2922
        %2987 = vst [vmem:[%s369 + $0x178] sm:$0xff] %v2923
        %2988 = vst [vmem:[%s369 + $0x180] sm:$0xff] %v2924
        %2989 = vst [vmem:[%s369 + $0x188] sm:$0xff] %v2925
        %2990 = vst [vmem:[%s369 + $0x190] sm:$0xff] %v2926
        %2991 = vst [vmem:[%s369 + $0x198] sm:$0xff] %v2927
        %2992 = vst [vmem:[%s369 + $0x1a0] sm:$0xff] %v2928
        %2993 = vst [vmem:[%s369 + $0x1a8] sm:$0xff] %v2929
        %2994 = vst [vmem:[%s369 + $0x1b0] sm:$0xff] %v2930
        %2995 = vst [vmem:[%s369 + $0x1b8] sm:$0xff] %v2931
        %2996 = vst [vmem:[%s369 + $0x1c0] sm:$0xff] %v2932
        %2997 = vst [vmem:[%s369 + $0x1c8] sm:$0xff] %v2933
        %2998 = vst [vmem:[%s369 + $0x1d0] sm:$0xff] %v2934
        %2999 = vst [vmem:[%s369 + $0x1d8] sm:$0xff] %v2935
        %3000 = vst [vmem:[%s369 + $0x1e0] sm:$0xff] %v2936
        %3001 = vst [vmem:[%s369 + $0x1e8] sm:$0xff] %v2937
        %3002 = vst [vmem:[%s369 + $0x1f0] sm:$0xff] %v2938
        %3003 = vst [vmem:[%s369 + $0x1f8] sm:$0xff] %v2939
        %s3004 = sand.u32 %s212, 1
        %s3005 = scalar_lea.sflag [#allocation4], %s3004
        %s3006 = sand.u32 %s212, 1
        %s3007 = smul.addr %s3006, 512
        %s3008 = scalar_lea.vmem [#allocation3], %s3007
        %s3009 = sand.u32 %s238, 1
        %s3010 = sand.u32 %s238, 1
        %s3011 = smul.addr %s3010, 512
        %s3012 = scalar_lea.vmem [#allocation5], %s3011
        // Predicated region
        $region53: #{tpu_custom_call.1} parent=51 // pred_check
          %p3013 = pneg %p222
        $region54: #{tpu_custom_call.1} parent=51 // pred_check_branch
          %3015 = sbr.rel (%p3013) target = $region56
        $region55: #{tpu_custom_call.1} parent=51 // pred_region
          %s3016 = smul.u32 64, %s26
          %s3017 = ssub.s32 125, %s3016
          %p3018 = scmp.lt.s32.totalorder %s3017, 64
          %s3019 = scalar_select %p3018, %s3017, 64
          %s3020 = smul.u32 8, %s3019
          %s3021 = ssub.s32 512, %s3020
          %s3022 = sshll.u32 %s3021, 4
          %3023 = vsyncadd %s3005, %s3022
          %p3024 = scmp.ne.s32.totalorder 0, %s3020
          %s3025 = smul.addr %s3016, 8
          %s3026 = scalar_lea.hbm %s8, %s3025
          %s3027 = smul.u32 8, %s3019
          %s3028 = sshll.u32 %s3008, 4
          %s3029 = int_to_ptr.vmem [resolvable:$true] %s3028
          %s3030 = sshll.u32 %s3026, 4
          %s3031 = int_to_ptr.hbm [resolvable:$true] %s3030
          %s3032 = sshll.u32 %s3027, 4
          %3036 = dma.vmem_to_hbm [thread:$0]  (%p3024), %s3029, %s3032, %s3031, %s3005, 128, 128, 8
        $region56: #{tpu_custom_call.1} parent=51 // pred_fallthru
          _
        // Predicated region
        $region57: #{tpu_custom_call.1} parent=51 // pred_check
          %p3037 = pneg %p248
        $region58: #{tpu_custom_call.1} parent=51 // pred_check_branch
          %3039 = sbr.rel (%p3037) target = $region60
        $region59: #{tpu_custom_call.1} parent=51 // pred_region
          %s3040 = smul.u32 64, %s26
          %s3041 = ssub.s32 125, %s3040
          %p3042 = scmp.lt.s32.totalorder %s3041, 64
          %s3043 = scalar_select %p3042, %s3041, 64
          %s3044 = smul.u32 8, %s3043
          %p3045 = scmp.ne.s32.totalorder 0, %s3044
          %s3046 = smul.addr %s3040, 8
          %s3047 = scalar_lea.vmem %s9, %s3046
          // Predicated region
          $region61: #{tpu_custom_call.1} parent=59 // pred_check
            %p3048 = pneg %p3045
          $region62: #{tpu_custom_call.1} parent=59 // pred_check_branch
            %3050 = sbr.rel (%p3048) target = $region64
          $region63: #{tpu_custom_call.1} parent=59 // pred_region
            // Predicated region
            $region65: #{tpu_custom_call.1} parent=63 // pred_check
              _
            $region66: #{tpu_custom_call.1} parent=63 // pred_check_branch
              %3052 = sbr.rel (0) target = $region68
            $region67: #{tpu_custom_call.1} parent=63 // pred_region
              // Predicated region
              $region87: #{tpu_custom_call.1} parent=67 // pred_check
                _
              $region88: #{tpu_custom_call.1} parent=67 // pred_check_branch
                %3164 = sbr.rel (0) target = $region90
              $region89: #{tpu_custom_call.1} parent=67 // pred_region
                %s3165 = sshrl.u32 %s3043, 5
                // While loop
                $region91: #{tpu_custom_call.1} parent=89 // loop_pre_header
                  _
                $region92: #{tpu_custom_call.1} parent=89 // loop_header
                  %s3167 = sphi 0, %s3169
                  %p3168 = scmp.ge.s32.totalorder %s3167, %s3165
                  %s3172 = sphi 0, %s3241
                  %s3173 = sphi %s3012, %s3244
                  %s3174 = sphi %s3047, %s3245
                $region93: #{tpu_custom_call.1} parent=89 // loop_header_branch
                  %3171 = sbr.rel (%p3168) target = $region97
                $region94: #{tpu_custom_call.1} parent=89 // loop_body
                  %v3175 = vld [vmem:[%s3173] sm:$0xff]
                  %3176 = vst [vmem:[%s3174] sm:$0xff] %v3175
                  %v3177 = vld [vmem:[%s3173 + $0x8] sm:$0xff]
                  %3178 = vst [vmem:[%s3174 + $0x8] sm:$0xff] %v3177
                  %v3179 = vld [vmem:[%s3173 + $0x10] sm:$0xff]
                  %3180 = vst [vmem:[%s3174 + $0x10] sm:$0xff] %v3179
                  %v3181 = vld [vmem:[%s3173 + $0x18] sm:$0xff]
                  %3182 = vst [vmem:[%s3174 + $0x18] sm:$0xff] %v3181
                  %v3183 = vld [vmem:[%s3173 + $0x20] sm:$0xff]
                  %3184 = vst [vmem:[%s3174 + $0x20] sm:$0xff] %v3183
                  %v3185 = vld [vmem:[%s3173 + $0x28] sm:$0xff]
                  %3186 = vst [vmem:[%s3174 + $0x28] sm:$0xff] %v3185
                  %v3187 = vld [vmem:[%s3173 + $0x30] sm:$0xff]
                  %3188 = vst [vmem:[%s3174 + $0x30] sm:$0xff] %v3187
                  %v3189 = vld [vmem:[%s3173 + $0x38] sm:$0xff]
                  %3190 = vst [vmem:[%s3174 + $0x38] sm:$0xff] %v3189
                  %v3191 = vld [vmem:[%s3173 + $0x40] sm:$0xff]
                  %3192 = vst [vmem:[%s3174 + $0x40] sm:$0xff] %v3191
                  %v3193 = vld [vmem:[%s3173 + $0x48] sm:$0xff]
                  %3194 = vst [vmem:[%s3174 + $0x48] sm:$0xff] %v3193
                  %v3195 = vld [vmem:[%s3173 + $0x50] sm:$0xff]
                  %3196 = vst [vmem:[%s3174 + $0x50] sm:$0xff] %v3195
                  %v3197 = vld [vmem:[%s3173 + $0x58] sm:$0xff]
                  %3198 = vst [vmem:[%s3174 + $0x58] sm:$0xff] %v3197
                  %v3199 = vld [vmem:[%s3173 + $0x60] sm:$0xff]
                  %3200 = vst [vmem:[%s3174 + $0x60] sm:$0xff] %v3199
                  %v3201 = vld [vmem:[%s3173 + $0x68] sm:$0xff]
                  %3202 = vst [vmem:[%s3174 + $0x68] sm:$0xff] %v3201
                  %v3203 = vld [vmem:[%s3173 + $0x70] sm:$0xff]
                  %3204 = vst [vmem:[%s3174 + $0x70] sm:$0xff] %v3203
                  %v3205 = vld [vmem:[%s3173 + $0x78] sm:$0xff]
                  %3206 = vst [vmem:[%s3174 + $0x78] sm:$0xff] %v3205
                  %v3207 = vld [vmem:[%s3173 + $0x80] sm:$0xff]
                  %3208 = vst [vmem:[%s3174 + $0x80] sm:$0xff] %v3207
                  %v3209 = vld [vmem:[%s3173 + $0x88] sm:$0xff]
                  %3210 = vst [vmem:[%s3174 + $0x88] sm:$0xff] %v3209
                  %v3211 = vld [vmem:[%s3173 + $0x90] sm:$0xff]
                  %3212 = vst [vmem:[%s3174 + $0x90] sm:$0xff] %v3211
                  %v3213 = vld [vmem:[%s3173 + $0x98] sm:$0xff]
                  %3214 = vst [vmem:[%s3174 + $0x98] sm:$0xff] %v3213
                  %v3215 = vld [vmem:[%s3173 + $0xa0] sm:$0xff]
                  %3216 = vst [vmem:[%s3174 + $0xa0] sm:$0xff] %v3215
                  %v3217 = vld [vmem:[%s3173 + $0xa8] sm:$0xff]
                  %3218 = vst [vmem:[%s3174 + $0xa8] sm:$0xff] %v3217
                  %v3219 = vld [vmem:[%s3173 + $0xb0] sm:$0xff]
                  %3220 = vst [vmem:[%s3174 + $0xb0] sm:$0xff] %v3219
                  %v3221 = vld [vmem:[%s3173 + $0xb8] sm:$0xff]
                  %3222 = vst [vmem:[%s3174 + $0xb8] sm:$0xff] %v3221
                  %v3223 = vld [vmem:[%s3173 + $0xc0] sm:$0xff]
                  %3224 = vst [vmem:[%s3174 + $0xc0] sm:$0xff] %v3223
                  %v3225 = vld [vmem:[%s3173 + $0xc8] sm:$0xff]
                  %3226 = vst [vmem:[%s3174 + $0xc8] sm:$0xff] %v3225
                  %v3227 = vld [vmem:[%s3173 + $0xd0] sm:$0xff]
                  %3228 = vst [vmem:[%s3174 + $0xd0] sm:$0xff] %v3227
                  %v3229 = vld [vmem:[%s3173 + $0xd8] sm:$0xff]
                  %3230 = vst [vmem:[%s3174 + $0xd8] sm:$0xff] %v3229
                  %v3231 = vld [vmem:[%s3173 + $0xe0] sm:$0xff]
                  %3232 = vst [vmem:[%s3174 + $0xe0] sm:$0xff] %v3231
                  %v3233 = vld [vmem:[%s3173 + $0xe8] sm:$0xff]
                  %3234 = vst [vmem:[%s3174 + $0xe8] sm:$0xff] %v3233
                  %v3235 = vld [vmem:[%s3173 + $0xf0] sm:$0xff]
                  %3236 = vst [vmem:[%s3174 + $0xf0] sm:$0xff] %v3235
                  %v3237 = vld [vmem:[%s3173 + $0xf8] sm:$0xff]
                  %3238 = vst [vmem:[%s3174 + $0xf8] sm:$0xff] %v3237
                  %s3239 = sadd.s32 1, %s3172
                  %p3240 = scmp.ge.s32.totalorder %s3239, %s3165
                  %s3241 = scalar_select %p3240, 0, %s3239
                  %s3242 = smul.u32 %s3241, 256
                  %s3243 = smul.u32 %s3241, 256
                  %s3244 = scalar_lea.vmem %s3012, %s3242 [#allocation5]
                  %s3245 = scalar_lea.vmem %s3047, %s3243
                $region95: #{tpu_custom_call.1} parent=89 // loop_footer
                  %s3169 = sadd.s32 %s3167, 1
                $region96: #{tpu_custom_call.1} parent=89 // loop_footer_branch
                  %3166 = sbr.rel target = $region92
                $region97: #{tpu_custom_call.1} parent=89 // loop_exit
                  _
                %s3246 = sshrl.u32 %s3043, 5
                %s3247 = sand.u32 %s3043, 31
                %s3248 = smul.u32 %s3246, 32
                %s3249 = smul.u32 8, %s3248
                %s3250 = scalar_lea.vmem %s3012, %s3249 [#allocation5]
                %s3251 = smul.u32 8, %s3248
                %s3252 = scalar_lea.vmem %s3047, %s3251
                // While loop
                $region98: #{tpu_custom_call.1} parent=89 // loop_pre_header
                  _
                $region99: #{tpu_custom_call.1} parent=89 // loop_header
                  %s3254 = sphi 0, %s3256
                  %p3255 = scmp.ge.s32.totalorder %s3254, %s3247
                  %s3259 = sphi 0, %s3266
                  %s3260 = sphi %s3250, %s3269
                  %s3261 = sphi %s3252, %s3270
                $region100: #{tpu_custom_call.1} parent=89 // loop_header_branch
                  %3258 = sbr.rel (%p3255) target = $region104
                $region101: #{tpu_custom_call.1} parent=89 // loop_body
                  %v3262 = vld [vmem:[%s3260] sm:$0xff]
                  %3263 = vst [vmem:[%s3261] sm:$0xff] %v3262
                  %s3264 = sadd.s32 1, %s3259
                  %p3265 = scmp.ge.s32.totalorder %s3264, %s3247
                  %s3266 = scalar_select %p3265, 0, %s3264
                  %s3267 = smul.u32 %s3266, 8
                  %s3268 = smul.u32 %s3266, 8
                  %s3269 = scalar_lea.vmem %s3250, %s3267 [#allocation5]
                  %s3270 = scalar_lea.vmem %s3252, %s3268
                $region102: #{tpu_custom_call.1} parent=89 // loop_footer
                  %s3256 = sadd.s32 %s3254, 1
                $region103: #{tpu_custom_call.1} parent=89 // loop_footer_branch
                  %3253 = sbr.rel target = $region99
                $region104: #{tpu_custom_call.1} parent=89 // loop_exit
                  _
              $region90: #{tpu_custom_call.1} parent=67 // pred_fallthru
                _
              // Predicated region
              $region105: #{tpu_custom_call.1} parent=67 // pred_check
                _
              $region106: #{tpu_custom_call.1} parent=67 // pred_check_branch
                %3272 = sbr.rel target = $region108
              $region107: #{tpu_custom_call.1} parent=67 // pred_region
                _
              $region108: #{tpu_custom_call.1} parent=67 // pred_fallthru
                _
            $region68: #{tpu_custom_call.1} parent=63 // pred_fallthru
              _
            // Predicated region
            $region69: #{tpu_custom_call.1} parent=63 // pred_check
              _
            $region70: #{tpu_custom_call.1} parent=63 // pred_check_branch
              %3054 = sbr.rel target = $region72
            $region71: #{tpu_custom_call.1} parent=63 // pred_region
              %s3056 = ssub.s32 256, 1
              %s3057 = sshrl.u32 %s3043, 5
              // While loop
              $region73: #{tpu_custom_call.1} parent=71 // loop_pre_header
                _
              $region74: #{tpu_custom_call.1} parent=71 // loop_header
                %s3059 = sphi 0, %s3061
                %p3060 = scmp.ge.s32.totalorder %s3059, %s3057
                %s3064 = sphi 0, %s3133
                %s3065 = sphi %s3012, %s3136
                %s3066 = sphi %s3047, %s3137
              $region75: #{tpu_custom_call.1} parent=71 // loop_header_branch
                %3063 = sbr.rel (%p3060) target = $region79
              $region76: #{tpu_custom_call.1} parent=71 // loop_body
                %v3067 = vld [vmem:[%s3065] sm:%s3056]
                %3068 = vst [vmem:[%s3066] sm:%s3056] %v3067
                %v3069 = vld [vmem:[%s3065 + $0x8] sm:%s3056]
                %3070 = vst [vmem:[%s3066 + $0x8] sm:%s3056] %v3069
                %v3071 = vld [vmem:[%s3065 + $0x10] sm:%s3056]
                %3072 = vst [vmem:[%s3066 + $0x10] sm:%s3056] %v3071
                %v3073 = vld [vmem:[%s3065 + $0x18] sm:%s3056]
                %3074 = vst [vmem:[%s3066 + $0x18] sm:%s3056] %v3073
                %v3075 = vld [vmem:[%s3065 + $0x20] sm:%s3056]
                %3076 = vst [vmem:[%s3066 + $0x20] sm:%s3056] %v3075
                %v3077 = vld [vmem:[%s3065 + $0x28] sm:%s3056]
                %3078 = vst [vmem:[%s3066 + $0x28] sm:%s3056] %v3077
                %v3079 = vld [vmem:[%s3065 + $0x30] sm:%s3056]
                %3080 = vst [vmem:[%s3066 + $0x30] sm:%s3056] %v3079
                %v3081 = vld [vmem:[%s3065 + $0x38] sm:%s3056]
                %3082 = vst [vmem:[%s3066 + $0x38] sm:%s3056] %v3081
                %v3083 = vld [vmem:[%s3065 + $0x40] sm:%s3056]
                %3084 = vst [vmem:[%s3066 + $0x40] sm:%s3056] %v3083
                %v3085 = vld [vmem:[%s3065 + $0x48] sm:%s3056]
                %3086 = vst [vmem:[%s3066 + $0x48] sm:%s3056] %v3085
                %v3087 = vld [vmem:[%s3065 + $0x50] sm:%s3056]
                %3088 = vst [vmem:[%s3066 + $0x50] sm:%s3056] %v3087
                %v3089 = vld [vmem:[%s3065 + $0x58] sm:%s3056]
                %3090 = vst [vmem:[%s3066 + $0x58] sm:%s3056] %v3089
                %v3091 = vld [vmem:[%s3065 + $0x60] sm:%s3056]
                %3092 = vst [vmem:[%s3066 + $0x60] sm:%s3056] %v3091
                %v3093 = vld [vmem:[%s3065 + $0x68] sm:%s3056]
                %3094 = vst [vmem:[%s3066 + $0x68] sm:%s3056] %v3093
                %v3095 = vld [vmem:[%s3065 + $0x70] sm:%s3056]
                %3096 = vst [vmem:[%s3066 + $0x70] sm:%s3056] %v3095
                %v3097 = vld [vmem:[%s3065 + $0x78] sm:%s3056]
                %3098 = vst [vmem:[%s3066 + $0x78] sm:%s3056] %v3097
                %v3099 = vld [vmem:[%s3065 + $0x80] sm:%s3056]
                %3100 = vst [vmem:[%s3066 + $0x80] sm:%s3056] %v3099
                %v3101 = vld [vmem:[%s3065 + $0x88] sm:%s3056]
                %3102 = vst [vmem:[%s3066 + $0x88] sm:%s3056] %v3101
                %v3103 = vld [vmem:[%s3065 + $0x90] sm:%s3056]
                %3104 = vst [vmem:[%s3066 + $0x90] sm:%s3056] %v3103
                %v3105 = vld [vmem:[%s3065 + $0x98] sm:%s3056]
                %3106 = vst [vmem:[%s3066 + $0x98] sm:%s3056] %v3105
                %v3107 = vld [vmem:[%s3065 + $0xa0] sm:%s3056]
                %3108 = vst [vmem:[%s3066 + $0xa0] sm:%s3056] %v3107
                %v3109 = vld [vmem:[%s3065 + $0xa8] sm:%s3056]
                %3110 = vst [vmem:[%s3066 + $0xa8] sm:%s3056] %v3109
                %v3111 = vld [vmem:[%s3065 + $0xb0] sm:%s3056]
                %3112 = vst [vmem:[%s3066 + $0xb0] sm:%s3056] %v3111
                %v3113 = vld [vmem:[%s3065 + $0xb8] sm:%s3056]
                %3114 = vst [vmem:[%s3066 + $0xb8] sm:%s3056] %v3113
                %v3115 = vld [vmem:[%s3065 + $0xc0] sm:%s3056]
                %3116 = vst [vmem:[%s3066 + $0xc0] sm:%s3056] %v3115
                %v3117 = vld [vmem:[%s3065 + $0xc8] sm:%s3056]
                %3118 = vst [vmem:[%s3066 + $0xc8] sm:%s3056] %v3117
                %v3119 = vld [vmem:[%s3065 + $0xd0] sm:%s3056]
                %3120 = vst [vmem:[%s3066 + $0xd0] sm:%s3056] %v3119
                %v3121 = vld [vmem:[%s3065 + $0xd8] sm:%s3056]
                %3122 = vst [vmem:[%s3066 + $0xd8] sm:%s3056] %v3121
                %v3123 = vld [vmem:[%s3065 + $0xe0] sm:%s3056]
                %3124 = vst [vmem:[%s3066 + $0xe0] sm:%s3056] %v3123
                %v3125 = vld [vmem:[%s3065 + $0xe8] sm:%s3056]
                %3126 = vst [vmem:[%s3066 + $0xe8] sm:%s3056] %v3125
                %v3127 = vld [vmem:[%s3065 + $0xf0] sm:%s3056]
                %3128 = vst [vmem:[%s3066 + $0xf0] sm:%s3056] %v3127
                %v3129 = vld [vmem:[%s3065 + $0xf8] sm:%s3056]
                %3130 = vst [vmem:[%s3066 + $0xf8] sm:%s3056] %v3129
                %s3131 = sadd.s32 1, %s3064
                %p3132 = scmp.ge.s32.totalorder %s3131, %s3057
                %s3133 = scalar_select %p3132, 0, %s3131
                %s3134 = smul.u32 %s3133, 256
                %s3135 = smul.u32 %s3133, 256
                %s3136 = scalar_lea.vmem %s3012, %s3134 [#allocation5]
                %s3137 = scalar_lea.vmem %s3047, %s3135
              $region77: #{tpu_custom_call.1} parent=71 // loop_footer
                %s3061 = sadd.s32 %s3059, 1
              $region78: #{tpu_custom_call.1} parent=71 // loop_footer_branch
                %3058 = sbr.rel target = $region74
              $region79: #{tpu_custom_call.1} parent=71 // loop_exit
                _
              %s3138 = sshrl.u32 %s3043, 5
              %s3139 = sand.u32 %s3043, 31
              %s3140 = smul.u32 %s3138, 32
              %s3141 = smul.u32 8, %s3140
              %s3142 = scalar_lea.vmem %s3012, %s3141 [#allocation5]
              %s3143 = smul.u32 8, %s3140
              %s3144 = scalar_lea.vmem %s3047, %s3143
              // While loop
              $region80: #{tpu_custom_call.1} parent=71 // loop_pre_header
                _
              $region81: #{tpu_custom_call.1} parent=71 // loop_header
                %s3146 = sphi 0, %s3148
                %p3147 = scmp.ge.s32.totalorder %s3146, %s3139
                %s3151 = sphi 0, %s3158
                %s3152 = sphi %s3142, %s3161
                %s3153 = sphi %s3144, %s3162
              $region82: #{tpu_custom_call.1} parent=71 // loop_header_branch
                %3150 = sbr.rel (%p3147) target = $region86
              $region83: #{tpu_custom_call.1} parent=71 // loop_body
                %v3154 = vld [vmem:[%s3152] sm:%s3056]
                %3155 = vst [vmem:[%s3153] sm:%s3056] %v3154
                %s3156 = sadd.s32 1, %s3151
                %p3157 = scmp.ge.s32.totalorder %s3156, %s3139
                %s3158 = scalar_select %p3157, 0, %s3156
                %s3159 = smul.u32 %s3158, 8
                %s3160 = smul.u32 %s3158, 8
                %s3161 = scalar_lea.vmem %s3142, %s3159 [#allocation5]
                %s3162 = scalar_lea.vmem %s3144, %s3160
              $region84: #{tpu_custom_call.1} parent=71 // loop_footer
                %s3148 = sadd.s32 %s3146, 1
              $region85: #{tpu_custom_call.1} parent=71 // loop_footer_branch
                %3145 = sbr.rel target = $region81
              $region86: #{tpu_custom_call.1} parent=71 // loop_exit
                _
            $region72: #{tpu_custom_call.1} parent=63 // pred_fallthru
              _
          $region64: #{tpu_custom_call.1} parent=59 // pred_fallthru
            _
          %3273 = vnop
        $region60: #{tpu_custom_call.1} parent=51 // pred_fallthru
          _
      $region52: #{tpu_custom_call.1} parent=5 // pred_fallthru
        _
      %p3274 = scmp.le.s32.totalorder 2, %s21
      // Predicated region
      $region109: #{tpu_custom_call.1} parent=5 // pred_check
        %p3275 = pneg %p3274
      $region110: #{tpu_custom_call.1} parent=5 // pred_check_branch
        %3277 = sbr.rel (%p3275) target = $region112
      $region111: #{tpu_custom_call.1} parent=5 // pred_region
        %s3278 = ssub.s32 %s21, 2
        // Predicated region
        $region113: #{tpu_custom_call.1} parent=111 // pred_check
          %p3279 = pneg %p228
        $region114: #{tpu_custom_call.1} parent=111 // pred_check_branch
          %3281 = sbr.rel (%p3279) target = $region116
        $region115: #{tpu_custom_call.1} parent=111 // pred_region
          %s3282 = sand.u32 %s213, 1
          %s3283 = scalar_lea.sflag [#allocation4], %s3282
          %s3284 = sand.u32 %s213, 1
          %s3285 = smul.addr %s3284, 512
          %s3286 = scalar_lea.vmem [#allocation3], %s3285
          %3288 = dma.done %s3283, 8192
        $region116: #{tpu_custom_call.1} parent=111 // pred_fallthru
          _
        // Predicated region
        $region117: #{tpu_custom_call.1} parent=111 // pred_check
          %p3289 = pneg %p254
        $region118: #{tpu_custom_call.1} parent=111 // pred_check_branch
          %3291 = sbr.rel (%p3289) target = $region120
        $region119: #{tpu_custom_call.1} parent=111 // pred_region
          %s3292 = sand.u32 %s239, 1
          %s3293 = sand.u32 %s239, 1
          %s3294 = smul.addr %s3293, 512
          %s3295 = scalar_lea.vmem [#allocation5], %s3294
        $region120: #{tpu_custom_call.1} parent=111 // pred_fallthru
          _
      $region112: #{tpu_custom_call.1} parent=5 // pred_fallthru
        _
    $region6: #{tpu_custom_call.1} parent=1 // loop_footer
      %s25 = sadd.s32 1, %s21
    $region7: #{tpu_custom_call.1} parent=1 // loop_footer_branch
      %20 = sbr.rel target = $region3
    $region8: #{tpu_custom_call.1} parent=1 // loop_exit
      _
    %3296 = vsyncpa [#allocation4], 1
    %s3297 = scalar_lea.sflag [#allocation4], 1
    %3298 = vsyncpa %s3297, 1

</llo_original>
